<compile_context>
chip_gen: v5e
topology: v5e:2x2
jax: 0.10.0
libtpu: 0.0.40
codegen_flags: <defaults>
</compile_context>

<pallas_src>
import jax
import jax.numpy as jnp
from jax.experimental import pallas as pl
from jax.experimental.pallas import tpu as pltpu

# ----------------------------- hyperparameters -----------------------------
NUM_CHARS = 20
EMB = 32                 # char_embedding_dim
ENC_K = 5                # encoder_kernel_size
NUM_MELS = 8
PRENET_DIM = 16
ATT_RNN_DIM = 32
ATT_DIM = 16
RNN_HIDDEN = 32
POSTNET_DIM = 16
LOC_FILTERS = 8          # location-attention conv filters (internal hyperparam)
LOC_K = 7                # location-attention conv kernel size (internal hyperparam)
POSTNET_K = 5
BN_EPS = 1e-5

_PARAMS = pltpu.CompilerParams(
    dimension_semantics=("arbitrary",),
    vmem_limit_bytes=32 * 1024 * 1024,
)


def _fs(shape):
    zeros = (0,) * len(shape)
    return pl.BlockSpec(shape, lambda i, z=zeros: z)


# =============================== encoder kernel ===============================
def _encoder_kernel(x_ref, cw_ref, cb_ref, wl_ref, bl_ref, enc_ref, xp, hsf, hsb):
    """3 conv layers + bidirectional LSTM, all time-major (T, B, E)."""
    T, B, E = x_ref.shape
    H = E // 2
    pad = (ENC_K - 1) // 2
    bf16 = jnp.bfloat16

    xp[...] = jnp.zeros_like(xp)                       # pad rows stay zero forever
    x = x_ref[...].astype(bf16)                        # (T, B, E)

    # ---- 3 x (conv1d + folded-BN + ReLU), each as one lane-dense matmul ----
    for li in range(cw_ref.shape[0]):
        xp[pad:pad + T] = x
        cols = [xp[k:k + T] for k in range(ENC_K)]     # K shifted views (T, B, E)
        xk = jnp.concatenate(cols, axis=-1).reshape(T * B, ENC_K * E)
        y = jnp.dot(xk, cw_ref[li], preferred_element_type=jnp.float32) + cb_ref[li]
        x = jnp.maximum(y, 0.0).astype(bf16).reshape(T, B, E)
    xp[pad:pad + T] = x                                # conv output, read per step below

    # ---- bidirectional LSTM: one block-diagonal fused matmul per time step ----
    wl = wl_ref[...]                                   # (2*(E+H), 8H) bf16
    bl = bl_ref[...]                                   # (1, 8H) f32

    def step(t, carry):
        h, c = carry                                   # (B, 2H) f32  [fwd | bwd]
        xf = xp[pad + t]                               # (B, E) bf16
        xb = xp[pad + T - 1 - t]                       # (B, E)
        inp = jnp.concatenate(
            [xf, h[:, :H].astype(bf16), xb, h[:, H:].astype(bf16)], axis=-1)
        g = jnp.dot(inp, wl, preferred_element_type=jnp.float32) + bl   # (B, 8H)
        sg = jax.nn.sigmoid(g)                         # whole-tile activations,
        th = jnp.tanh(g)                               # then slice (2 EUP pushes)
        i_g = sg[:, 0:2 * H]
        f_g = sg[:, 2 * H:4 * H]
        g_g = th[:, 4 * H:6 * H]
        o_g = sg[:, 6 * H:8 * H]
        c_n = f_g * c + i_g * g_g
        h_n = o_g * jnp.tanh(c_n)
        hsf[t] = h_n[:, :H]
        hsb[T - 1 - t] = h_n[:, H:]                    # bwd hidden of original time T-1-t
        return (h_n, c_n)

    z = jnp.zeros((B, 2 * H), jnp.float32)
    jax.lax.fori_loop(0, T, step, (z, z))

    enc_ref[...] = jnp.concatenate([hsf[...], hsb[...]], axis=-1).astype(enc_ref.dtype)


def pallas_encoder(x_seq, cw, cb, wl, bl):
    T, B, E = x_seq.shape
    H = E // 2
    pad = (ENC_K - 1) // 2
    return pl.pallas_call(
        _encoder_kernel,
        out_shape=jax.ShapeDtypeStruct((T, B, E), jnp.bfloat16),
        grid=(1,),
        in_specs=[_fs(x_seq.shape), _fs(cw.shape), _fs(cb.shape),
                  _fs(wl.shape), _fs(bl.shape)],
        out_specs=_fs((T, B, E)),
        scratch_shapes=[pltpu.VMEM((T + 2 * pad, B, E), jnp.bfloat16),
                        pltpu.VMEM((T, B, H), jnp.float32),
                        pltpu.VMEM((T, B, H), jnp.float32)],
        compiler_params=_PARAMS,
    )(x_seq, cw, cb, wl, bl)


# =============================== decoder kernel ===============================
def _decoder_kernel(din_ref, enc_ref, mask_ref, w1_ref, w2_ref, wa_ref,
                    watt_ref, batt_ref, wq_ref, wloc_ref, v_ref,
                    wdec_ref, bdec_ref, wproj_ref, bproj_ref,
                    out_ref, dpre_s):
    T_mel, B, _ = din_ref.shape
    _, T_enc, E = enc_ref.shape
    HA = ATT_RNN_DIM
    HD = RNN_HIDDEN
    A = ATT_DIM
    lpad = (LOC_K - 1) // 2
    bf16 = jnp.bfloat16

    # ---- bulk prenet (teacher forcing) ----
    din = din_ref[...].reshape(T_mel * B, NUM_MELS)
    hpre = jnp.maximum(jnp.dot(din, w1_ref[...],
                               preferred_element_type=jnp.float32), 0.0)
    dpre = jnp.maximum(jnp.dot(hpre.astype(bf16), w2_ref[...],
                               preferred_element_type=jnp.float32), 0.0)
    dpre_s[...] = dpre.reshape(T_mel, B, PRENET_DIM).astype(bf16)

    # ---- loop-invariant attention memory projection ----
    enc = enc_ref[...]                                                  # (B, T, E) bf16
    attenc = jnp.dot(enc.reshape(B * T_enc, E), wa_ref[...],
                     preferred_element_type=jnp.float32).reshape(B, T_enc, A)

    mask = mask_ref[...]
    wloc = wloc_ref[...]                                                # (2K, A)
    vrow = v_ref[...]                                                   # (1, A)
    watt = watt_ref[...]
    batt = batt_ref[...]
    wq = wq_ref[...]
    wdec = wdec_ref[...]
    bdec = bdec_ref[...]
    wproj = wproj_ref[...]
    bproj = bproj_ref[...]
    zpad = jnp.zeros((B, lpad), jnp.float32)

    def step(i, carry):
        h1, c1, h2, c2, ctx, att_w, att_cum = carry
        prev = dpre_s[i]                                                # (B, PRE) bf16

        # ---- attention LSTM: one fused matmul, whole-tile activations ----
        xs = jnp.concatenate([prev, ctx.astype(bf16), h1.astype(bf16)], axis=-1)
        g = jnp.dot(xs, watt, preferred_element_type=jnp.float32) + batt
        sg = jax.nn.sigmoid(g)
        th = jnp.tanh(g)
        c1n = sg[:, HA:2 * HA] * c1 + sg[:, 0:HA] * th[:, 2 * HA:3 * HA]
        h1n = sg[:, 3 * HA:4 * HA] * jnp.tanh(c1n)

        # ---- location-sensitive attention (banded loc term, no dense blow-up) ----
        q = jnp.dot(h1n.astype(bf16), wq, preferred_element_type=jnp.float32)   # (B, A)
        awp = jnp.concatenate([zpad, att_w, zpad], axis=-1)             # (B, T + K - 1)
        acp = jnp.concatenate([zpad, att_cum, zpad], axis=-1)
        loc = jnp.zeros((B, T_enc, A), jnp.float32)
        for k in range(LOC_K):                                          # static unroll
            loc = loc + awp[:, k:k + T_enc][:, :, None] * wloc[k:k + 1, :][None, :, :]
            loc = (loc + acp[:, k:k + T_enc][:, :, None]
                   * wloc[LOC_K + k:LOC_K + k + 1, :][None, :, :])
        e = jnp.tanh(q[:, None, :] + attenc + loc)                      # (B, T, A)
        energies = jnp.sum(e * vrow[None, :, :], axis=-1)               # (B, T)
        energies = jnp.where(mask > 0.5, -1e30, energies)
        m = jnp.max(energies, axis=-1, keepdims=True)
        p = jnp.exp(energies - m)
        denom = jnp.sum(p, axis=-1, keepdims=True)
        w_new = p * pl.reciprocal(denom, approx=True)
        att_cum_n = att_cum + w_new
        ctx_n = jnp.einsum('bqt,bte->bqe', w_new[:, None, :].astype(bf16), enc,
                           preferred_element_type=jnp.float32)[:, 0, :]  # (B, E)

        # ---- decoder LSTM ----
        xs2 = jnp.concatenate(
            [h1n.astype(bf16), ctx_n.astype(bf16), h2.astype(bf16)], axis=-1)
        g2 = jnp.dot(xs2, wdec, preferred_element_type=jnp.float32) + bdec
        sg2 = jax.nn.sigmoid(g2)
        th2 = jnp.tanh(g2)
        c2n = sg2[:, HD:2 * HD] * c2 + sg2[:, 0:HD] * th2[:, 2 * HD:3 * HD]
        h2n = sg2[:, 3 * HD:4 * HD] * jnp.tanh(c2n)

        # ---- fused mel + gate projection; single per-step output slab ----
        pin = jnp.concatenate([h2n.astype(bf16), ctx_n.astype(bf16)], axis=-1)
        proj = jnp.dot(pin, wproj, preferred_element_type=jnp.float32) + bproj  # (B, 9)
        out_ref[i] = jnp.concatenate([proj, w_new], axis=-1)
        return (h1n, c1n, h2n, c2n, ctx_n, w_new, att_cum_n)

    init = (jnp.zeros((B, HA), jnp.float32), jnp.zeros((B, HA), jnp.float32),
            jnp.zeros((B, HD), jnp.float32), jnp.zeros((B, HD), jnp.float32),
            jnp.zeros((B, E), jnp.float32),
            jnp.zeros((B, T_enc), jnp.float32), jnp.zeros((B, T_enc), jnp.float32))
    jax.lax.fori_loop(0, T_mel, step, init)


def pallas_decoder(din_tm, enc, mask, w1, w2, wa, w_att, b_att, wq, wloc, v_row,
                   w_dec, b_dec, w_proj, b_proj):
    T_mel, B, _ = din_tm.shape
    T_enc = enc.shape[1]
    W = NUM_MELS + 1 + T_enc
    args = (din_tm, enc, mask, w1, w2, wa, w_att, b_att, wq, wloc, v_row,
            w_dec, b_dec, w_proj, b_proj)
    return pl.pallas_call(
        _decoder_kernel,
        out_shape=jax.ShapeDtypeStruct((T_mel, B, W), jnp.float32),
        grid=(1,),
        in_specs=[_fs(a.shape) for a in args],
        out_specs=_fs((T_mel, B, W)),
        scratch_shapes=[pltpu.VMEM((T_mel, B, PRENET_DIM), jnp.bfloat16)],
        compiler_params=_PARAMS,
    )(*args)


# ========================= postnet + residual + finalize =========================
def _postnet_kernel(mels_ref, gates_ref, mask_ref, pw_ref, pb_ref,
                    mels_o, post_o, gates_o, xp):
    B, T, M = mels_ref.shape
    C = xp.shape[-1]
    pad = (POSTNET_K - 1) // 2
    n_layers = pw_ref.shape[0]

    xp[...] = jnp.zeros_like(xp)
    mels = mels_ref[...]                                                # (B, T, M) f32
    xp[:, pad:pad + T, :M] = mels.astype(xp.dtype)

    y = None
    for li in range(n_layers):
        cols = [xp[:, k:k + T, :] for k in range(POSTNET_K)]
        xk = jnp.concatenate(cols, axis=-1).reshape(B * T, POSTNET_K * C)
        yc = jnp.dot(xk, pw_ref[li], preferred_element_type=jnp.float32) + pb_ref[li]
        if li < n_layers - 1:
            xp[:, pad:pad + T, :] = jnp.tanh(yc).reshape(B, T, C).astype(xp.dtype)
        else:
            y = yc.reshape(B, T, C)[:, :, :M]

    post = mels + y
    msk3 = mask_ref[...][:, :, None] > 0.5
    mels_o[...] = jnp.where(msk3, 0.0, mels)
    post_o[...] = jnp.where(msk3, 0.0, post)
    gates_o[...] = jnp.where(mask_ref[...] > 0.5, -1000.0, gates_ref[...])


def pallas_postnet(mels, gates, mask, pw, pb):
    B, T, M = mels.shape
    C = pw.shape[-1]
    pad = (POSTNET_K - 1) // 2
    return pl.pallas_call(
        _postnet_kernel,
        out_shape=(jax.ShapeDtypeStruct((B, T, M), jnp.float32),
                   jax.ShapeDtypeStruct((B, T, M), jnp.float32),
                   jax.ShapeDtypeStruct((B, T), jnp.float32)),
        grid=(1,),
        in_specs=[_fs(mels.shape), _fs(gates.shape), _fs(mask.shape),
                  _fs(pw.shape), _fs(pb.shape)],
        out_specs=(_fs((B, T, M)), _fs((B, T, M)), _fs((B, T))),
        scratch_shapes=[pltpu.VMEM((B, T + 2 * pad, C), jnp.bfloat16)],
        compiler_params=_PARAMS,
    )(mels, gates, mask, pw, pb)


# ----------------------------- weight preparation -----------------------------
def _stack_conv_weights(convs, cin_max, cout_max, K, scale):
    """PyTorch conv weights (Cout, Cin, K) -> stacked (L, K*cin_max, cout_max) bf16."""
    ws, bs = [], []
    for w, b in convs:
        cout, cin, _ = w.shape
        wk = jnp.transpose(w, (2, 1, 0)) * scale                    # (K, Cin, Cout)
        wk = jnp.pad(wk, ((0, 0), (0, cin_max - cin), (0, cout_max - cout)))
        ws.append(wk.reshape(K * cin_max, cout_max))
        bs.append(jnp.pad(b * scale, (0, cout_max - cout)).reshape(1, cout_max))
    return jnp.stack(ws).astype(jnp.bfloat16), jnp.stack(bs).astype(jnp.float32)


def _fuse_bilstm(fwd, bwd, H):
    """Block-diagonal fused weight; gate columns reordered to [i|i, f|f, g|g, o|o]."""
    wf = jnp.concatenate([fwd[0], fwd[1]], axis=0)                  # (E+H, 4H)
    wb = jnp.concatenate([bwd[0], bwd[1]], axis=0)
    D = wf.shape[0]
    W = jnp.zeros((2 * D, 8 * H), jnp.float32)
    bv = jnp.zeros((8 * H,), jnp.float32)
    for gi in range(4):
        W = W.at[:D, gi * 2 * H:gi * 2 * H + H].set(wf[:, gi * H:(gi + 1) * H])
        W = W.at[D:, gi * 2 * H + H:(gi + 1) * 2 * H].set(wb[:, gi * H:(gi + 1) * H])
        bv = bv.at[gi * 2 * H:gi * 2 * H + H].set(fwd[2][gi * H:(gi + 1) * H])
        bv = bv.at[gi * 2 * H + H:(gi + 1) * 2 * H].set(bwd[2][gi * H:(gi + 1) * H])
    return W.astype(jnp.bfloat16), bv.reshape(1, 8 * H).astype(jnp.float32)


# --------------------------------- forward ---------------------------------
def tacotron2_forward(params, chars_idx, chars_idx_len, mel_spectrogram,
                      mel_spectrogram_len):
    """Teacher-forcing forward pass. Returns (mels, mels_post, gates, alignments)."""
    B, T_enc = chars_idx.shape
    T_mel = mel_spectrogram.shape[1]
    bn_inv = 1.0 / jnp.sqrt(1.0 + BN_EPS)            # eval-mode BN folded (fresh stats)

    # ------------------------------- encoder -------------------------------
    x_seq = jnp.take(params['embedding'], chars_idx.T, axis=0)          # (T, B, EMB)
    cw, cb = _stack_conv_weights(params['enc_convs'], EMB, EMB, ENC_K, bn_inv)
    wl, bl = _fuse_bilstm(params['enc_lstm_fwd'], params['enc_lstm_bwd'], EMB // 2)
    enc_tm = pallas_encoder(x_seq, cw, cb, wl, bl)                       # (T, B, EMB) bf16
    encoded = jnp.transpose(enc_tm, (1, 0, 2))                           # (B, T, EMB) bf16
    encoded_mask = (jnp.arange(T_enc)[None, :]
                    >= chars_idx_len[:, None]).astype(jnp.float32)

    # ------------------------------- decoder -------------------------------
    mel_tm = jnp.transpose(mel_spectrogram, (1, 0, 2))
    din_tm = jnp.concatenate(
        [jnp.zeros((1, B, NUM_MELS), mel_tm.dtype), mel_tm[:T_mel - 1]],
        axis=0).astype(jnp.bfloat16)                                     # (T_mel, B, M)

    w1 = params['prenet_w1'].astype(jnp.bfloat16)
    w2 = params['prenet_w2'].astype(jnp.bfloat16)
    wa = params['att_encoder_w'].astype(jnp.bfloat16)
    w_att = jnp.concatenate([params['att_rnn'][0], params['att_rnn'][1]],
                            axis=0).astype(jnp.bfloat16)
    b_att = params['att_rnn'][2].reshape(1, 4 * ATT_RNN_DIM).astype(jnp.float32)
    w_dec = jnp.concatenate([params['dec_rnn'][0], params['dec_rnn'][1]],
                            axis=0).astype(jnp.bfloat16)
    b_dec = params['dec_rnn'][2].reshape(1, 4 * RNN_HIDDEN).astype(jnp.float32)
    w_proj = jnp.concatenate([params['proj_w'], params['gate_w']],
                             axis=1).astype(jnp.bfloat16)                # (64, 9)
    b_proj = jnp.concatenate([params['proj_b'], params['gate_b']]
                             ).reshape(1, NUM_MELS + 1).astype(jnp.float32)
    wq = params['query_w'].astype(jnp.bfloat16)
    wloc = jnp.einsum('fa,fck->cka', params['loc_dense_w'], params['loc_conv_w']
                      ).reshape(2 * LOC_K, ATT_DIM).astype(jnp.float32)  # banded loc op
    v_row = params['att_v'].reshape(1, ATT_DIM).astype(jnp.float32)

    dec_out = pallas_decoder(din_tm, encoded, encoded_mask, w1, w2, wa,
                             w_att, b_att, wq, wloc, v_row,
                             w_dec, b_dec, w_proj, b_proj)               # (T_mel, B, 9+T)
    out_bt = jnp.transpose(dec_out, (1, 0, 2))                           # (B, T_mel, 9+T)
    mels = out_bt[:, :, :NUM_MELS]
    gates = out_bt[:, :, NUM_MELS]                                       # (B, T_mel)
    alignments = out_bt[:, :, NUM_MELS + 1:]                             # (B, T_mel, T_enc)

    # --------------------- postnet + residual + finalize ---------------------
    pw, pb = _stack_conv_weights(params['postnet'], POSTNET_DIM, POSTNET_DIM,
                                 POSTNET_K, bn_inv)
    mel_mask = (jnp.arange(T_mel)[None, :]
                >= mel_spectrogram_len[:, None]).astype(jnp.float32)
    mels_m, post_m, gates_m = pallas_postnet(mels, gates, mel_mask, pw, pb)
    return mels_m, post_m, gates_m[:, :, None], alignments


# ----------------------------- parameter init -------------------------------
def init_params(key):
    def nrm(shape, scale=0.1):
        nonlocal key
        key, sub = jax.random.split(key)
        return scale * jax.random.normal(sub, shape, jnp.float32)

    p = {}
    p['embedding'] = nrm((NUM_CHARS, EMB), 0.3)
    p['enc_convs'] = [(nrm((EMB, EMB, ENC_K)), nrm((EMB,))) for _ in range(3)]
    H_enc = EMB // 2
    p['enc_lstm_fwd'] = (nrm((EMB, 4 * H_enc)), nrm((H_enc, 4 * H_enc)), nrm((4 * H_enc,)))
    p['enc_lstm_bwd'] = (nrm((EMB, 4 * H_enc)), nrm((H_enc, 4 * H_enc)), nrm((4 * H_enc,)))
    p['prenet_w1'] = nrm((NUM_MELS, PRENET_DIM))
    p['prenet_w2'] = nrm((PRENET_DIM, PRENET_DIM))
    p['att_encoder_w'] = nrm((EMB, ATT_DIM))
    p['att_rnn'] = (nrm((PRENET_DIM + EMB, 4 * ATT_RNN_DIM)),
                    nrm((ATT_RNN_DIM, 4 * ATT_RNN_DIM)),
                    nrm((4 * ATT_RNN_DIM,)))
    p['query_w'] = nrm((ATT_RNN_DIM, ATT_DIM))
    p['loc_conv_w'] = nrm((LOC_FILTERS, 2, LOC_K))
    p['loc_dense_w'] = nrm((LOC_FILTERS, ATT_DIM))
    p['att_v'] = nrm((1, ATT_DIM))
    p['dec_rnn'] = (nrm((ATT_RNN_DIM + EMB, 4 * RNN_HIDDEN)),
                    nrm((RNN_HIDDEN, 4 * RNN_HIDDEN)),
                    nrm((4 * RNN_HIDDEN,)))
    p['proj_w'] = nrm((RNN_HIDDEN + EMB, NUM_MELS))
    p['proj_b'] = nrm((NUM_MELS,))
    p['gate_w'] = nrm((RNN_HIDDEN + EMB, 1))
    p['gate_b'] = nrm((1,))
    post = [(nrm((POSTNET_DIM, NUM_MELS, POSTNET_K)), nrm((POSTNET_DIM,)))]
    for _ in range(3):
        post.append((nrm((POSTNET_DIM, POSTNET_DIM, POSTNET_K)), nrm((POSTNET_DIM,))))
    post.append((nrm((NUM_MELS, POSTNET_DIM, POSTNET_K)), nrm((NUM_MELS,))))
    p['postnet'] = post
    return p


# ---------------------------------- main -------------------------------------
if __name__ == "__main__":
    key = jax.random.PRNGKey(0)
    pkey, ckey, mkey = jax.random.split(key, 3)
    params = init_params(pkey)

    B, T_ENC, T_MEL = 2, 8, 6
    chars_idx = jax.random.randint(ckey, (B, T_ENC), 0, NUM_CHARS, dtype=jnp.int32)
    chars_idx_len = jnp.array([T_ENC, T_ENC], dtype=jnp.int32)
    mel_spectrogram = jax.random.normal(mkey, (B, T_MEL, NUM_MELS), jnp.float32)
    mel_spectrogram_len = jnp.array([T_MEL, T_MEL - 2], dtype=jnp.int32)

    fwd = jax.jit(tacotron2_forward)
    mels, mels_post, gates, alignments = fwd(
        params, chars_idx, chars_idx_len, mel_spectrogram, mel_spectrogram_len)
    jax.block_until_ready((mels, mels_post, gates, alignments))

    assert mels.shape == (B, T_MEL, NUM_MELS)
    assert mels_post.shape == (B, T_MEL, NUM_MELS)
    assert gates.shape == (B, T_MEL, 1)
    assert alignments.shape == (B, T_MEL, T_ENC)
    assert bool(jnp.all(jnp.isfinite(mels))) and bool(jnp.all(jnp.isfinite(mels_post)))
    assert bool(jnp.all(jnp.isfinite(gates))) and bool(jnp.all(jnp.isfinite(alignments)))
    print("KERNEL_OK")
</pallas_src>

<mosaic_0001>
module attributes {stable_mosaic.version = 11 : i64} {
  func.func @_encoder_kernel(%arg0: i32, %arg1: memref<8x2x32xf32, #tpu.memory_space<vmem>>, %arg2: memref<3x160x32xbf16, #tpu.memory_space<vmem>>, %arg3: memref<3x1x32xf32, #tpu.memory_space<vmem>>, %arg4: memref<96x128xbf16, #tpu.memory_space<vmem>>, %arg5: memref<1x128xf32, #tpu.memory_space<vmem>>, %arg6: memref<8x2x32xbf16, #tpu.memory_space<vmem>>, %arg7: memref<12x2x32xbf16, #tpu.memory_space<vmem>>, %arg8: memref<8x2x16xf32, #tpu.memory_space<vmem>>, %arg9: memref<8x2x16xf32, #tpu.memory_space<vmem>>) attributes {dimension_semantics = [#tpu.dimension_semantics<arbitrary>], iteration_bounds = array<i64: 1>, scalar_prefetch = 0 : i64, scratch_operands = 3 : i64, tpu.core_type = #tpu.core_type<tc>, window_params = [{pipeline_mode = #tpu.pipeline_mode<synchronous>, transform_indices = @transform_0, window_bounds = array<i64: 8, 2, 32>}, {pipeline_mode = #tpu.pipeline_mode<synchronous>, transform_indices = @transform_1, window_bounds = array<i64: 3, 160, 32>}, {pipeline_mode = #tpu.pipeline_mode<synchronous>, transform_indices = @transform_2, window_bounds = array<i64: 3, 1, 32>}, {pipeline_mode = #tpu.pipeline_mode<synchronous>, transform_indices = @transform_3, window_bounds = array<i64: 96, 128>}, {pipeline_mode = #tpu.pipeline_mode<synchronous>, transform_indices = @transform_4, window_bounds = array<i64: 1, 128>}, {pipeline_mode = #tpu.pipeline_mode<synchronous>, transform_indices = @transform_5, window_bounds = array<i64: 8, 2, 32>}]} {
    %cst = arith.constant 0.000000e+00 : bf16
    %0 = vector.broadcast %cst : bf16 to vector<12x2x32xbf16>
    %c0 = arith.constant 0 : index
    %c0_0 = arith.constant 0 : index
    %c0_1 = arith.constant 0 : index
    %1 = vector.load %arg7[%c0, %c0_0, %c0_1] : memref<12x2x32xbf16, #tpu.memory_space<vmem>>, vector<12x2x32xbf16>
    tpu.vector_store %arg7[%c0, %c0_0, %c0_1], %0 {strides = array<i32>} : memref<12x2x32xbf16, #tpu.memory_space<vmem>>, vector<12x2x32xbf16>,
    %c0_2 = arith.constant 0 : index
    %c0_3 = arith.constant 0 : index
    %c0_4 = arith.constant 0 : index
    %2 = vector.load %arg1[%c0_2, %c0_3, %c0_4] : memref<8x2x32xf32, #tpu.memory_space<vmem>>, vector<8x2x32xf32>
    %3 = arith.truncf %2 : vector<8x2x32xf32> to vector<8x2x32xbf16>
    %c2 = arith.constant 2 : index
    %c0_5 = arith.constant 0 : index
    %c0_6 = arith.constant 0 : index
    %4 = vector.load %arg7[%c2, %c0_5, %c0_6] : memref<12x2x32xbf16, #tpu.memory_space<vmem>>, vector<8x2x32xbf16>
    tpu.vector_store %arg7[%c2, %c0_5, %c0_6], %3 {strides = array<i32>} : memref<12x2x32xbf16, #tpu.memory_space<vmem>>, vector<8x2x32xbf16>,
    %c0_7 = arith.constant 0 : index
    %c0_8 = arith.constant 0 : index
    %c0_9 = arith.constant 0 : index
    %5 = vector.load %arg7[%c0_7, %c0_8, %c0_9] : memref<12x2x32xbf16, #tpu.memory_space<vmem>>, vector<8x2x32xbf16>
    %c1 = arith.constant 1 : index
    %c0_10 = arith.constant 0 : index
    %c0_11 = arith.constant 0 : index
    %6 = vector.load %arg7[%c1, %c0_10, %c0_11] : memref<12x2x32xbf16, #tpu.memory_space<vmem>>, vector<8x2x32xbf16>
    %c2_12 = arith.constant 2 : index
    %c0_13 = arith.constant 0 : index
    %c0_14 = arith.constant 0 : index
    %7 = vector.load %arg7[%c2_12, %c0_13, %c0_14] : memref<12x2x32xbf16, #tpu.memory_space<vmem>>, vector<8x2x32xbf16>
    %c3 = arith.constant 3 : index
    %c0_15 = arith.constant 0 : index
    %c0_16 = arith.constant 0 : index
    %8 = vector.load %arg7[%c3, %c0_15, %c0_16] : memref<12x2x32xbf16, #tpu.memory_space<vmem>>, vector<8x2x32xbf16>
    %c4 = arith.constant 4 : index
    %c0_17 = arith.constant 0 : index
    %c0_18 = arith.constant 0 : index
    %9 = vector.load %arg7[%c4, %c0_17, %c0_18] : memref<12x2x32xbf16, #tpu.memory_space<vmem>>, vector<8x2x32xbf16>
    %10 = tpu.concatenate %5, %6, %7, %8, %9 in 2 : vector<8x2x32xbf16>, vector<8x2x32xbf16>, vector<8x2x32xbf16>, vector<8x2x32xbf16>, vector<8x2x32xbf16> -> vector<8x2x160xbf16>
    %11 = vector.shape_cast %10 : vector<8x2x160xbf16> to vector<16x160xbf16>
    %c0_19 = arith.constant 0 : index
    %c0_20 = arith.constant 0 : index
    %c0_21 = arith.constant 0 : index
    %12 = vector.load %arg2[%c0_19, %c0_20, %c0_21] : memref<3x160x32xbf16, #tpu.memory_space<vmem>>, vector<1x160x32xbf16>
    %13 = vector.shape_cast %12 : vector<1x160x32xbf16> to vector<160x32xbf16>
    %cst_22 = arith.constant dense<0.000000e+00> : vector<16x32xf32>
    %14 = tpu.matmul %11, %13, %cst_22 {dimension_numbers = #tpu.dot_dimension_numbers<[1], [0], [0], [1], [0, 0, 1, 1], [], []>} : vector<16x160xbf16>, vector<160x32xbf16>, vector<16x32xf32> -> vector<16x32xf32>
    %c0_23 = arith.constant 0 : index
    %c0_24 = arith.constant 0 : index
    %c0_25 = arith.constant 0 : index
    %15 = vector.load %arg3[%c0_23, %c0_24, %c0_25] : memref<3x1x32xf32, #tpu.memory_space<vmem>>, vector<1x1x32xf32>
    %16 = vector.shape_cast %15 : vector<1x1x32xf32> to vector<1x32xf32>
    %17 = vector.broadcast %16 : vector<1x32xf32> to vector<16x32xf32>
    %18 = arith.addf %14, %17 : vector<16x32xf32>
    %cst_26 = arith.constant 0.000000e+00 : f32
    %19 = vector.broadcast %cst_26 : f32 to vector<16x32xf32>
    %20 = arith.maximumf %18, %19 : vector<16x32xf32>
    %21 = arith.truncf %20 : vector<16x32xf32> to vector<16x32xbf16>
    %22 = vector.shape_cast %21 : vector<16x32xbf16> to vector<8x2x32xbf16>
    %c2_27 = arith.constant 2 : index
    %c0_28 = arith.constant 0 : index
    %c0_29 = arith.constant 0 : index
    %23 = vector.load %arg7[%c2_27, %c0_28, %c0_29] : memref<12x2x32xbf16, #tpu.memory_space<vmem>>, vector<8x2x32xbf16>
    tpu.vector_store %arg7[%c2_27, %c0_28, %c0_29], %22 {strides = array<i32>} : memref<12x2x32xbf16, #tpu.memory_space<vmem>>, vector<8x2x32xbf16>,
    %c0_30 = arith.constant 0 : index
    %c0_31 = arith.constant 0 : index
    %c0_32 = arith.constant 0 : index
    %24 = vector.load %arg7[%c0_30, %c0_31, %c0_32] : memref<12x2x32xbf16, #tpu.memory_space<vmem>>, vector<8x2x32xbf16>
    %c1_33 = arith.constant 1 : index
    %c0_34 = arith.constant 0 : index
    %c0_35 = arith.constant 0 : index
    %25 = vector.load %arg7[%c1_33, %c0_34, %c0_35] : memref<12x2x32xbf16, #tpu.memory_space<vmem>>, vector<8x2x32xbf16>
    %c2_36 = arith.constant 2 : index
    %c0_37 = arith.constant 0 : index
    %c0_38 = arith.constant 0 : index
    %26 = vector.load %arg7[%c2_36, %c0_37, %c0_38] : memref<12x2x32xbf16, #tpu.memory_space<vmem>>, vector<8x2x32xbf16>
    %c3_39 = arith.constant 3 : index
    %c0_40 = arith.constant 0 : index
    %c0_41 = arith.constant 0 : index
    %27 = vector.load %arg7[%c3_39, %c0_40, %c0_41] : memref<12x2x32xbf16, #tpu.memory_space<vmem>>, vector<8x2x32xbf16>
    %c4_42 = arith.constant 4 : index
    %c0_43 = arith.constant 0 : index
    %c0_44 = arith.constant 0 : index
    %28 = vector.load %arg7[%c4_42, %c0_43, %c0_44] : memref<12x2x32xbf16, #tpu.memory_space<vmem>>, vector<8x2x32xbf16>
    %29 = tpu.concatenate %24, %25, %26, %27, %28 in 2 : vector<8x2x32xbf16>, vector<8x2x32xbf16>, vector<8x2x32xbf16>, vector<8x2x32xbf16>, vector<8x2x32xbf16> -> vector<8x2x160xbf16>
    %30 = vector.shape_cast %29 : vector<8x2x160xbf16> to vector<16x160xbf16>
    %c1_45 = arith.constant 1 : index
    %c0_46 = arith.constant 0 : index
    %c0_47 = arith.constant 0 : index
    %31 = vector.load %arg2[%c1_45, %c0_46, %c0_47] : memref<3x160x32xbf16, #tpu.memory_space<vmem>>, vector<1x160x32xbf16>
    %32 = vector.shape_cast %31 : vector<1x160x32xbf16> to vector<160x32xbf16>
    %cst_48 = arith.constant dense<0.000000e+00> : vector<16x32xf32>
    %33 = tpu.matmul %30, %32, %cst_48 {dimension_numbers = #tpu.dot_dimension_numbers<[1], [0], [0], [1], [0, 0, 1, 1], [], []>} : vector<16x160xbf16>, vector<160x32xbf16>, vector<16x32xf32> -> vector<16x32xf32>
    %c1_49 = arith.constant 1 : index
    %c0_50 = arith.constant 0 : index
    %c0_51 = arith.constant 0 : index
    %34 = vector.load %arg3[%c1_49, %c0_50, %c0_51] : memref<3x1x32xf32, #tpu.memory_space<vmem>>, vector<1x1x32xf32>
    %35 = vector.shape_cast %34 : vector<1x1x32xf32> to vector<1x32xf32>
    %36 = vector.broadcast %35 : vector<1x32xf32> to vector<16x32xf32>
    %37 = arith.addf %33, %36 : vector<16x32xf32>
    %cst_52 = arith.constant 0.000000e+00 : f32
    %38 = vector.broadcast %cst_52 : f32 to vector<16x32xf32>
    %39 = arith.maximumf %37, %38 : vector<16x32xf32>
    %40 = arith.truncf %39 : vector<16x32xf32> to vector<16x32xbf16>
    %41 = vector.shape_cast %40 : vector<16x32xbf16> to vector<8x2x32xbf16>
    %c2_53 = arith.constant 2 : index
    %c0_54 = arith.constant 0 : index
    %c0_55 = arith.constant 0 : index
    %42 = vector.load %arg7[%c2_53, %c0_54, %c0_55] : memref<12x2x32xbf16, #tpu.memory_space<vmem>>, vector<8x2x32xbf16>
    tpu.vector_store %arg7[%c2_53, %c0_54, %c0_55], %41 {strides = array<i32>} : memref<12x2x32xbf16, #tpu.memory_space<vmem>>, vector<8x2x32xbf16>,
    %c0_56 = arith.constant 0 : index
    %c0_57 = arith.constant 0 : index
    %c0_58 = arith.constant 0 : index
    %43 = vector.load %arg7[%c0_56, %c0_57, %c0_58] : memref<12x2x32xbf16, #tpu.memory_space<vmem>>, vector<8x2x32xbf16>
    %c1_59 = arith.constant 1 : index
    %c0_60 = arith.constant 0 : index
    %c0_61 = arith.constant 0 : index
    %44 = vector.load %arg7[%c1_59, %c0_60, %c0_61] : memref<12x2x32xbf16, #tpu.memory_space<vmem>>, vector<8x2x32xbf16>
    %c2_62 = arith.constant 2 : index
    %c0_63 = arith.constant 0 : index
    %c0_64 = arith.constant 0 : index
    %45 = vector.load %arg7[%c2_62, %c0_63, %c0_64] : memref<12x2x32xbf16, #tpu.memory_space<vmem>>, vector<8x2x32xbf16>
    %c3_65 = arith.constant 3 : index
    %c0_66 = arith.constant 0 : index
    %c0_67 = arith.constant 0 : index
    %46 = vector.load %arg7[%c3_65, %c0_66, %c0_67] : memref<12x2x32xbf16, #tpu.memory_space<vmem>>, vector<8x2x32xbf16>
    %c4_68 = arith.constant 4 : index
    %c0_69 = arith.constant 0 : index
    %c0_70 = arith.constant 0 : index
    %47 = vector.load %arg7[%c4_68, %c0_69, %c0_70] : memref<12x2x32xbf16, #tpu.memory_space<vmem>>, vector<8x2x32xbf16>
    %48 = tpu.concatenate %43, %44, %45, %46, %47 in 2 : vector<8x2x32xbf16>, vector<8x2x32xbf16>, vector<8x2x32xbf16>, vector<8x2x32xbf16>, vector<8x2x32xbf16> -> vector<8x2x160xbf16>
    %49 = vector.shape_cast %48 : vector<8x2x160xbf16> to vector<16x160xbf16>
    %c2_71 = arith.constant 2 : index
    %c0_72 = arith.constant 0 : index
    %c0_73 = arith.constant 0 : index
    %50 = vector.load %arg2[%c2_71, %c0_72, %c0_73] : memref<3x160x32xbf16, #tpu.memory_space<vmem>>, vector<1x160x32xbf16>
    %51 = vector.shape_cast %50 : vector<1x160x32xbf16> to vector<160x32xbf16>
    %cst_74 = arith.constant dense<0.000000e+00> : vector<16x32xf32>
    %52 = tpu.matmul %49, %51, %cst_74 {dimension_numbers = #tpu.dot_dimension_numbers<[1], [0], [0], [1], [0, 0, 1, 1], [], []>} : vector<16x160xbf16>, vector<160x32xbf16>, vector<16x32xf32> -> vector<16x32xf32>
    %c2_75 = arith.constant 2 : index
    %c0_76 = arith.constant 0 : index
    %c0_77 = arith.constant 0 : index
    %53 = vector.load %arg3[%c2_75, %c0_76, %c0_77] : memref<3x1x32xf32, #tpu.memory_space<vmem>>, vector<1x1x32xf32>
    %54 = vector.shape_cast %53 : vector<1x1x32xf32> to vector<1x32xf32>
    %55 = vector.broadcast %54 : vector<1x32xf32> to vector<16x32xf32>
    %56 = arith.addf %52, %55 : vector<16x32xf32>
    %cst_78 = arith.constant 0.000000e+00 : f32
    %57 = vector.broadcast %cst_78 : f32 to vector<16x32xf32>
    %58 = arith.maximumf %56, %57 : vector<16x32xf32>
    %59 = arith.truncf %58 : vector<16x32xf32> to vector<16x32xbf16>
    %60 = vector.shape_cast %59 : vector<16x32xbf16> to vector<8x2x32xbf16>
    %c2_79 = arith.constant 2 : index
    %c0_80 = arith.constant 0 : index
    %c0_81 = arith.constant 0 : index
    %61 = vector.load %arg7[%c2_79, %c0_80, %c0_81] : memref<12x2x32xbf16, #tpu.memory_space<vmem>>, vector<8x2x32xbf16>
    tpu.vector_store %arg7[%c2_79, %c0_80, %c0_81], %60 {strides = array<i32>} : memref<12x2x32xbf16, #tpu.memory_space<vmem>>, vector<8x2x32xbf16>,
    %c0_82 = arith.constant 0 : index
    %c0_83 = arith.constant 0 : index
    %62 = vector.load %arg4[%c0_82, %c0_83] : memref<96x128xbf16, #tpu.memory_space<vmem>>, vector<96x128xbf16>
    %c0_84 = arith.constant 0 : index
    %c0_85 = arith.constant 0 : index
    %63 = vector.load %arg5[%c0_84, %c0_85] : memref<1x128xf32, #tpu.memory_space<vmem>>, vector<1x128xf32>
    %cst_86 = arith.constant 0.000000e+00 : f32
    %64 = vector.broadcast %cst_86 : f32 to vector<2x32xf32>
    %c0_i32 = arith.constant 0 : i32
    %c8_i32 = arith.constant 8 : i32
    %65 = arith.addi %c0_i32, %c8_i32 : i32
    %c1_i32 = arith.constant 1 : i32
    %66:2 = scf.for %arg10 = %c0_i32 to %65 step %c1_i32 iter_args(%arg11 = %64, %arg12 = %64) -> (vector<2x32xf32>, vector<2x32xf32>)  : i32 {
      %c2_i32 = arith.constant 2 : i32
      %72 = arith.addi %c2_i32, %arg10 : i32
      %73 = arith.index_cast %72 : i32 to index
      %c0_97 = arith.constant 0 : index
      %c0_98 = arith.constant 0 : index
      %74 = vector.load %arg7[%73, %c0_97, %c0_98] : memref<12x2x32xbf16, #tpu.memory_space<vmem>>, vector<1x2x32xbf16>
      %75 = vector.shape_cast %74 : vector<1x2x32xbf16> to vector<2x32xbf16>
      %c9_i32 = arith.constant 9 : i32
      %76 = arith.subi %c9_i32, %arg10 : i32
      %77 = arith.index_cast %76 : i32 to index
      %c0_99 = arith.constant 0 : index
      %c0_100 = arith.constant 0 : index
      %78 = vector.load %arg7[%77, %c0_99, %c0_100] : memref<12x2x32xbf16, #tpu.memory_space<vmem>>, vector<1x2x32xbf16>
      %79 = vector.shape_cast %78 : vector<1x2x32xbf16> to vector<2x32xbf16>
      %80 = vector.extract_strided_slice %arg11 {offsets = [0, 0], sizes = [2, 16], strides = [1, 1]} : vector<2x32xf32> to vector<2x16xf32>
      %81 = arith.truncf %80 : vector<2x16xf32> to vector<2x16xbf16>
      %82 = vector.extract_strided_slice %arg11 {offsets = [0, 16], sizes = [2, 16], strides = [1, 1]} : vector<2x32xf32> to vector<2x16xf32>
      %83 = arith.truncf %82 : vector<2x16xf32> to vector<2x16xbf16>
      %84 = tpu.concatenate %75, %81, %79, %83 in 1 : vector<2x32xbf16>, vector<2x16xbf16>, vector<2x32xbf16>, vector<2x16xbf16> -> vector<2x96xbf16>
      %cst_101 = arith.constant dense<0.000000e+00> : vector<2x128xf32>
      %85 = tpu.matmul %84, %62, %cst_101 {dimension_numbers = #tpu.dot_dimension_numbers<[1], [0], [0], [1], [0, 0, 1, 1], [], []>} : vector<2x96xbf16>, vector<96x128xbf16>, vector<2x128xf32> -> vector<2x128xf32>
      %86 = vector.broadcast %63 : vector<1x128xf32> to vector<2x128xf32>
      %87 = arith.addf %85, %86 : vector<2x128xf32>
      %88 = arith.negf %87 : vector<2x128xf32>
      %89 = math.exp %88 : vector<2x128xf32>
      %cst_102 = arith.constant 1.000000e+00 : f32
      %90 = vector.broadcast %cst_102 : f32 to vector<2x128xf32>
      %91 = arith.addf %90, %89 : vector<2x128xf32>
      %92 = arith.divf %90, %91 : vector<2x128xf32>
      %93 = math.tanh %87 : vector<2x128xf32>
      %94 = vector.extract_strided_slice %92 {offsets = [0, 0], sizes = [2, 32], strides = [1, 1]} : vector<2x128xf32> to vector<2x32xf32>
      %95 = vector.extract_strided_slice %92 {offsets = [0, 32], sizes = [2, 32], strides = [1, 1]} : vector<2x128xf32> to vector<2x32xf32>
      %96 = vector.extract_strided_slice %93 {offsets = [0, 64], sizes = [2, 32], strides = [1, 1]} : vector<2x128xf32> to vector<2x32xf32>
      %97 = vector.extract_strided_slice %92 {offsets = [0, 96], sizes = [2, 32], strides = [1, 1]} : vector<2x128xf32> to vector<2x32xf32>
      %98 = arith.mulf %95, %arg12 : vector<2x32xf32>
      %99 = arith.mulf %94, %96 : vector<2x32xf32>
      %100 = arith.addf %98, %99 : vector<2x32xf32>
      %101 = math.tanh %100 : vector<2x32xf32>
      %102 = arith.mulf %97, %101 : vector<2x32xf32>
      %103 = vector.extract_strided_slice %102 {offsets = [0, 0], sizes = [2, 16], strides = [1, 1]} : vector<2x32xf32> to vector<2x16xf32>
      %104 = arith.index_cast %arg10 : i32 to index
      %c0_103 = arith.constant 0 : index
      %c0_104 = arith.constant 0 : index
      %105 = vector.load %arg8[%104, %c0_103, %c0_104] : memref<8x2x16xf32, #tpu.memory_space<vmem>>, vector<1x2x16xf32>
      %106 = vector.shape_cast %105 : vector<1x2x16xf32> to vector<2x16xf32>
      %107 = vector.shape_cast %103 : vector<2x16xf32> to vector<1x2x16xf32>
      tpu.vector_store %arg8[%104, %c0_103, %c0_104], %107 {strides = array<i32>} : memref<8x2x16xf32, #tpu.memory_space<vmem>>, vector<1x2x16xf32>,
      %108 = vector.extract_strided_slice %102 {offsets = [0, 16], sizes = [2, 16], strides = [1, 1]} : vector<2x32xf32> to vector<2x16xf32>
      %c7_i32 = arith.constant 7 : i32
      %109 = arith.subi %c7_i32, %arg10 : i32
      %110 = arith.index_cast %109 : i32 to index
      %c0_105 = arith.constant 0 : index
      %c0_106 = arith.constant 0 : index
      %111 = vector.load %arg9[%110, %c0_105, %c0_106] : memref<8x2x16xf32, #tpu.memory_space<vmem>>, vector<1x2x16xf32>
      %112 = vector.shape_cast %111 : vector<1x2x16xf32> to vector<2x16xf32>
      %113 = vector.shape_cast %108 : vector<2x16xf32> to vector<1x2x16xf32>
      tpu.vector_store %arg9[%110, %c0_105, %c0_106], %113 {strides = array<i32>} : memref<8x2x16xf32, #tpu.memory_space<vmem>>, vector<1x2x16xf32>,
      scf.yield %102, %100 : vector<2x32xf32>, vector<2x32xf32>
    }
    %c8_i32_87 = arith.constant 8 : i32
    %c0_88 = arith.constant 0 : index
    %c0_89 = arith.constant 0 : index
    %c0_90 = arith.constant 0 : index
    %67 = vector.load %arg8[%c0_88, %c0_89, %c0_90] : memref<8x2x16xf32, #tpu.memory_space<vmem>>, vector<8x2x16xf32>
    %c0_91 = arith.constant 0 : index
    %c0_92 = arith.constant 0 : index
    %c0_93 = arith.constant 0 : index
    %68 = vector.load %arg9[%c0_91, %c0_92, %c0_93] : memref<8x2x16xf32, #tpu.memory_space<vmem>>, vector<8x2x16xf32>
    %69 = tpu.concatenate %67, %68 in 2 : vector<8x2x16xf32>, vector<8x2x16xf32> -> vector<8x2x32xf32>
    %70 = arith.truncf %69 : vector<8x2x32xf32> to vector<8x2x32xbf16>
    %c0_94 = arith.constant 0 : index
    %c0_95 = arith.constant 0 : index
    %c0_96 = arith.constant 0 : index
    %71 = vector.load %arg6[%c0_94, %c0_95, %c0_96] : memref<8x2x32xbf16, #tpu.memory_space<vmem>>, vector<8x2x32xbf16>
    tpu.vector_store %arg6[%c0_94, %c0_95, %c0_96], %70 {strides = array<i32>} : memref<8x2x32xbf16, #tpu.memory_space<vmem>>, vector<8x2x32xbf16>,
    return
  }
  func.func @transform_0(%arg0: i32) -> (i32, i32, i32) {
    %c0_i32 = arith.constant 0 : i32
    %c0_i32_0 = arith.constant 0 : i32
    %c0_i32_1 = arith.constant 0 : i32
    %c0_i32_2 = arith.constant 0 : i32
    return %c0_i32, %c0_i32_0, %c0_i32_1 : i32, i32, i32
  }
  func.func @transform_1(%arg0: i32) -> (i32, i32, i32) {
    %c0_i32 = arith.constant 0 : i32
    %c0_i32_0 = arith.constant 0 : i32
    %c0_i32_1 = arith.constant 0 : i32
    %c0_i32_2 = arith.constant 0 : i32
    return %c0_i32, %c0_i32_0, %c0_i32_1 : i32, i32, i32
  }
  func.func @transform_2(%arg0: i32) -> (i32, i32, i32) {
    %c0_i32 = arith.constant 0 : i32
    %c0_i32_0 = arith.constant 0 : i32
    %c0_i32_1 = arith.constant 0 : i32
    %c0_i32_2 = arith.constant 0 : i32
    return %c0_i32, %c0_i32_0, %c0_i32_1 : i32, i32, i32
  }
  func.func @transform_3(%arg0: i32) -> (i32, i32) {
    %c0_i32 = arith.constant 0 : i32
    %c0_i32_0 = arith.constant 0 : i32
    %c0_i32_1 = arith.constant 0 : i32
    return %c0_i32, %c0_i32_0 : i32, i32
  }
  func.func @transform_4(%arg0: i32) -> (i32, i32) {
    %c0_i32 = arith.constant 0 : i32
    %c0_i32_0 = arith.constant 0 : i32
    %c0_i32_1 = arith.constant 0 : i32
    return %c0_i32, %c0_i32_0 : i32, i32
  }
  func.func @transform_5(%arg0: i32) -> (i32, i32, i32) {
    %c0_i32 = arith.constant 0 : i32
    %c0_i32_0 = arith.constant 0 : i32
    %c0_i32_1 = arith.constant 0 : i32
    %c0_i32_2 = arith.constant 0 : i32
    return %c0_i32, %c0_i32_0, %c0_i32_1 : i32, i32, i32
  }
}

module attributes {stable_mosaic.version = 11 : i64} {
  func.func @_decoder_kernel(%arg0: i32, %arg1: memref<6x2x8xbf16, #tpu.memory_space<vmem>>, %arg2: memref<2x8x32xbf16, #tpu.memory_space<vmem>>, %arg3: memref<2x8xf32, #tpu.memory_space<vmem>>, %arg4: memref<8x16xbf16, #tpu.memory_space<vmem>>, %arg5: memref<16x16xbf16, #tpu.memory_space<vmem>>, %arg6: memref<32x16xbf16, #tpu.memory_space<vmem>>, %arg7: memref<80x128xbf16, #tpu.memory_space<vmem>>, %arg8: memref<1x128xf32, #tpu.memory_space<vmem>>, %arg9: memref<32x16xbf16, #tpu.memory_space<vmem>>, %arg10: memref<14x16xf32, #tpu.memory_space<vmem>>, %arg11: memref<1x16xf32, #tpu.memory_space<vmem>>, %arg12: memref<96x128xbf16, #tpu.memory_space<vmem>>, %arg13: memref<1x128xf32, #tpu.memory_space<vmem>>, %arg14: memref<64x9xbf16, #tpu.memory_space<vmem>>, %arg15: memref<1x9xf32, #tpu.memory_space<vmem>>, %arg16: memref<6x2x17xf32, #tpu.memory_space<vmem>>, %arg17: memref<6x2x16xbf16, #tpu.memory_space<vmem>>) attributes {dimension_semantics = [#tpu.dimension_semantics<arbitrary>], iteration_bounds = array<i64: 1>, scalar_prefetch = 0 : i64, scratch_operands = 1 : i64, tpu.core_type = #tpu.core_type<tc>, window_params = [{pipeline_mode = #tpu.pipeline_mode<synchronous>, transform_indices = @transform_0, window_bounds = array<i64: 6, 2, 8>}, {pipeline_mode = #tpu.pipeline_mode<synchronous>, transform_indices = @transform_1, window_bounds = array<i64: 2, 8, 32>}, {pipeline_mode = #tpu.pipeline_mode<synchronous>, transform_indices = @transform_2, window_bounds = array<i64: 2, 8>}, {pipeline_mode = #tpu.pipeline_mode<synchronous>, transform_indices = @transform_3, window_bounds = array<i64: 8, 16>}, {pipeline_mode = #tpu.pipeline_mode<synchronous>, transform_indices = @transform_4, window_bounds = array<i64: 16, 16>}, {pipeline_mode = #tpu.pipeline_mode<synchronous>, transform_indices = @transform_5, window_bounds = array<i64: 32, 16>}, {pipeline_mode = #tpu.pipeline_mode<synchronous>, transform_indices = @transform_6, window_bounds = array<i64: 80, 128>}, {pipeline_mode = #tpu.pipeline_mode<synchronous>, transform_indices = @transform_7, window_bounds = array<i64: 1, 128>}, {pipeline_mode = #tpu.pipeline_mode<synchronous>, transform_indices = @transform_8, window_bounds = array<i64: 32, 16>}, {pipeline_mode = #tpu.pipeline_mode<synchronous>, transform_indices = @transform_9, window_bounds = array<i64: 14, 16>}, {pipeline_mode = #tpu.pipeline_mode<synchronous>, transform_indices = @transform_10, window_bounds = array<i64: 1, 16>}, {pipeline_mode = #tpu.pipeline_mode<synchronous>, transform_indices = @transform_11, window_bounds = array<i64: 96, 128>}, {pipeline_mode = #tpu.pipeline_mode<synchronous>, transform_indices = @transform_12, window_bounds = array<i64: 1, 128>}, {pipeline_mode = #tpu.pipeline_mode<synchronous>, transform_indices = @transform_13, window_bounds = array<i64: 64, 9>}, {pipeline_mode = #tpu.pipeline_mode<synchronous>, transform_indices = @transform_14, window_bounds = array<i64: 1, 9>}, {pipeline_mode = #tpu.pipeline_mode<synchronous>, transform_indices = @transform_15, window_bounds = array<i64: 6, 2, 17>}]} {
    %c0 = arith.constant 0 : index
    %c0_0 = arith.constant 0 : index
    %c0_1 = arith.constant 0 : index
    %0 = vector.load %arg1[%c0, %c0_0, %c0_1] : memref<6x2x8xbf16, #tpu.memory_space<vmem>>, vector<6x2x8xbf16>
    %1 = vector.shape_cast %0 : vector<6x2x8xbf16> to vector<12x8xbf16>
    %c0_2 = arith.constant 0 : index
    %c0_3 = arith.constant 0 : index
    %2 = vector.load %arg4[%c0_2, %c0_3] : memref<8x16xbf16, #tpu.memory_space<vmem>>, vector<8x16xbf16>
    %cst = arith.constant dense<0.000000e+00> : vector<12x16xf32>
    %3 = tpu.matmul %1, %2, %cst {dimension_numbers = #tpu.dot_dimension_numbers<[1], [0], [0], [1], [0, 0, 1, 1], [], []>} : vector<12x8xbf16>, vector<8x16xbf16>, vector<12x16xf32> -> vector<12x16xf32>
    %cst_4 = arith.constant 0.000000e+00 : f32
    %4 = vector.broadcast %cst_4 : f32 to vector<12x16xf32>
    %5 = arith.maximumf %3, %4 : vector<12x16xf32>
    %6 = arith.truncf %5 : vector<12x16xf32> to vector<12x16xbf16>
    %c0_5 = arith.constant 0 : index
    %c0_6 = arith.constant 0 : index
    %7 = vector.load %arg5[%c0_5, %c0_6] : memref<16x16xbf16, #tpu.memory_space<vmem>>, vector<16x16xbf16>
    %cst_7 = arith.constant dense<0.000000e+00> : vector<12x16xf32>
    %8 = tpu.matmul %6, %7, %cst_7 {dimension_numbers = #tpu.dot_dimension_numbers<[1], [0], [0], [1], [0, 0, 1, 1], [], []>} : vector<12x16xbf16>, vector<16x16xbf16>, vector<12x16xf32> -> vector<12x16xf32>
    %cst_8 = arith.constant 0.000000e+00 : f32
    %9 = vector.broadcast %cst_8 : f32 to vector<12x16xf32>
    %10 = arith.maximumf %8, %9 : vector<12x16xf32>
    %11 = vector.shape_cast %10 : vector<12x16xf32> to vector<6x2x16xf32>
    %12 = arith.truncf %11 : vector<6x2x16xf32> to vector<6x2x16xbf16>
    %c0_9 = arith.constant 0 : index
    %c0_10 = arith.constant 0 : index
    %c0_11 = arith.constant 0 : index
    %13 = vector.load %arg17[%c0_9, %c0_10, %c0_11] : memref<6x2x16xbf16, #tpu.memory_space<vmem>>, vector<6x2x16xbf16>
    tpu.vector_store %arg17[%c0_9, %c0_10, %c0_11], %12 {strides = array<i32>} : memref<6x2x16xbf16, #tpu.memory_space<vmem>>, vector<6x2x16xbf16>,
    %c0_12 = arith.constant 0 : index
    %c0_13 = arith.constant 0 : index
    %c0_14 = arith.constant 0 : index
    %14 = vector.load %arg2[%c0_12, %c0_13, %c0_14] : memref<2x8x32xbf16, #tpu.memory_space<vmem>>, vector<2x8x32xbf16>
    %15 = vector.shape_cast %14 : vector<2x8x32xbf16> to vector<16x32xbf16>
    %c0_15 = arith.constant 0 : index
    %c0_16 = arith.constant 0 : index
    %16 = vector.load %arg6[%c0_15, %c0_16] : memref<32x16xbf16, #tpu.memory_space<vmem>>, vector<32x16xbf16>
    %cst_17 = arith.constant dense<0.000000e+00> : vector<16x16xf32>
    %17 = tpu.matmul %15, %16, %cst_17 {dimension_numbers = #tpu.dot_dimension_numbers<[1], [0], [0], [1], [0, 0, 1, 1], [], []>} : vector<16x32xbf16>, vector<32x16xbf16>, vector<16x16xf32> -> vector<16x16xf32>
    %18 = vector.shape_cast %17 : vector<16x16xf32> to vector<2x8x16xf32>
    %c0_18 = arith.constant 0 : index
    %c0_19 = arith.constant 0 : index
    %19 = vector.load %arg3[%c0_18, %c0_19] : memref<2x8xf32, #tpu.memory_space<vmem>>, vector<2x8xf32>
    %c0_20 = arith.constant 0 : index
    %c0_21 = arith.constant 0 : index
    %20 = vector.load %arg10[%c0_20, %c0_21] : memref<14x16xf32, #tpu.memory_space<vmem>>, vector<14x16xf32>
    %c0_22 = arith.constant 0 : index
    %c0_23 = arith.constant 0 : index
    %21 = vector.load %arg11[%c0_22, %c0_23] : memref<1x16xf32, #tpu.memory_space<vmem>>, vector<1x16xf32>
    %c0_24 = arith.constant 0 : index
    %c0_25 = arith.constant 0 : index
    %22 = vector.load %arg7[%c0_24, %c0_25] : memref<80x128xbf16, #tpu.memory_space<vmem>>, vector<80x128xbf16>
    %c0_26 = arith.constant 0 : index
    %c0_27 = arith.constant 0 : index
    %23 = vector.load %arg8[%c0_26, %c0_27] : memref<1x128xf32, #tpu.memory_space<vmem>>, vector<1x128xf32>
    %c0_28 = arith.constant 0 : index
    %c0_29 = arith.constant 0 : index
    %24 = vector.load %arg9[%c0_28, %c0_29] : memref<32x16xbf16, #tpu.memory_space<vmem>>, vector<32x16xbf16>
    %c0_30 = arith.constant 0 : index
    %c0_31 = arith.constant 0 : index
    %25 = vector.load %arg12[%c0_30, %c0_31] : memref<96x128xbf16, #tpu.memory_space<vmem>>, vector<96x128xbf16>
    %c0_32 = arith.constant 0 : index
    %c0_33 = arith.constant 0 : index
    %26 = vector.load %arg13[%c0_32, %c0_33] : memref<1x128xf32, #tpu.memory_space<vmem>>, vector<1x128xf32>
    %c0_34 = arith.constant 0 : index
    %c0_35 = arith.constant 0 : index
    %27 = vector.load %arg14[%c0_34, %c0_35] : memref<64x9xbf16, #tpu.memory_space<vmem>>, vector<64x9xbf16>
    %c0_36 = arith.constant 0 : index
    %c0_37 = arith.constant 0 : index
    %28 = vector.load %arg15[%c0_36, %c0_37] : memref<1x9xf32, #tpu.memory_space<vmem>>, vector<1x9xf32>
    %cst_38 = arith.constant 0.000000e+00 : f32
    %29 = vector.broadcast %cst_38 : f32 to vector<2x3xf32>
    %cst_39 = arith.constant 0.000000e+00 : f32
    %30 = vector.broadcast %cst_39 : f32 to vector<2x32xf32>
    %cst_40 = arith.constant 0.000000e+00 : f32
    %31 = vector.broadcast %cst_40 : f32 to vector<2x32xf32>
    %cst_41 = arith.constant 0.000000e+00 : f32
    %32 = vector.broadcast %cst_41 : f32 to vector<2x32xf32>
    %cst_42 = arith.constant 0.000000e+00 : f32
    %33 = vector.broadcast %cst_42 : f32 to vector<2x32xf32>
    %cst_43 = arith.constant 0.000000e+00 : f32
    %34 = vector.broadcast %cst_43 : f32 to vector<2x32xf32>
    %cst_44 = arith.constant 0.000000e+00 : f32
    %35 = vector.broadcast %cst_44 : f32 to vector<2x8xf32>
    %cst_45 = arith.constant 0.000000e+00 : f32
    %36 = vector.broadcast %cst_45 : f32 to vector<2x8xf32>
    %c0_i32 = arith.constant 0 : i32
    %c6_i32 = arith.constant 6 : i32
    %37 = arith.addi %c0_i32, %c6_i32 : i32
    %c1_i32 = arith.constant 1 : i32
    %38:7 = scf.for %arg18 = %c0_i32 to %37 step %c1_i32 iter_args(%arg19 = %30, %arg20 = %31, %arg21 = %32, %arg22 = %33, %arg23 = %34, %arg24 = %35, %arg25 = %36) -> (vector<2x32xf32>, vector<2x32xf32>, vector<2x32xf32>, vector<2x32xf32>, vector<2x32xf32>, vector<2x8xf32>, vector<2x8xf32>)  : i32 {
      %39 = arith.index_cast %arg18 : i32 to index
      %c0_47 = arith.constant 0 : index
      %c0_48 = arith.constant 0 : index
      %40 = vector.load %arg17[%39, %c0_47, %c0_48] : memref<6x2x16xbf16, #tpu.memory_space<vmem>>, vector<1x2x16xbf16>
      %41 = vector.shape_cast %40 : vector<1x2x16xbf16> to vector<2x16xbf16>
      %42 = arith.truncf %arg23 : vector<2x32xf32> to vector<2x32xbf16>
      %43 = arith.truncf %arg19 : vector<2x32xf32> to vector<2x32xbf16>
      %44 = tpu.concatenate %41, %42, %43 in 1 : vector<2x16xbf16>, vector<2x32xbf16>, vector<2x32xbf16> -> vector<2x80xbf16>
      %cst_49 = arith.constant dense<0.000000e+00> : vector<2x128xf32>
      %45 = tpu.matmul %44, %22, %cst_49 {dimension_numbers = #tpu.dot_dimension_numbers<[1], [0], [0], [1], [0, 0, 1, 1], [], []>} : vector<2x80xbf16>, vector<80x128xbf16>, vector<2x128xf32> -> vector<2x128xf32>
      %46 = vector.broadcast %23 : vector<1x128xf32> to vector<2x128xf32>
      %47 = arith.addf %45, %46 : vector<2x128xf32>
      %48 = arith.negf %47 : vector<2x128xf32>
      %49 = math.exp %48 : vector<2x128xf32>
      %cst_50 = arith.constant 1.000000e+00 : f32
      %50 = vector.broadcast %cst_50 : f32 to vector<2x128xf32>
      %51 = arith.addf %50, %49 : vector<2x128xf32>
      %52 = arith.divf %50, %51 : vector<2x128xf32>
      %53 = math.tanh %47 : vector<2x128xf32>
      %54 = vector.extract_strided_slice %52 {offsets = [0, 32], sizes = [2, 32], strides = [1, 1]} : vector<2x128xf32> to vector<2x32xf32>
      %55 = arith.mulf %54, %arg20 : vector<2x32xf32>
      %56 = vector.extract_strided_slice %52 {offsets = [0, 0], sizes = [2, 32], strides = [1, 1]} : vector<2x128xf32> to vector<2x32xf32>
      %57 = vector.extract_strided_slice %53 {offsets = [0, 64], sizes = [2, 32], strides = [1, 1]} : vector<2x128xf32> to vector<2x32xf32>
      %58 = arith.mulf %56, %57 : vector<2x32xf32>
      %59 = arith.addf %55, %58 : vector<2x32xf32>
      %60 = vector.extract_strided_slice %52 {offsets = [0, 96], sizes = [2, 32], strides = [1, 1]} : vector<2x128xf32> to vector<2x32xf32>
      %61 = math.tanh %59 : vector<2x32xf32>
      %62 = arith.mulf %60, %61 : vector<2x32xf32>
      %63 = arith.truncf %62 : vector<2x32xf32> to vector<2x32xbf16>
      %cst_51 = arith.constant dense<0.000000e+00> : vector<2x16xf32>
      %64 = tpu.matmul %63, %24, %cst_51 {dimension_numbers = #tpu.dot_dimension_numbers<[1], [0], [0], [1], [0, 0, 1, 1], [], []>} : vector<2x32xbf16>, vector<32x16xbf16>, vector<2x16xf32> -> vector<2x16xf32>
      %65 = tpu.concatenate %29, %arg24, %29 in 1 : vector<2x3xf32>, vector<2x8xf32>, vector<2x3xf32> -> vector<2x14xf32>
      %66 = tpu.concatenate %29, %arg25, %29 in 1 : vector<2x3xf32>, vector<2x8xf32>, vector<2x3xf32> -> vector<2x14xf32>
      %cst_52 = arith.constant 0.000000e+00 : f32
      %67 = vector.broadcast %cst_52 : f32 to vector<2x8x16xf32>
      %68 = vector.extract_strided_slice %65 {offsets = [0, 0], sizes = [2, 8], strides = [1, 1]} : vector<2x14xf32> to vector<2x8xf32>
      %69 = vector.shape_cast %68 : vector<2x8xf32> to vector<2x8x1xf32>
      %70 = vector.extract_strided_slice %20 {offsets = [0, 0], sizes = [1, 16], strides = [1, 1]} : vector<14x16xf32> to vector<1x16xf32>
      %71 = vector.shape_cast %70 : vector<1x16xf32> to vector<1x1x16xf32>
      %72 = vector.broadcast %69 : vector<2x8x1xf32> to vector<2x8x16xf32>
      %73 = vector.broadcast %71 : vector<1x1x16xf32> to vector<2x8x16xf32>
      %74 = arith.mulf %72, %73 : vector<2x8x16xf32>
      %75 = arith.addf %67, %74 : vector<2x8x16xf32>
      %76 = vector.extract_strided_slice %66 {offsets = [0, 0], sizes = [2, 8], strides = [1, 1]} : vector<2x14xf32> to vector<2x8xf32>
      %77 = vector.shape_cast %76 : vector<2x8xf32> to vector<2x8x1xf32>
      %78 = vector.extract_strided_slice %20 {offsets = [7, 0], sizes = [1, 16], strides = [1, 1]} : vector<14x16xf32> to vector<1x16xf32>
      %79 = vector.shape_cast %78 : vector<1x16xf32> to vector<1x1x16xf32>
      %80 = vector.broadcast %77 : vector<2x8x1xf32> to vector<2x8x16xf32>
      %81 = vector.broadcast %79 : vector<1x1x16xf32> to vector<2x8x16xf32>
      %82 = arith.mulf %80, %81 : vector<2x8x16xf32>
      %83 = arith.addf %75, %82 : vector<2x8x16xf32>
      %84 = vector.extract_strided_slice %65 {offsets = [0, 1], sizes = [2, 8], strides = [1, 1]} : vector<2x14xf32> to vector<2x8xf32>
      %85 = vector.shape_cast %84 : vector<2x8xf32> to vector<2x8x1xf32>
      %86 = vector.extract_strided_slice %20 {offsets = [1, 0], sizes = [1, 16], strides = [1, 1]} : vector<14x16xf32> to vector<1x16xf32>
      %87 = vector.shape_cast %86 : vector<1x16xf32> to vector<1x1x16xf32>
      %88 = vector.broadcast %85 : vector<2x8x1xf32> to vector<2x8x16xf32>
      %89 = vector.broadcast %87 : vector<1x1x16xf32> to vector<2x8x16xf32>
      %90 = arith.mulf %88, %89 : vector<2x8x16xf32>
      %91 = arith.addf %83, %90 : vector<2x8x16xf32>
      %92 = vector.extract_strided_slice %66 {offsets = [0, 1], sizes = [2, 8], strides = [1, 1]} : vector<2x14xf32> to vector<2x8xf32>
      %93 = vector.shape_cast %92 : vector<2x8xf32> to vector<2x8x1xf32>
      %94 = vector.extract_strided_slice %20 {offsets = [8, 0], sizes = [1, 16], strides = [1, 1]} : vector<14x16xf32> to vector<1x16xf32>
      %95 = vector.shape_cast %94 : vector<1x16xf32> to vector<1x1x16xf32>
      %96 = vector.broadcast %93 : vector<2x8x1xf32> to vector<2x8x16xf32>
      %97 = vector.broadcast %95 : vector<1x1x16xf32> to vector<2x8x16xf32>
      %98 = arith.mulf %96, %97 : vector<2x8x16xf32>
      %99 = arith.addf %91, %98 : vector<2x8x16xf32>
      %100 = vector.extract_strided_slice %65 {offsets = [0, 2], sizes = [2, 8], strides = [1, 1]} : vector<2x14xf32> to vector<2x8xf32>
      %101 = vector.shape_cast %100 : vector<2x8xf32> to vector<2x8x1xf32>
      %102 = vector.extract_strided_slice %20 {offsets = [2, 0], sizes = [1, 16], strides = [1, 1]} : vector<14x16xf32> to vector<1x16xf32>
      %103 = vector.shape_cast %102 : vector<1x16xf32> to vector<1x1x16xf32>
      %104 = vector.broadcast %101 : vector<2x8x1xf32> to vector<2x8x16xf32>
      %105 = vector.broadcast %103 : vector<1x1x16xf32> to vector<2x8x16xf32>
      %106 = arith.mulf %104, %105 : vector<2x8x16xf32>
      %107 = arith.addf %99, %106 : vector<2x8x16xf32>
      %108 = vector.extract_strided_slice %66 {offsets = [0, 2], sizes = [2, 8], strides = [1, 1]} : vector<2x14xf32> to vector<2x8xf32>
      %109 = vector.shape_cast %108 : vector<2x8xf32> to vector<2x8x1xf32>
      %110 = vector.extract_strided_slice %20 {offsets = [9, 0], sizes = [1, 16], strides = [1, 1]} : vector<14x16xf32> to vector<1x16xf32>
      %111 = vector.shape_cast %110 : vector<1x16xf32> to vector<1x1x16xf32>
      %112 = vector.broadcast %109 : vector<2x8x1xf32> to vector<2x8x16xf32>
      %113 = vector.broadcast %111 : vector<1x1x16xf32> to vector<2x8x16xf32>
      %114 = arith.mulf %112, %113 : vector<2x8x16xf32>
      %115 = arith.addf %107, %114 : vector<2x8x16xf32>
      %116 = vector.extract_strided_slice %65 {offsets = [0, 3], sizes = [2, 8], strides = [1, 1]} : vector<2x14xf32> to vector<2x8xf32>
      %117 = vector.shape_cast %116 : vector<2x8xf32> to vector<2x8x1xf32>
      %118 = vector.extract_strided_slice %20 {offsets = [3, 0], sizes = [1, 16], strides = [1, 1]} : vector<14x16xf32> to vector<1x16xf32>
      %119 = vector.shape_cast %118 : vector<1x16xf32> to vector<1x1x16xf32>
      %120 = vector.broadcast %117 : vector<2x8x1xf32> to vector<2x8x16xf32>
      %121 = vector.broadcast %119 : vector<1x1x16xf32> to vector<2x8x16xf32>
      %122 = arith.mulf %120, %121 : vector<2x8x16xf32>
      %123 = arith.addf %115, %122 : vector<2x8x16xf32>
      %124 = vector.extract_strided_slice %66 {offsets = [0, 3], sizes = [2, 8], strides = [1, 1]} : vector<2x14xf32> to vector<2x8xf32>
      %125 = vector.shape_cast %124 : vector<2x8xf32> to vector<2x8x1xf32>
      %126 = vector.extract_strided_slice %20 {offsets = [10, 0], sizes = [1, 16], strides = [1, 1]} : vector<14x16xf32> to vector<1x16xf32>
      %127 = vector.shape_cast %126 : vector<1x16xf32> to vector<1x1x16xf32>
      %128 = vector.broadcast %125 : vector<2x8x1xf32> to vector<2x8x16xf32>
      %129 = vector.broadcast %127 : vector<1x1x16xf32> to vector<2x8x16xf32>
      %130 = arith.mulf %128, %129 : vector<2x8x16xf32>
      %131 = arith.addf %123, %130 : vector<2x8x16xf32>
      %132 = vector.extract_strided_slice %65 {offsets = [0, 4], sizes = [2, 8], strides = [1, 1]} : vector<2x14xf32> to vector<2x8xf32>
      %133 = vector.shape_cast %132 : vector<2x8xf32> to vector<2x8x1xf32>
      %134 = vector.extract_strided_slice %20 {offsets = [4, 0], sizes = [1, 16], strides = [1, 1]} : vector<14x16xf32> to vector<1x16xf32>
      %135 = vector.shape_cast %134 : vector<1x16xf32> to vector<1x1x16xf32>
      %136 = vector.broadcast %133 : vector<2x8x1xf32> to vector<2x8x16xf32>
      %137 = vector.broadcast %135 : vector<1x1x16xf32> to vector<2x8x16xf32>
      %138 = arith.mulf %136, %137 : vector<2x8x16xf32>
      %139 = arith.addf %131, %138 : vector<2x8x16xf32>
      %140 = vector.extract_strided_slice %66 {offsets = [0, 4], sizes = [2, 8], strides = [1, 1]} : vector<2x14xf32> to vector<2x8xf32>
      %141 = vector.shape_cast %140 : vector<2x8xf32> to vector<2x8x1xf32>
      %142 = vector.extract_strided_slice %20 {offsets = [11, 0], sizes = [1, 16], strides = [1, 1]} : vector<14x16xf32> to vector<1x16xf32>
      %143 = vector.shape_cast %142 : vector<1x16xf32> to vector<1x1x16xf32>
      %144 = vector.broadcast %141 : vector<2x8x1xf32> to vector<2x8x16xf32>
      %145 = vector.broadcast %143 : vector<1x1x16xf32> to vector<2x8x16xf32>
      %146 = arith.mulf %144, %145 : vector<2x8x16xf32>
      %147 = arith.addf %139, %146 : vector<2x8x16xf32>
      %148 = vector.extract_strided_slice %65 {offsets = [0, 5], sizes = [2, 8], strides = [1, 1]} : vector<2x14xf32> to vector<2x8xf32>
      %149 = vector.shape_cast %148 : vector<2x8xf32> to vector<2x8x1xf32>
      %150 = vector.extract_strided_slice %20 {offsets = [5, 0], sizes = [1, 16], strides = [1, 1]} : vector<14x16xf32> to vector<1x16xf32>
      %151 = vector.shape_cast %150 : vector<1x16xf32> to vector<1x1x16xf32>
      %152 = vector.broadcast %149 : vector<2x8x1xf32> to vector<2x8x16xf32>
      %153 = vector.broadcast %151 : vector<1x1x16xf32> to vector<2x8x16xf32>
      %154 = arith.mulf %152, %153 : vector<2x8x16xf32>
      %155 = arith.addf %147, %154 : vector<2x8x16xf32>
      %156 = vector.extract_strided_slice %66 {offsets = [0, 5], sizes = [2, 8], strides = [1, 1]} : vector<2x14xf32> to vector<2x8xf32>
      %157 = vector.shape_cast %156 : vector<2x8xf32> to vector<2x8x1xf32>
      %158 = vector.extract_strided_slice %20 {offsets = [12, 0], sizes = [1, 16], strides = [1, 1]} : vector<14x16xf32> to vector<1x16xf32>
      %159 = vector.shape_cast %158 : vector<1x16xf32> to vector<1x1x16xf32>
      %160 = vector.broadcast %157 : vector<2x8x1xf32> to vector<2x8x16xf32>
      %161 = vector.broadcast %159 : vector<1x1x16xf32> to vector<2x8x16xf32>
      %162 = arith.mulf %160, %161 : vector<2x8x16xf32>
      %163 = arith.addf %155, %162 : vector<2x8x16xf32>
      %164 = vector.extract_strided_slice %65 {offsets = [0, 6], sizes = [2, 8], strides = [1, 1]} : vector<2x14xf32> to vector<2x8xf32>
      %165 = vector.shape_cast %164 : vector<2x8xf32> to vector<2x8x1xf32>
      %166 = vector.extract_strided_slice %20 {offsets = [6, 0], sizes = [1, 16], strides = [1, 1]} : vector<14x16xf32> to vector<1x16xf32>
      %167 = vector.shape_cast %166 : vector<1x16xf32> to vector<1x1x16xf32>
      %168 = vector.broadcast %165 : vector<2x8x1xf32> to vector<2x8x16xf32>
      %169 = vector.broadcast %167 : vector<1x1x16xf32> to vector<2x8x16xf32>
      %170 = arith.mulf %168, %169 : vector<2x8x16xf32>
      %171 = arith.addf %163, %170 : vector<2x8x16xf32>
      %172 = vector.extract_strided_slice %66 {offsets = [0, 6], sizes = [2, 8], strides = [1, 1]} : vector<2x14xf32> to vector<2x8xf32>
      %173 = vector.shape_cast %172 : vector<2x8xf32> to vector<2x8x1xf32>
      %174 = vector.extract_strided_slice %20 {offsets = [13, 0], sizes = [1, 16], strides = [1, 1]} : vector<14x16xf32> to vector<1x16xf32>
      %175 = vector.shape_cast %174 : vector<1x16xf32> to vector<1x1x16xf32>
      %176 = vector.broadcast %173 : vector<2x8x1xf32> to vector<2x8x16xf32>
      %177 = vector.broadcast %175 : vector<1x1x16xf32> to vector<2x8x16xf32>
      %178 = arith.mulf %176, %177 : vector<2x8x16xf32>
      %179 = arith.addf %171, %178 : vector<2x8x16xf32>
      %180 = vector.shape_cast %64 : vector<2x16xf32> to vector<2x1x16xf32>
      %181 = vector.broadcast %180 : vector<2x1x16xf32> to vector<2x8x16xf32>
      %182 = arith.addf %181, %18 : vector<2x8x16xf32>
      %183 = arith.addf %182, %179 : vector<2x8x16xf32>
      %184 = math.tanh %183 : vector<2x8x16xf32>
      %185 = vector.shape_cast %21 : vector<1x16xf32> to vector<1x1x16xf32>
      %186 = vector.broadcast %185 : vector<1x1x16xf32> to vector<2x8x16xf32>
      %187 = arith.mulf %184, %186 : vector<2x8x16xf32>
      %cst_53 = arith.constant dense<0.000000e+00> : vector<2x8xf32>
      %188 = vector.multi_reduction <add>, %187, %cst_53 [2] : vector<2x8x16xf32> to vector<2x8xf32>
      %cst_54 = arith.constant 5.000000e-01 : f32
      %189 = vector.broadcast %cst_54 : f32 to vector<2x8xf32>
      %190 = arith.cmpf ogt, %19, %189 : vector<2x8xf32>
      %cst_55 = arith.constant -1.000000e+30 : f32
      %191 = vector.broadcast %cst_55 : f32 to vector<2x8xf32>
      %192 = arith.select %190, %191, %188 : vector<2x8xi1>, vector<2x8xf32>
      %cst_56 = arith.constant dense<0xFF800000> : vector<2xf32>
      %193 = vector.multi_reduction <maximumf>, %192, %cst_56 [1] : vector<2x8xf32> to vector<2xf32>
      %194 = vector.shape_cast %193 : vector<2xf32> to vector<2x1xf32>
      %195 = vector.broadcast %194 : vector<2x1xf32> to vector<2x8xf32>
      %196 = arith.subf %192, %195 : vector<2x8xf32>
      %197 = math.exp %196 : vector<2x8xf32>
      %cst_57 = arith.constant dense<0.000000e+00> : vector<2xf32>
      %198 = vector.multi_reduction <add>, %197, %cst_57 [1] : vector<2x8xf32> to vector<2xf32>
      %199 = vector.shape_cast %198 : vector<2xf32> to vector<2x1xf32>
      %200 = tpu.reciprocal %199 {approx = true} : vector<2x1xf32> -> vector<2x1xf32>
      %201 = vector.broadcast %200 : vector<2x1xf32> to vector<2x8xf32>
      %202 = arith.mulf %197, %201 : vector<2x8xf32>
      %203 = arith.addf %arg25, %202 : vector<2x8xf32>
      %204 = vector.shape_cast %202 : vector<2x8xf32> to vector<2x1x8xf32>
      %205 = arith.truncf %204 : vector<2x1x8xf32> to vector<2x1x8xbf16>
      "tpu.trace_start"() <{level = 10 : i32, message = "bqt,bte->bqe"}> : () -> ()
      %cst_58 = arith.constant dense<0.000000e+00> : vector<2x1x32xf32>
      %206 = tpu.matmul %205, %14, %cst_58 {dimension_numbers = #tpu.dot_dimension_numbers<[2], [1], [1], [2], [0, 0, 0, 1, 1, 2], [0], [0]>} : vector<2x1x8xbf16>, vector<2x8x32xbf16>, vector<2x1x32xf32> -> vector<2x1x32xf32>
      "tpu.trace_stop"() : () -> ()
      %207 = vector.shape_cast %206 : vector<2x1x32xf32> to vector<2x32xf32>
      %208 = arith.truncf %62 : vector<2x32xf32> to vector<2x32xbf16>
      %209 = arith.truncf %207 : vector<2x32xf32> to vector<2x32xbf16>
      %210 = arith.truncf %arg21 : vector<2x32xf32> to vector<2x32xbf16>
      %211 = tpu.concatenate %208, %209, %210 in 1 : vector<2x32xbf16>, vector<2x32xbf16>, vector<2x32xbf16> -> vector<2x96xbf16>
      %cst_59 = arith.constant dense<0.000000e+00> : vector<2x128xf32>
      %212 = tpu.matmul %211, %25, %cst_59 {dimension_numbers = #tpu.dot_dimension_numbers<[1], [0], [0], [1], [0, 0, 1, 1], [], []>} : vector<2x96xbf16>, vector<96x128xbf16>, vector<2x128xf32> -> vector<2x128xf32>
      %213 = vector.broadcast %26 : vector<1x128xf32> to vector<2x128xf32>
      %214 = arith.addf %212, %213 : vector<2x128xf32>
      %215 = arith.negf %214 : vector<2x128xf32>
      %216 = math.exp %215 : vector<2x128xf32>
      %cst_60 = arith.constant 1.000000e+00 : f32
      %217 = vector.broadcast %cst_60 : f32 to vector<2x128xf32>
      %218 = arith.addf %217, %216 : vector<2x128xf32>
      %219 = arith.divf %217, %218 : vector<2x128xf32>
      %220 = math.tanh %214 : vector<2x128xf32>
      %221 = vector.extract_strided_slice %219 {offsets = [0, 32], sizes = [2, 32], strides = [1, 1]} : vector<2x128xf32> to vector<2x32xf32>
      %222 = arith.mulf %221, %arg22 : vector<2x32xf32>
      %223 = vector.extract_strided_slice %219 {offsets = [0, 0], sizes = [2, 32], strides = [1, 1]} : vector<2x128xf32> to vector<2x32xf32>
      %224 = vector.extract_strided_slice %220 {offsets = [0, 64], sizes = [2, 32], strides = [1, 1]} : vector<2x128xf32> to vector<2x32xf32>
      %225 = arith.mulf %223, %224 : vector<2x32xf32>
      %226 = arith.addf %222, %225 : vector<2x32xf32>
      %227 = vector.extract_strided_slice %219 {offsets = [0, 96], sizes = [2, 32], strides = [1, 1]} : vector<2x128xf32> to vector<2x32xf32>
      %228 = math.tanh %226 : vector<2x32xf32>
      %229 = arith.mulf %227, %228 : vector<2x32xf32>
      %230 = arith.truncf %229 : vector<2x32xf32> to vector<2x32xbf16>
      %231 = arith.truncf %207 : vector<2x32xf32> to vector<2x32xbf16>
      %232 = tpu.concatenate %230, %231 in 1 : vector<2x32xbf16>, vector<2x32xbf16> -> vector<2x64xbf16>
      %cst_61 = arith.constant dense<0.000000e+00> : vector<2x9xf32>
      %233 = tpu.matmul %232, %27, %cst_61 {dimension_numbers = #tpu.dot_dimension_numbers<[1], [0], [0], [1], [0, 0, 1, 1], [], []>} : vector<2x64xbf16>, vector<64x9xbf16>, vector<2x9xf32> -> vector<2x9xf32>
      %234 = vector.broadcast %28 : vector<1x9xf32> to vector<2x9xf32>
      %235 = arith.addf %233, %234 : vector<2x9xf32>
      %236 = tpu.concatenate %235, %202 in 1 : vector<2x9xf32>, vector<2x8xf32> -> vector<2x17xf32>
      %237 = arith.index_cast %arg18 : i32 to index
      %c0_62 = arith.constant 0 : index
      %c0_63 = arith.constant 0 : index
      %238 = vector.load %arg16[%237, %c0_62, %c0_63] : memref<6x2x17xf32, #tpu.memory_space<vmem>>, vector<1x2x17xf32>
      %239 = vector.shape_cast %238 : vector<1x2x17xf32> to vector<2x17xf32>
      %240 = vector.shape_cast %236 : vector<2x17xf32> to vector<1x2x17xf32>
      tpu.vector_store %arg16[%237, %c0_62, %c0_63], %240 {strides = array<i32>} : memref<6x2x17xf32, #tpu.memory_space<vmem>>, vector<1x2x17xf32>,
      scf.yield %62, %59, %229, %226, %207, %202, %203 : vector<2x32xf32>, vector<2x32xf32>, vector<2x32xf32>, vector<2x32xf32>, vector<2x32xf32>, vector<2x8xf32>, vector<2x8xf32>
    }
    %c6_i32_46 = arith.constant 6 : i32
    return
  }
  func.func @transform_0(%arg0: i32) -> (i32, i32, i32) {
    %c0_i32 = arith.constant 0 : i32
    %c0_i32_0 = arith.constant 0 : i32
    %c0_i32_1 = arith.constant 0 : i32
    %c0_i32_2 = arith.constant 0 : i32
    return %c0_i32, %c0_i32_0, %c0_i32_1 : i32, i32, i32
  }
  func.func @transform_1(%arg0: i32) -> (i32, i32, i32) {
    %c0_i32 = arith.constant 0 : i32
    %c0_i32_0 = arith.constant 0 : i32
    %c0_i32_1 = arith.constant 0 : i32
    %c0_i32_2 = arith.constant 0 : i32
    return %c0_i32, %c0_i32_0, %c0_i32_1 : i32, i32, i32
  }
  func.func @transform_2(%arg0: i32) -> (i32, i32) {
    %c0_i32 = arith.constant 0 : i32
    %c0_i32_0 = arith.constant 0 : i32
    %c0_i32_1 = arith.constant 0 : i32
    return %c0_i32, %c0_i32_0 : i32, i32
  }
  func.func @transform_3(%arg0: i32) -> (i32, i32) {
    %c0_i32 = arith.constant 0 : i32
    %c0_i32_0 = arith.constant 0 : i32
    %c0_i32_1 = arith.constant 0 : i32
    return %c0_i32, %c0_i32_0 : i32, i32
  }
  func.func @transform_4(%arg0: i32) -> (i32, i32) {
    %c0_i32 = arith.constant 0 : i32
    %c0_i32_0 = arith.constant 0 : i32
    %c0_i32_1 = arith.constant 0 : i32
    return %c0_i32, %c0_i32_0 : i32, i32
  }
  func.func @transform_5(%arg0: i32) -> (i32, i32) {
    %c0_i32 = arith.constant 0 : i32
    %c0_i32_0 = arith.constant 0 : i32
    %c0_i32_1 = arith.constant 0 : i32
    return %c0_i32, %c0_i32_0 : i32, i32
  }
  func.func @transform_6(%arg0: i32) -> (i32, i32) {
    %c0_i32 = arith.constant 0 : i32
    %c0_i32_0 = arith.constant 0 : i32
    %c0_i32_1 = arith.constant 0 : i32
    return %c0_i32, %c0_i32_0 : i32, i32
  }
  func.func @transform_7(%arg0: i32) -> (i32, i32) {
    %c0_i32 = arith.constant 0 : i32
    %c0_i32_0 = arith.constant 0 : i32
    %c0_i32_1 = arith.constant 0 : i32
    return %c0_i32, %c0_i32_0 : i32, i32
  }
  func.func @transform_8(%arg0: i32) -> (i32, i32) {
    %c0_i32 = arith.constant 0 : i32
    %c0_i32_0 = arith.constant 0 : i32
    %c0_i32_1 = arith.constant 0 : i32
    return %c0_i32, %c0_i32_0 : i32, i32
  }
  func.func @transform_9(%arg0: i32) -> (i32, i32) {
    %c0_i32 = arith.constant 0 : i32
    %c0_i32_0 = arith.constant 0 : i32
    %c0_i32_1 = arith.constant 0 : i32
    return %c0_i32, %c0_i32_0 : i32, i32
  }
  func.func @transform_10(%arg0: i32) -> (i32, i32) {
    %c0_i32 = arith.constant 0 : i32
    %c0_i32_0 = arith.constant 0 : i32
    %c0_i32_1 = arith.constant 0 : i32
    return %c0_i32, %c0_i32_0 : i32, i32
  }
  func.func @transform_11(%arg0: i32) -> (i32, i32) {
    %c0_i32 = arith.constant 0 : i32
    %c0_i32_0 = arith.constant 0 : i32
    %c0_i32_1 = arith.constant 0 : i32
    return %c0_i32, %c0_i32_0 : i32, i32
  }
  func.func @transform_12(%arg0: i32) -> (i32, i32) {
    %c0_i32 = arith.constant 0 : i32
    %c0_i32_0 = arith.constant 0 : i32
    %c0_i32_1 = arith.constant 0 : i32
    return %c0_i32, %c0_i32_0 : i32, i32
  }
  func.func @transform_13(%arg0: i32) -> (i32, i32) {
    %c0_i32 = arith.constant 0 : i32
    %c0_i32_0 = arith.constant 0 : i32
    %c0_i32_1 = arith.constant 0 : i32
    return %c0_i32, %c0_i32_0 : i32, i32
  }
  func.func @transform_14(%arg0: i32) -> (i32, i32) {
    %c0_i32 = arith.constant 0 : i32
    %c0_i32_0 = arith.constant 0 : i32
    %c0_i32_1 = arith.constant 0 : i32
    return %c0_i32, %c0_i32_0 : i32, i32
  }
  func.func @transform_15(%arg0: i32) -> (i32, i32, i32) {
    %c0_i32 = arith.constant 0 : i32
    %c0_i32_0 = arith.constant 0 : i32
    %c0_i32_1 = arith.constant 0 : i32
    %c0_i32_2 = arith.constant 0 : i32
    return %c0_i32, %c0_i32_0, %c0_i32_1 : i32, i32, i32
  }
}

module attributes {stable_mosaic.version = 11 : i64} {
  func.func @_postnet_kernel(%arg0: i32, %arg1: memref<2x6x8xf32, #tpu.memory_space<vmem>>, %arg2: memref<2x6xf32, #tpu.memory_space<vmem>>, %arg3: memref<2x6xf32, #tpu.memory_space<vmem>>, %arg4: memref<5x80x16xbf16, #tpu.memory_space<vmem>>, %arg5: memref<5x1x16xf32, #tpu.memory_space<vmem>>, %arg6: memref<2x6x8xf32, #tpu.memory_space<vmem>>, %arg7: memref<2x6x8xf32, #tpu.memory_space<vmem>>, %arg8: memref<2x6xf32, #tpu.memory_space<vmem>>, %arg9: memref<2x10x16xbf16, #tpu.memory_space<vmem>>) attributes {dimension_semantics = [#tpu.dimension_semantics<arbitrary>], iteration_bounds = array<i64: 1>, scalar_prefetch = 0 : i64, scratch_operands = 1 : i64, tpu.core_type = #tpu.core_type<tc>, window_params = [{pipeline_mode = #tpu.pipeline_mode<synchronous>, transform_indices = @transform_0, window_bounds = array<i64: 2, 6, 8>}, {pipeline_mode = #tpu.pipeline_mode<synchronous>, transform_indices = @transform_1, window_bounds = array<i64: 2, 6>}, {pipeline_mode = #tpu.pipeline_mode<synchronous>, transform_indices = @transform_2, window_bounds = array<i64: 2, 6>}, {pipeline_mode = #tpu.pipeline_mode<synchronous>, transform_indices = @transform_3, window_bounds = array<i64: 5, 80, 16>}, {pipeline_mode = #tpu.pipeline_mode<synchronous>, transform_indices = @transform_4, window_bounds = array<i64: 5, 1, 16>}, {pipeline_mode = #tpu.pipeline_mode<synchronous>, transform_indices = @transform_5, window_bounds = array<i64: 2, 6, 8>}, {pipeline_mode = #tpu.pipeline_mode<synchronous>, transform_indices = @transform_6, window_bounds = array<i64: 2, 6, 8>}, {pipeline_mode = #tpu.pipeline_mode<synchronous>, transform_indices = @transform_7, window_bounds = array<i64: 2, 6>}]} {
    %cst = arith.constant 0.000000e+00 : bf16
    %0 = vector.broadcast %cst : bf16 to vector<2x10x16xbf16>
    %c0 = arith.constant 0 : index
    %c0_0 = arith.constant 0 : index
    %c0_1 = arith.constant 0 : index
    %1 = vector.load %arg9[%c0, %c0_0, %c0_1] : memref<2x10x16xbf16, #tpu.memory_space<vmem>>, vector<2x10x16xbf16>
    tpu.vector_store %arg9[%c0, %c0_0, %c0_1], %0 {strides = array<i32>} : memref<2x10x16xbf16, #tpu.memory_space<vmem>>, vector<2x10x16xbf16>,
    %c0_2 = arith.constant 0 : index
    %c0_3 = arith.constant 0 : index
    %c0_4 = arith.constant 0 : index
    %2 = vector.load %arg1[%c0_2, %c0_3, %c0_4] : memref<2x6x8xf32, #tpu.memory_space<vmem>>, vector<2x6x8xf32>
    %3 = arith.truncf %2 : vector<2x6x8xf32> to vector<2x6x8xbf16>
    %c0_5 = arith.constant 0 : index
    %c2 = arith.constant 2 : index
    %c0_6 = arith.constant 0 : index
    %4 = vector.load %arg9[%c0_5, %c2, %c0_6] : memref<2x10x16xbf16, #tpu.memory_space<vmem>>, vector<2x6x8xbf16>
    tpu.vector_store %arg9[%c0_5, %c2, %c0_6], %3 {strides = array<i32>} : memref<2x10x16xbf16, #tpu.memory_space<vmem>>, vector<2x6x8xbf16>,
    %c0_7 = arith.constant 0 : index
    %c0_8 = arith.constant 0 : index
    %c0_9 = arith.constant 0 : index
    %5 = vector.load %arg9[%c0_7, %c0_8, %c0_9] : memref<2x10x16xbf16, #tpu.memory_space<vmem>>, vector<2x6x16xbf16>
    %c0_10 = arith.constant 0 : index
    %c1 = arith.constant 1 : index
    %c0_11 = arith.constant 0 : index
    %6 = vector.load %arg9[%c0_10, %c1, %c0_11] : memref<2x10x16xbf16, #tpu.memory_space<vmem>>, vector<2x6x16xbf16>
    %c0_12 = arith.constant 0 : index
    %c2_13 = arith.constant 2 : index
    %c0_14 = arith.constant 0 : index
    %7 = vector.load %arg9[%c0_12, %c2_13, %c0_14] : memref<2x10x16xbf16, #tpu.memory_space<vmem>>, vector<2x6x16xbf16>
    %c0_15 = arith.constant 0 : index
    %c3 = arith.constant 3 : index
    %c0_16 = arith.constant 0 : index
    %8 = vector.load %arg9[%c0_15, %c3, %c0_16] : memref<2x10x16xbf16, #tpu.memory_space<vmem>>, vector<2x6x16xbf16>
    %c0_17 = arith.constant 0 : index
    %c4 = arith.constant 4 : index
    %c0_18 = arith.constant 0 : index
    %9 = vector.load %arg9[%c0_17, %c4, %c0_18] : memref<2x10x16xbf16, #tpu.memory_space<vmem>>, vector<2x6x16xbf16>
    %10 = tpu.concatenate %5, %6, %7, %8, %9 in 2 : vector<2x6x16xbf16>, vector<2x6x16xbf16>, vector<2x6x16xbf16>, vector<2x6x16xbf16>, vector<2x6x16xbf16> -> vector<2x6x80xbf16>
    %11 = vector.shape_cast %10 : vector<2x6x80xbf16> to vector<12x80xbf16>
    %c0_19 = arith.constant 0 : index
    %c0_20 = arith.constant 0 : index
    %c0_21 = arith.constant 0 : index
    %12 = vector.load %arg4[%c0_19, %c0_20, %c0_21] : memref<5x80x16xbf16, #tpu.memory_space<vmem>>, vector<1x80x16xbf16>
    %13 = vector.shape_cast %12 : vector<1x80x16xbf16> to vector<80x16xbf16>
    %cst_22 = arith.constant dense<0.000000e+00> : vector<12x16xf32>
    %14 = tpu.matmul %11, %13, %cst_22 {dimension_numbers = #tpu.dot_dimension_numbers<[1], [0], [0], [1], [0, 0, 1, 1], [], []>} : vector<12x80xbf16>, vector<80x16xbf16>, vector<12x16xf32> -> vector<12x16xf32>
    %c0_23 = arith.constant 0 : index
    %c0_24 = arith.constant 0 : index
    %c0_25 = arith.constant 0 : index
    %15 = vector.load %arg5[%c0_23, %c0_24, %c0_25] : memref<5x1x16xf32, #tpu.memory_space<vmem>>, vector<1x1x16xf32>
    %16 = vector.shape_cast %15 : vector<1x1x16xf32> to vector<1x16xf32>
    %17 = vector.broadcast %16 : vector<1x16xf32> to vector<12x16xf32>
    %18 = arith.addf %14, %17 : vector<12x16xf32>
    %19 = math.tanh %18 : vector<12x16xf32>
    %20 = vector.shape_cast %19 : vector<12x16xf32> to vector<2x6x16xf32>
    %21 = arith.truncf %20 : vector<2x6x16xf32> to vector<2x6x16xbf16>
    %c0_26 = arith.constant 0 : index
    %c2_27 = arith.constant 2 : index
    %c0_28 = arith.constant 0 : index
    %22 = vector.load %arg9[%c0_26, %c2_27, %c0_28] : memref<2x10x16xbf16, #tpu.memory_space<vmem>>, vector<2x6x16xbf16>
    tpu.vector_store %arg9[%c0_26, %c2_27, %c0_28], %21 {strides = array<i32>} : memref<2x10x16xbf16, #tpu.memory_space<vmem>>, vector<2x6x16xbf16>,
    %c0_29 = arith.constant 0 : index
    %c0_30 = arith.constant 0 : index
    %c0_31 = arith.constant 0 : index
    %23 = vector.load %arg9[%c0_29, %c0_30, %c0_31] : memref<2x10x16xbf16, #tpu.memory_space<vmem>>, vector<2x6x16xbf16>
    %c0_32 = arith.constant 0 : index
    %c1_33 = arith.constant 1 : index
    %c0_34 = arith.constant 0 : index
    %24 = vector.load %arg9[%c0_32, %c1_33, %c0_34] : memref<2x10x16xbf16, #tpu.memory_space<vmem>>, vector<2x6x16xbf16>
    %c0_35 = arith.constant 0 : index
    %c2_36 = arith.constant 2 : index
    %c0_37 = arith.constant 0 : index
    %25 = vector.load %arg9[%c0_35, %c2_36, %c0_37] : memref<2x10x16xbf16, #tpu.memory_space<vmem>>, vector<2x6x16xbf16>
    %c0_38 = arith.constant 0 : index
    %c3_39 = arith.constant 3 : index
    %c0_40 = arith.constant 0 : index
    %26 = vector.load %arg9[%c0_38, %c3_39, %c0_40] : memref<2x10x16xbf16, #tpu.memory_space<vmem>>, vector<2x6x16xbf16>
    %c0_41 = arith.constant 0 : index
    %c4_42 = arith.constant 4 : index
    %c0_43 = arith.constant 0 : index
    %27 = vector.load %arg9[%c0_41, %c4_42, %c0_43] : memref<2x10x16xbf16, #tpu.memory_space<vmem>>, vector<2x6x16xbf16>
    %28 = tpu.concatenate %23, %24, %25, %26, %27 in 2 : vector<2x6x16xbf16>, vector<2x6x16xbf16>, vector<2x6x16xbf16>, vector<2x6x16xbf16>, vector<2x6x16xbf16> -> vector<2x6x80xbf16>
    %29 = vector.shape_cast %28 : vector<2x6x80xbf16> to vector<12x80xbf16>
    %c1_44 = arith.constant 1 : index
    %c0_45 = arith.constant 0 : index
    %c0_46 = arith.constant 0 : index
    %30 = vector.load %arg4[%c1_44, %c0_45, %c0_46] : memref<5x80x16xbf16, #tpu.memory_space<vmem>>, vector<1x80x16xbf16>
    %31 = vector.shape_cast %30 : vector<1x80x16xbf16> to vector<80x16xbf16>
    %cst_47 = arith.constant dense<0.000000e+00> : vector<12x16xf32>
    %32 = tpu.matmul %29, %31, %cst_47 {dimension_numbers = #tpu.dot_dimension_numbers<[1], [0], [0], [1], [0, 0, 1, 1], [], []>} : vector<12x80xbf16>, vector<80x16xbf16>, vector<12x16xf32> -> vector<12x16xf32>
    %c1_48 = arith.constant 1 : index
    %c0_49 = arith.constant 0 : index
    %c0_50 = arith.constant 0 : index
    %33 = vector.load %arg5[%c1_48, %c0_49, %c0_50] : memref<5x1x16xf32, #tpu.memory_space<vmem>>, vector<1x1x16xf32>
    %34 = vector.shape_cast %33 : vector<1x1x16xf32> to vector<1x16xf32>
    %35 = vector.broadcast %34 : vector<1x16xf32> to vector<12x16xf32>
    %36 = arith.addf %32, %35 : vector<12x16xf32>
    %37 = math.tanh %36 : vector<12x16xf32>
    %38 = vector.shape_cast %37 : vector<12x16xf32> to vector<2x6x16xf32>
    %39 = arith.truncf %38 : vector<2x6x16xf32> to vector<2x6x16xbf16>
    %c0_51 = arith.constant 0 : index
    %c2_52 = arith.constant 2 : index
    %c0_53 = arith.constant 0 : index
    %40 = vector.load %arg9[%c0_51, %c2_52, %c0_53] : memref<2x10x16xbf16, #tpu.memory_space<vmem>>, vector<2x6x16xbf16>
    tpu.vector_store %arg9[%c0_51, %c2_52, %c0_53], %39 {strides = array<i32>} : memref<2x10x16xbf16, #tpu.memory_space<vmem>>, vector<2x6x16xbf16>,
    %c0_54 = arith.constant 0 : index
    %c0_55 = arith.constant 0 : index
    %c0_56 = arith.constant 0 : index
    %41 = vector.load %arg9[%c0_54, %c0_55, %c0_56] : memref<2x10x16xbf16, #tpu.memory_space<vmem>>, vector<2x6x16xbf16>
    %c0_57 = arith.constant 0 : index
    %c1_58 = arith.constant 1 : index
    %c0_59 = arith.constant 0 : index
    %42 = vector.load %arg9[%c0_57, %c1_58, %c0_59] : memref<2x10x16xbf16, #tpu.memory_space<vmem>>, vector<2x6x16xbf16>
    %c0_60 = arith.constant 0 : index
    %c2_61 = arith.constant 2 : index
    %c0_62 = arith.constant 0 : index
    %43 = vector.load %arg9[%c0_60, %c2_61, %c0_62] : memref<2x10x16xbf16, #tpu.memory_space<vmem>>, vector<2x6x16xbf16>
    %c0_63 = arith.constant 0 : index
    %c3_64 = arith.constant 3 : index
    %c0_65 = arith.constant 0 : index
    %44 = vector.load %arg9[%c0_63, %c3_64, %c0_65] : memref<2x10x16xbf16, #tpu.memory_space<vmem>>, vector<2x6x16xbf16>
    %c0_66 = arith.constant 0 : index
    %c4_67 = arith.constant 4 : index
    %c0_68 = arith.constant 0 : index
    %45 = vector.load %arg9[%c0_66, %c4_67, %c0_68] : memref<2x10x16xbf16, #tpu.memory_space<vmem>>, vector<2x6x16xbf16>
    %46 = tpu.concatenate %41, %42, %43, %44, %45 in 2 : vector<2x6x16xbf16>, vector<2x6x16xbf16>, vector<2x6x16xbf16>, vector<2x6x16xbf16>, vector<2x6x16xbf16> -> vector<2x6x80xbf16>
    %47 = vector.shape_cast %46 : vector<2x6x80xbf16> to vector<12x80xbf16>
    %c2_69 = arith.constant 2 : index
    %c0_70 = arith.constant 0 : index
    %c0_71 = arith.constant 0 : index
    %48 = vector.load %arg4[%c2_69, %c0_70, %c0_71] : memref<5x80x16xbf16, #tpu.memory_space<vmem>>, vector<1x80x16xbf16>
    %49 = vector.shape_cast %48 : vector<1x80x16xbf16> to vector<80x16xbf16>
    %cst_72 = arith.constant dense<0.000000e+00> : vector<12x16xf32>
    %50 = tpu.matmul %47, %49, %cst_72 {dimension_numbers = #tpu.dot_dimension_numbers<[1], [0], [0], [1], [0, 0, 1, 1], [], []>} : vector<12x80xbf16>, vector<80x16xbf16>, vector<12x16xf32> -> vector<12x16xf32>
    %c2_73 = arith.constant 2 : index
    %c0_74 = arith.constant 0 : index
    %c0_75 = arith.constant 0 : index
    %51 = vector.load %arg5[%c2_73, %c0_74, %c0_75] : memref<5x1x16xf32, #tpu.memory_space<vmem>>, vector<1x1x16xf32>
    %52 = vector.shape_cast %51 : vector<1x1x16xf32> to vector<1x16xf32>
    %53 = vector.broadcast %52 : vector<1x16xf32> to vector<12x16xf32>
    %54 = arith.addf %50, %53 : vector<12x16xf32>
    %55 = math.tanh %54 : vector<12x16xf32>
    %56 = vector.shape_cast %55 : vector<12x16xf32> to vector<2x6x16xf32>
    %57 = arith.truncf %56 : vector<2x6x16xf32> to vector<2x6x16xbf16>
    %c0_76 = arith.constant 0 : index
    %c2_77 = arith.constant 2 : index
    %c0_78 = arith.constant 0 : index
    %58 = vector.load %arg9[%c0_76, %c2_77, %c0_78] : memref<2x10x16xbf16, #tpu.memory_space<vmem>>, vector<2x6x16xbf16>
    tpu.vector_store %arg9[%c0_76, %c2_77, %c0_78], %57 {strides = array<i32>} : memref<2x10x16xbf16, #tpu.memory_space<vmem>>, vector<2x6x16xbf16>,
    %c0_79 = arith.constant 0 : index
    %c0_80 = arith.constant 0 : index
    %c0_81 = arith.constant 0 : index
    %59 = vector.load %arg9[%c0_79, %c0_80, %c0_81] : memref<2x10x16xbf16, #tpu.memory_space<vmem>>, vector<2x6x16xbf16>
    %c0_82 = arith.constant 0 : index
    %c1_83 = arith.constant 1 : index
    %c0_84 = arith.constant 0 : index
    %60 = vector.load %arg9[%c0_82, %c1_83, %c0_84] : memref<2x10x16xbf16, #tpu.memory_space<vmem>>, vector<2x6x16xbf16>
    %c0_85 = arith.constant 0 : index
    %c2_86 = arith.constant 2 : index
    %c0_87 = arith.constant 0 : index
    %61 = vector.load %arg9[%c0_85, %c2_86, %c0_87] : memref<2x10x16xbf16, #tpu.memory_space<vmem>>, vector<2x6x16xbf16>
    %c0_88 = arith.constant 0 : index
    %c3_89 = arith.constant 3 : index
    %c0_90 = arith.constant 0 : index
    %62 = vector.load %arg9[%c0_88, %c3_89, %c0_90] : memref<2x10x16xbf16, #tpu.memory_space<vmem>>, vector<2x6x16xbf16>
    %c0_91 = arith.constant 0 : index
    %c4_92 = arith.constant 4 : index
    %c0_93 = arith.constant 0 : index
    %63 = vector.load %arg9[%c0_91, %c4_92, %c0_93] : memref<2x10x16xbf16, #tpu.memory_space<vmem>>, vector<2x6x16xbf16>
    %64 = tpu.concatenate %59, %60, %61, %62, %63 in 2 : vector<2x6x16xbf16>, vector<2x6x16xbf16>, vector<2x6x16xbf16>, vector<2x6x16xbf16>, vector<2x6x16xbf16> -> vector<2x6x80xbf16>
    %65 = vector.shape_cast %64 : vector<2x6x80xbf16> to vector<12x80xbf16>
    %c3_94 = arith.constant 3 : index
    %c0_95 = arith.constant 0 : index
    %c0_96 = arith.constant 0 : index
    %66 = vector.load %arg4[%c3_94, %c0_95, %c0_96] : memref<5x80x16xbf16, #tpu.memory_space<vmem>>, vector<1x80x16xbf16>
    %67 = vector.shape_cast %66 : vector<1x80x16xbf16> to vector<80x16xbf16>
    %cst_97 = arith.constant dense<0.000000e+00> : vector<12x16xf32>
    %68 = tpu.matmul %65, %67, %cst_97 {dimension_numbers = #tpu.dot_dimension_numbers<[1], [0], [0], [1], [0, 0, 1, 1], [], []>} : vector<12x80xbf16>, vector<80x16xbf16>, vector<12x16xf32> -> vector<12x16xf32>
    %c3_98 = arith.constant 3 : index
    %c0_99 = arith.constant 0 : index
    %c0_100 = arith.constant 0 : index
    %69 = vector.load %arg5[%c3_98, %c0_99, %c0_100] : memref<5x1x16xf32, #tpu.memory_space<vmem>>, vector<1x1x16xf32>
    %70 = vector.shape_cast %69 : vector<1x1x16xf32> to vector<1x16xf32>
    %71 = vector.broadcast %70 : vector<1x16xf32> to vector<12x16xf32>
    %72 = arith.addf %68, %71 : vector<12x16xf32>
    %73 = math.tanh %72 : vector<12x16xf32>
    %74 = vector.shape_cast %73 : vector<12x16xf32> to vector<2x6x16xf32>
    %75 = arith.truncf %74 : vector<2x6x16xf32> to vector<2x6x16xbf16>
    %c0_101 = arith.constant 0 : index
    %c2_102 = arith.constant 2 : index
    %c0_103 = arith.constant 0 : index
    %76 = vector.load %arg9[%c0_101, %c2_102, %c0_103] : memref<2x10x16xbf16, #tpu.memory_space<vmem>>, vector<2x6x16xbf16>
    tpu.vector_store %arg9[%c0_101, %c2_102, %c0_103], %75 {strides = array<i32>} : memref<2x10x16xbf16, #tpu.memory_space<vmem>>, vector<2x6x16xbf16>,
    %c0_104 = arith.constant 0 : index
    %c0_105 = arith.constant 0 : index
    %c0_106 = arith.constant 0 : index
    %77 = vector.load %arg9[%c0_104, %c0_105, %c0_106] : memref<2x10x16xbf16, #tpu.memory_space<vmem>>, vector<2x6x16xbf16>
    %c0_107 = arith.constant 0 : index
    %c1_108 = arith.constant 1 : index
    %c0_109 = arith.constant 0 : index
    %78 = vector.load %arg9[%c0_107, %c1_108, %c0_109] : memref<2x10x16xbf16, #tpu.memory_space<vmem>>, vector<2x6x16xbf16>
    %c0_110 = arith.constant 0 : index
    %c2_111 = arith.constant 2 : index
    %c0_112 = arith.constant 0 : index
    %79 = vector.load %arg9[%c0_110, %c2_111, %c0_112] : memref<2x10x16xbf16, #tpu.memory_space<vmem>>, vector<2x6x16xbf16>
    %c0_113 = arith.constant 0 : index
    %c3_114 = arith.constant 3 : index
    %c0_115 = arith.constant 0 : index
    %80 = vector.load %arg9[%c0_113, %c3_114, %c0_115] : memref<2x10x16xbf16, #tpu.memory_space<vmem>>, vector<2x6x16xbf16>
    %c0_116 = arith.constant 0 : index
    %c4_117 = arith.constant 4 : index
    %c0_118 = arith.constant 0 : index
    %81 = vector.load %arg9[%c0_116, %c4_117, %c0_118] : memref<2x10x16xbf16, #tpu.memory_space<vmem>>, vector<2x6x16xbf16>
    %82 = tpu.concatenate %77, %78, %79, %80, %81 in 2 : vector<2x6x16xbf16>, vector<2x6x16xbf16>, vector<2x6x16xbf16>, vector<2x6x16xbf16>, vector<2x6x16xbf16> -> vector<2x6x80xbf16>
    %83 = vector.shape_cast %82 : vector<2x6x80xbf16> to vector<12x80xbf16>
    %c4_119 = arith.constant 4 : index
    %c0_120 = arith.constant 0 : index
    %c0_121 = arith.constant 0 : index
    %84 = vector.load %arg4[%c4_119, %c0_120, %c0_121] : memref<5x80x16xbf16, #tpu.memory_space<vmem>>, vector<1x80x16xbf16>
    %85 = vector.shape_cast %84 : vector<1x80x16xbf16> to vector<80x16xbf16>
    %cst_122 = arith.constant dense<0.000000e+00> : vector<12x16xf32>
    %86 = tpu.matmul %83, %85, %cst_122 {dimension_numbers = #tpu.dot_dimension_numbers<[1], [0], [0], [1], [0, 0, 1, 1], [], []>} : vector<12x80xbf16>, vector<80x16xbf16>, vector<12x16xf32> -> vector<12x16xf32>
    %c4_123 = arith.constant 4 : index
    %c0_124 = arith.constant 0 : index
    %c0_125 = arith.constant 0 : index
    %87 = vector.load %arg5[%c4_123, %c0_124, %c0_125] : memref<5x1x16xf32, #tpu.memory_space<vmem>>, vector<1x1x16xf32>
    %88 = vector.shape_cast %87 : vector<1x1x16xf32> to vector<1x16xf32>
    %89 = vector.broadcast %88 : vector<1x16xf32> to vector<12x16xf32>
    %90 = arith.addf %86, %89 : vector<12x16xf32>
    %91 = vector.shape_cast %90 : vector<12x16xf32> to vector<2x6x16xf32>
    %92 = vector.extract_strided_slice %91 {offsets = [0, 0, 0], sizes = [2, 6, 8], strides = [1, 1, 1]} : vector<2x6x16xf32> to vector<2x6x8xf32>
    %93 = arith.addf %2, %92 : vector<2x6x8xf32>
    %c0_126 = arith.constant 0 : index
    %c0_127 = arith.constant 0 : index
    %94 = vector.load %arg3[%c0_126, %c0_127] : memref<2x6xf32, #tpu.memory_space<vmem>>, vector<2x6xf32>
    %95 = vector.shape_cast %94 : vector<2x6xf32> to vector<2x6x1xf32>
    %cst_128 = arith.constant 5.000000e-01 : f32
    %96 = vector.broadcast %cst_128 : f32 to vector<2x6x1xf32>
    %97 = arith.cmpf ogt, %95, %96 : vector<2x6x1xf32>
    %cst_129 = arith.constant 0.000000e+00 : f32
    %98 = vector.shape_cast %97 : vector<2x6x1xi1> to vector<2x6x1xi1>
    %99 = vector.broadcast %98 : vector<2x6x1xi1> to vector<2x6x8xi1>
    %100 = vector.broadcast %cst_129 : f32 to vector<2x6x8xf32>
    %101 = arith.select %99, %100, %2 : vector<2x6x8xi1>, vector<2x6x8xf32>
    %c0_130 = arith.constant 0 : index
    %c0_131 = arith.constant 0 : index
    %c0_132 = arith.constant 0 : index
    %102 = vector.load %arg6[%c0_130, %c0_131, %c0_132] : memref<2x6x8xf32, #tpu.memory_space<vmem>>, vector<2x6x8xf32>
    tpu.vector_store %arg6[%c0_130, %c0_131, %c0_132], %101 {strides = array<i32>} : memref<2x6x8xf32, #tpu.memory_space<vmem>>, vector<2x6x8xf32>,
    %cst_133 = arith.constant 0.000000e+00 : f32
    %103 = vector.shape_cast %97 : vector<2x6x1xi1> to vector<2x6x1xi1>
    %104 = vector.broadcast %103 : vector<2x6x1xi1> to vector<2x6x8xi1>
    %105 = vector.broadcast %cst_133 : f32 to vector<2x6x8xf32>
    %106 = arith.select %104, %105, %93 : vector<2x6x8xi1>, vector<2x6x8xf32>
    %c0_134 = arith.constant 0 : index
    %c0_135 = arith.constant 0 : index
    %c0_136 = arith.constant 0 : index
    %107 = vector.load %arg7[%c0_134, %c0_135, %c0_136] : memref<2x6x8xf32, #tpu.memory_space<vmem>>, vector<2x6x8xf32>
    tpu.vector_store %arg7[%c0_134, %c0_135, %c0_136], %106 {strides = array<i32>} : memref<2x6x8xf32, #tpu.memory_space<vmem>>, vector<2x6x8xf32>,
    %c0_137 = arith.constant 0 : index
    %c0_138 = arith.constant 0 : index
    %108 = vector.load %arg3[%c0_137, %c0_138] : memref<2x6xf32, #tpu.memory_space<vmem>>, vector<2x6xf32>
    %cst_139 = arith.constant 5.000000e-01 : f32
    %109 = vector.broadcast %cst_139 : f32 to vector<2x6xf32>
    %110 = arith.cmpf ogt, %108, %109 : vector<2x6xf32>
    %c0_140 = arith.constant 0 : index
    %c0_141 = arith.constant 0 : index
    %111 = vector.load %arg2[%c0_140, %c0_141] : memref<2x6xf32, #tpu.memory_space<vmem>>, vector<2x6xf32>
    %cst_142 = arith.constant -1.000000e+03 : f32
    %112 = vector.broadcast %cst_142 : f32 to vector<2x6xf32>
    %113 = arith.select %110, %112, %111 : vector<2x6xi1>, vector<2x6xf32>
    %c0_143 = arith.constant 0 : index
    %c0_144 = arith.constant 0 : index
    %114 = vector.load %arg8[%c0_143, %c0_144] : memref<2x6xf32, #tpu.memory_space<vmem>>, vector<2x6xf32>
    tpu.vector_store %arg8[%c0_143, %c0_144], %113 {strides = array<i32>} : memref<2x6xf32, #tpu.memory_space<vmem>>, vector<2x6xf32>,
    return
  }
  func.func @transform_0(%arg0: i32) -> (i32, i32, i32) {
    %c0_i32 = arith.constant 0 : i32
    %c0_i32_0 = arith.constant 0 : i32
    %c0_i32_1 = arith.constant 0 : i32
    %c0_i32_2 = arith.constant 0 : i32
    return %c0_i32, %c0_i32_0, %c0_i32_1 : i32, i32, i32
  }
  func.func @transform_1(%arg0: i32) -> (i32, i32) {
    %c0_i32 = arith.constant 0 : i32
    %c0_i32_0 = arith.constant 0 : i32
    %c0_i32_1 = arith.constant 0 : i32
    return %c0_i32, %c0_i32_0 : i32, i32
  }
  func.func @transform_2(%arg0: i32) -> (i32, i32) {
    %c0_i32 = arith.constant 0 : i32
    %c0_i32_0 = arith.constant 0 : i32
    %c0_i32_1 = arith.constant 0 : i32
    return %c0_i32, %c0_i32_0 : i32, i32
  }
  func.func @transform_3(%arg0: i32) -> (i32, i32, i32) {
    %c0_i32 = arith.constant 0 : i32
    %c0_i32_0 = arith.constant 0 : i32
    %c0_i32_1 = arith.constant 0 : i32
    %c0_i32_2 = arith.constant 0 : i32
    return %c0_i32, %c0_i32_0, %c0_i32_1 : i32, i32, i32
  }
  func.func @transform_4(%arg0: i32) -> (i32, i32, i32) {
    %c0_i32 = arith.constant 0 : i32
    %c0_i32_0 = arith.constant 0 : i32
    %c0_i32_1 = arith.constant 0 : i32
    %c0_i32_2 = arith.constant 0 : i32
    return %c0_i32, %c0_i32_0, %c0_i32_1 : i32, i32, i32
  }
  func.func @transform_5(%arg0: i32) -> (i32, i32, i32) {
    %c0_i32 = arith.constant 0 : i32
    %c0_i32_0 = arith.constant 0 : i32
    %c0_i32_1 = arith.constant 0 : i32
    %c0_i32_2 = arith.constant 0 : i32
    return %c0_i32, %c0_i32_0, %c0_i32_1 : i32, i32, i32
  }
  func.func @transform_6(%arg0: i32) -> (i32, i32, i32) {
    %c0_i32 = arith.constant 0 : i32
    %c0_i32_0 = arith.constant 0 : i32
    %c0_i32_1 = arith.constant 0 : i32
    %c0_i32_2 = arith.constant 0 : i32
    return %c0_i32, %c0_i32_0, %c0_i32_1 : i32, i32, i32
  }
  func.func @transform_7(%arg0: i32) -> (i32, i32) {
    %c0_i32 = arith.constant 0 : i32
    %c0_i32_0 = arith.constant 0 : i32
    %c0_i32_1 = arith.constant 0 : i32
    return %c0_i32, %c0_i32_0 : i32, i32
  }
}

</mosaic_0001>

<llo_original>
// kernel: tacotron2_forward.4
$region0: #{tacotron2_forward.4}
  #allocation0 [shape = 'u32[]', space=smem, size = 0x4, offset = 0x4, fixed_abs, tag = 'smem constant byte address 0x4 - core index']
  #allocation1 [shape = 'u32[72,128]{1,0:T(1,128)}', space=vmem, size = 0x9000, scoped, tag = 'internal scratch']
  #allocation2 [shape = 'bf16[6,2,16]{2,1,0:T(2,128)(2,1)}', space=vmem, size = 0xc00, scoped, tag = 'scratch operand']
  %s0 = inlined_call_operand.vmem [shape: bf16[6,2,8], index: 0, kind: input, shape index: {}]
  %s1 = inlined_call_operand.vmem [shape: bf16[2,8,32], index: 1, kind: input, shape index: {}]
  %s2 = inlined_call_operand.vmem [shape: f32[2,8], index: 2, kind: input, shape index: {}]
  %s3 = inlined_call_operand.vmem [shape: bf16[8,16], index: 3, kind: input, shape index: {}]
  %s4 = inlined_call_operand.vmem [shape: bf16[16,16], index: 4, kind: input, shape index: {}]
  %s5 = inlined_call_operand.vmem [shape: bf16[32,16], index: 5, kind: input, shape index: {}]
  %s6 = inlined_call_operand.vmem [shape: bf16[80,128], index: 6, kind: input, shape index: {}]
  %s7 = inlined_call_operand.vmem [shape: f32[1,128], index: 7, kind: input, shape index: {}]
  %s8 = inlined_call_operand.vmem [shape: bf16[32,16], index: 8, kind: input, shape index: {}]
  %s9 = inlined_call_operand.vmem [shape: f32[14,16], index: 9, kind: input, shape index: {}]
  %s10 = inlined_call_operand.vmem [shape: f32[1,16], index: 10, kind: input, shape index: {}]
  %s11 = inlined_call_operand.vmem [shape: bf16[96,128], index: 11, kind: input, shape index: {}]
  %s12 = inlined_call_operand.vmem [shape: f32[1,128], index: 12, kind: input, shape index: {}]
  %s13 = inlined_call_operand.vmem [shape: bf16[64,9], index: 13, kind: input, shape index: {}]
  %s14 = inlined_call_operand.vmem [shape: f32[1,9], index: 14, kind: input, shape index: {}]
  %s15 = inlined_call_operand.vmem [shape: f32[6,2,17], index: 15, kind: output, shape index: {}]
  %s16 = sld [smem:[#allocation0]]
  $region77: #{tacotron2_forward.4} parent=0
    _
  %s18 = ssub.s32 1, %s16
  %s19 = scalar_select 0, %s18, %s16
  // Predicated region
  $region2: #{tacotron2_forward.4} parent=0 // pred_check
    _
  $region3: #{tacotron2_forward.4} parent=0 // pred_check_branch
    %21 = sbr.rel (0) target = $region5
  $region4: #{tacotron2_forward.4} parent=0 // pred_region
    _
  $region5: #{tacotron2_forward.4} parent=0 // pred_fallthru
    _
  // Predicated region
  $region6: #{tacotron2_forward.4} parent=0 // pred_check
    _
  $region7: #{tacotron2_forward.4} parent=0 // pred_check_branch
    %23 = sbr.rel (0) target = $region9
  $region8: #{tacotron2_forward.4} parent=0 // pred_region
    _
  $region9: #{tacotron2_forward.4} parent=0 // pred_fallthru
    _
  // Predicated region
  $region10: #{tacotron2_forward.4} parent=0 // pred_check
    _
  $region11: #{tacotron2_forward.4} parent=0 // pred_check_branch
    %25 = sbr.rel (0) target = $region13
  $region12: #{tacotron2_forward.4} parent=0 // pred_region
    _
  $region13: #{tacotron2_forward.4} parent=0 // pred_fallthru
    _
  // Predicated region
  $region14: #{tacotron2_forward.4} parent=0 // pred_check
    _
  $region15: #{tacotron2_forward.4} parent=0 // pred_check_branch
    %27 = sbr.rel (0) target = $region17
  $region16: #{tacotron2_forward.4} parent=0 // pred_region
    _
  $region17: #{tacotron2_forward.4} parent=0 // pred_fallthru
    _
  // Predicated region
  $region18: #{tacotron2_forward.4} parent=0 // pred_check
    _
  $region19: #{tacotron2_forward.4} parent=0 // pred_check_branch
    %29 = sbr.rel (0) target = $region21
  $region20: #{tacotron2_forward.4} parent=0 // pred_region
    _
  $region21: #{tacotron2_forward.4} parent=0 // pred_fallthru
    _
  // Predicated region
  $region22: #{tacotron2_forward.4} parent=0 // pred_check
    _
  $region23: #{tacotron2_forward.4} parent=0 // pred_check_branch
    %31 = sbr.rel (0) target = $region25
  $region24: #{tacotron2_forward.4} parent=0 // pred_region
    _
  $region25: #{tacotron2_forward.4} parent=0 // pred_fallthru
    _
  // Predicated region
  $region26: #{tacotron2_forward.4} parent=0 // pred_check
    _
  $region27: #{tacotron2_forward.4} parent=0 // pred_check_branch
    %33 = sbr.rel (0) target = $region29
  $region28: #{tacotron2_forward.4} parent=0 // pred_region
    _
  $region29: #{tacotron2_forward.4} parent=0 // pred_fallthru
    _
  // Predicated region
  $region30: #{tacotron2_forward.4} parent=0 // pred_check
    _
  $region31: #{tacotron2_forward.4} parent=0 // pred_check_branch
    %35 = sbr.rel (0) target = $region33
  $region32: #{tacotron2_forward.4} parent=0 // pred_region
    _
  $region33: #{tacotron2_forward.4} parent=0 // pred_fallthru
    _
  // Predicated region
  $region34: #{tacotron2_forward.4} parent=0 // pred_check
    _
  $region35: #{tacotron2_forward.4} parent=0 // pred_check_branch
    %37 = sbr.rel (0) target = $region37
  $region36: #{tacotron2_forward.4} parent=0 // pred_region
    _
  $region37: #{tacotron2_forward.4} parent=0 // pred_fallthru
    _
  // Predicated region
  $region38: #{tacotron2_forward.4} parent=0 // pred_check
    _
  $region39: #{tacotron2_forward.4} parent=0 // pred_check_branch
    %39 = sbr.rel (0) target = $region41
  $region40: #{tacotron2_forward.4} parent=0 // pred_region
    _
  $region41: #{tacotron2_forward.4} parent=0 // pred_fallthru
    _
  // Predicated region
  $region42: #{tacotron2_forward.4} parent=0 // pred_check
    _
  $region43: #{tacotron2_forward.4} parent=0 // pred_check_branch
    %41 = sbr.rel (0) target = $region45
  $region44: #{tacotron2_forward.4} parent=0 // pred_region
    _
  $region45: #{tacotron2_forward.4} parent=0 // pred_fallthru
    _
  // Predicated region
  $region46: #{tacotron2_forward.4} parent=0 // pred_check
    _
  $region47: #{tacotron2_forward.4} parent=0 // pred_check_branch
    %43 = sbr.rel (0) target = $region49
  $region48: #{tacotron2_forward.4} parent=0 // pred_region
    _
  $region49: #{tacotron2_forward.4} parent=0 // pred_fallthru
    _
  // Predicated region
  $region50: #{tacotron2_forward.4} parent=0 // pred_check
    _
  $region51: #{tacotron2_forward.4} parent=0 // pred_check_branch
    %45 = sbr.rel (0) target = $region53
  $region52: #{tacotron2_forward.4} parent=0 // pred_region
    _
  $region53: #{tacotron2_forward.4} parent=0 // pred_fallthru
    _
  // Predicated region
  $region54: #{tacotron2_forward.4} parent=0 // pred_check
    _
  $region55: #{tacotron2_forward.4} parent=0 // pred_check_branch
    %47 = sbr.rel (0) target = $region57
  $region56: #{tacotron2_forward.4} parent=0 // pred_region
    _
  $region57: #{tacotron2_forward.4} parent=0 // pred_fallthru
    _
  // Predicated region
  $region58: #{tacotron2_forward.4} parent=0 // pred_check
    _
  $region59: #{tacotron2_forward.4} parent=0 // pred_check_branch
    %49 = sbr.rel (0) target = $region61
  $region60: #{tacotron2_forward.4} parent=0 // pred_region
    _
  $region61: #{tacotron2_forward.4} parent=0 // pred_fallthru
    _
  %v51 = vld [vmem:[%s0] sm:$0x1]
  %v52 = vld [vmem:[%s0 + $0x1] sm:$0x1]
  %v53 = vld [vmem:[%s0 + $0x2] sm:$0x1]
  %v54 = vld [vmem:[%s0 + $0x3] sm:$0x1]
  %v55 = vld [vmem:[%s0 + $0x4] sm:$0x1]
  %v56 = vld [vmem:[%s0 + $0x5] sm:$0x1]
  %v57 = vld [vmem:[%s3] sm:$0xf]
  %59 = vst [vmem:[#allocation1] ss:$9 sm:$0xff] %v51
  %s61 = scalar_lea.vmem [#allocation1], 1
  %62 = vst [vmem:[%s61] ss:$9 sm:$0xff] %v52
  %s64 = scalar_lea.vmem [#allocation1], 2
  %65 = vst [vmem:[%s64] ss:$9 sm:$0xff] %v53
  %s67 = scalar_lea.vmem [#allocation1], 3
  %68 = vst [vmem:[%s67] ss:$9 sm:$0xff] %v54
  %s70 = scalar_lea.vmem [#allocation1], 4
  %71 = vst [vmem:[%s70] ss:$9 sm:$0xff] %v55
  %s73 = scalar_lea.vmem [#allocation1], 5
  %74 = vst [vmem:[%s73] ss:$9 sm:$0xff] %v56
  %v75 = vld [vmem:[#allocation1] sm:$0xff]
  %vm76 = vcmask 64512
  %v77 = vsel %vm76, %v75, 0
  %vm79 = vcmask 1043456
  %v81 = vsel %vm79, %v57, 0
  %83 = vmatpush.bf16.msra.mxu0 0
  %84 = vmatpush.bf16.msra.mxu0 0
  %85 = vmatpush.bf16.msra.mxu0 0
  %86 = vmatpush.bf16.msra.mxu0 0
  %87 = vmatpush.bf16.msra.mxu0 0
  %88 = vmatpush.bf16.msra.mxu0 0
  %89 = vmatpush.bf16.msra.mxu0 0
  %90 = vmatpush.bf16.msra.mxu0 %v81
  %91 = vmatmul.bf16.gmra.mxu0 %v77
  %v92 = vpop.f32.mrf.mxu0
  %v93 = vadd.f32 0.0, %v92
  %v94 = vpop.f32.mrf.mxu0
  %v95 = vadd.f32 0.0, %v94
  %96 = vdwg.mxu0
  %v97 = vmax.f32 %v93, 0.0
  %v98 = vmax.f32 %v95, 0.0
  %v99 = vpack.c.bf16 %v98, %v97
  %v100 = vld [vmem:[%s4] sm:$0xf]
  %v101 = vld [vmem:[%s4 + $0x4] sm:$0xf]
  %v104 = vunpack.c.l.b16 %v100
  %v105 = vunpack.c.l.b16 %v101
  %v106 = vpack.c.b16 %v105, %v104
  %vm108 = vcmask 130048
  %v110 = vsel %vm108, %v99, 0
  %112 = vmatpush.bf16.msra.mxu0 0
  %113 = vmatpush.bf16.msra.mxu0 0
  %114 = vmatpush.bf16.msra.mxu0 0
  %115 = vmatpush.bf16.msra.mxu0 0
  %116 = vmatpush.bf16.msra.mxu0 0
  %117 = vmatpush.bf16.msra.mxu0 0
  %118 = vmatpush.bf16.msra.mxu0 0
  %119 = vmatpush.bf16.msra.mxu0 %v106
  %120 = vmatmul.bf16.gmra.mxu0 %v110
  %v121 = vpop.f32.mrf.mxu0
  %v122 = vadd.f32 0.0, %v121
  %v123 = vpop.f32.mrf.mxu0
  %v124 = vadd.f32 0.0, %v123
  %125 = vdwg.mxu0
  %v126 = vmax.f32 %v122, 0.0
  %v127 = vmax.f32 %v124, 0.0
  %v130 = vrot.slane %v126, 2
  %v131 = vrot.slane %v126, 4
  %v132 = vrot.slane %v126, 6
  %v133 = vrot.slane %v127, 2
  %v138 = vpack.c.bf16 %v126, %v126
  %v139 = vpack.c.bf16 %v130, %v130
  %v140 = vpack.c.bf16 %v131, %v131
  %v141 = vpack.c.bf16 %v132, %v132
  %v142 = vpack.c.bf16 %v127, %v127
  %v143 = vpack.c.bf16 %v133, %v133
  %vm144 = vcmask 122880
  %145 = vst.msk [vmem:[#allocation2] sm:$0x1] %vm144, %v138
  %146 = vst.msk [vmem:[#allocation2 + $0x1] sm:$0x1] %vm144, %v139
  %147 = vst.msk [vmem:[#allocation2 + $0x2] sm:$0x1] %vm144, %v140
  %148 = vst.msk [vmem:[#allocation2 + $0x3] sm:$0x1] %vm144, %v141
  %149 = vst.msk [vmem:[#allocation2 + $0x4] sm:$0x1] %vm144, %v142
  %150 = vst.msk [vmem:[#allocation2 + $0x5] sm:$0x1] %vm144, %v143
  %v151 = vld [vmem:[%s1] sm:$0xf]
  %v152 = vld [vmem:[%s1 + $0x4] sm:$0xf]
  %v153 = vld [vmem:[%s5] sm:$0xf]
  %v154 = vld [vmem:[%s5 + $0x4] sm:$0xf]
  %v155 = vld [vmem:[%s5 + $0x8] sm:$0xf]
  %v156 = vld [vmem:[%s5 + $0xc] sm:$0xf]
  %v159 = vunpack.c.l.b16 %v151
  %v160 = vunpack.c.l.b16 %v152
  %v161 = vpack.c.b16 %v160, %v159
  %v166 = vunpack.c.l.b16 %v153
  %v167 = vunpack.c.l.b16 %v154
  %v168 = vunpack.c.l.b16 %v155
  %v169 = vunpack.c.l.b16 %v156
  %v170 = vpack.c.b16 %v167, %v166
  %v171 = vpack.c.b16 %v169, %v168
  %vm174 = vcmask 261120
  %v176 = vsel %vm174, %v161, 0
  %178 = vmatpush.bf16.msra.mxu0 0
  %179 = vmatpush.bf16.msra.mxu0 0
  %180 = vmatpush.bf16.msra.mxu0 0
  %181 = vmatpush.bf16.msra.mxu0 0
  %182 = vmatpush.bf16.msra.mxu0 0
  %183 = vmatpush.bf16.msra.mxu0 0
  %184 = vmatpush.bf16.msra.mxu0 %v171
  %185 = vmatpush.bf16.msra.mxu0 %v170
  %186 = vmatmul.bf16.gmra.mxu0 %v176
  %v187 = vpop.f32.mrf.mxu0
  %v188 = vadd.f32 0.0, %v187
  %v189 = vpop.f32.mrf.mxu0
  %v190 = vadd.f32 0.0, %v189
  %191 = vdwg.mxu0
  %v192 = vld [vmem:[%s2] sm:$0x3]
  %v193 = vld [vmem:[%s9] sm:$0xff]
  %v194 = vld [vmem:[%s9 + $0x8] sm:$0x3f]
  %v195 = vld [vmem:[%s10] sm:$0x1]
  %v196 = vld [vmem:[%s6] sm:$0xf]
  %v197 = vld [vmem:[%s6 + $0x4] sm:$0xf]
  %v198 = vld [vmem:[%s6 + $0x8] sm:$0xf]
  %v199 = vld [vmem:[%s6 + $0xc] sm:$0xf]
  %v200 = vld [vmem:[%s6 + $0x10] sm:$0xf]
  %v201 = vld [vmem:[%s6 + $0x14] sm:$0xf]
  %v202 = vld [vmem:[%s6 + $0x18] sm:$0xf]
  %v203 = vld [vmem:[%s6 + $0x1c] sm:$0xf]
  %v204 = vld [vmem:[%s6 + $0x20] sm:$0xf]
  %v205 = vld [vmem:[%s6 + $0x24] sm:$0xf]
  %v206 = vld [vmem:[%s7] sm:$0x1]
  %v207 = vld [vmem:[%s8] sm:$0xf]
  %v208 = vld [vmem:[%s8 + $0x4] sm:$0xf]
  %v209 = vld [vmem:[%s8 + $0x8] sm:$0xf]
  %v210 = vld [vmem:[%s8 + $0xc] sm:$0xf]
  %v211 = vld [vmem:[%s11] sm:$0xf]
  %v212 = vld [vmem:[%s11 + $0x4] sm:$0xf]
  %v213 = vld [vmem:[%s11 + $0x8] sm:$0xf]
  %v214 = vld [vmem:[%s11 + $0xc] sm:$0xf]
  %v215 = vld [vmem:[%s11 + $0x10] sm:$0xf]
  %v216 = vld [vmem:[%s11 + $0x14] sm:$0xf]
  %v217 = vld [vmem:[%s11 + $0x18] sm:$0xf]
  %v218 = vld [vmem:[%s11 + $0x1c] sm:$0xf]
  %v219 = vld [vmem:[%s11 + $0x20] sm:$0xf]
  %v220 = vld [vmem:[%s11 + $0x24] sm:$0xf]
  %v221 = vld [vmem:[%s11 + $0x28] sm:$0xf]
  %v222 = vld [vmem:[%s11 + $0x2c] sm:$0xf]
  %v223 = vld [vmem:[%s12] sm:$0x1]
  %v224 = vld [vmem:[%s13] sm:$0xf]
  %v225 = vld [vmem:[%s13 + $0x4] sm:$0xf]
  %v226 = vld [vmem:[%s13 + $0x8] sm:$0xf]
  %v227 = vld [vmem:[%s13 + $0xc] sm:$0xf]
  %v228 = vld [vmem:[%s13 + $0x10] sm:$0xf]
  %v229 = vld [vmem:[%s13 + $0x14] sm:$0xf]
  %v230 = vld [vmem:[%s13 + $0x18] sm:$0xf]
  %v231 = vld [vmem:[%s13 + $0x1c] sm:$0xf]
  %v232 = vld [vmem:[%s14] sm:$0x1]
  loop: start=0, step=1, limit=6
  $region62: #{tacotron2_forward.4} parent=0 // loop_pre_header
    _
  $region63: #{tacotron2_forward.4} parent=0 // loop_header
    %s234 = sphi 0, %s238
    %p235 = scmp.ge.s32.totalorder %s234, 6
    %v239 = vphi 0.0, %v362
    %v240 = vphi 0.0, %v356
    %v241 = vphi 0.0, %v859
    %v242 = vphi 0.0, %v853
    %v243 = vphi 0.0, %v720
    %v244 = vphi 0.0, %v739
    %v245 = vphi 0.0, %v697
    %v246 = vphi 0.0, %v698
  $region64: #{tacotron2_forward.4} parent=0 // loop_header_branch
    %237 = sbr.rel (%p235) target = $region68
  $region65: #{tacotron2_forward.4} parent=0 // loop_body
    %s247 = scalar_lea.vmem [#allocation2], %s234
    %v248 = vld [vmem:[%s247] sm:$0x1]
    %v249 = vpack.c.bf16 %v243, %v243
    %v250 = vpack.c.bf16 %v244, %v244
    %v251 = vpack.c.bf16 %v239, %v239
    %v254 = vunpack.c.l.b16 %v249
    %v255 = vunpack.c.l.b16 %v250
    %v256 = vpack.c.b16 %v254, %v254
    %v257 = vpack.c.b16 %v255, %v255
    %v258 = vunpack.c.l.b16 %v256
    %v259 = vunpack.c.l.b16 %v257
    %v260 = vrot.slane %v259, 7
    %vm261 = vcmask 1041409
    %v262 = vsel %vm261, %v260, %v258
    %v263 = vpack.c.b16 %v262, %v262
    %264 = vrot.lane.b32.xlu0 %v263, 16
    %v265 = vpop.permute.xlu0 %264
    %v267 = vunpack.c.l.b16 %v251
    %v268 = vpack.c.b16 %v267, %v267
    %269 = vrot.lane.b32.xlu0 %v268, 80
    %v270 = vpop.permute.xlu0 %269
    %v273 = vsel %vm108, %v248, %v265
    %vm274 = vcmask 392192
    %v276 = vsel %vm274, %v273, %v270
    %v278 = vperm.slane %v206, 0
    %v290 = vunpack.c.l.b16 %v196
    %v291 = vunpack.c.l.b16 %v197
    %v292 = vunpack.c.l.b16 %v198
    %v293 = vunpack.c.l.b16 %v199
    %v294 = vunpack.c.l.b16 %v200
    %v295 = vunpack.c.l.b16 %v201
    %v296 = vunpack.c.l.b16 %v202
    %v297 = vunpack.c.l.b16 %v203
    %v298 = vunpack.c.l.b16 %v204
    %v299 = vunpack.c.l.b16 %v205
    %v300 = vpack.c.b16 %v291, %v290
    %v301 = vpack.c.b16 %v293, %v292
    %v302 = vpack.c.b16 %v295, %v294
    %v303 = vpack.c.b16 %v297, %v296
    %v304 = vpack.c.b16 %v299, %v298
    %vm310 = vcmask 654336
    %v311 = vsel %vm310, %v276, 0
    %313 = vmatpush.bf16.msra.mxu0 0
    %314 = vmatpush.bf16.msra.mxu0 0
    %315 = vmatpush.bf16.msra.mxu0 0
    %316 = vmatpush.bf16.msra.mxu0 %v304
    %317 = vmatpush.bf16.msra.mxu0 %v303
    %318 = vmatpush.bf16.msra.mxu0 %v302
    %319 = vmatpush.bf16.msra.mxu0 %v301
    %320 = vmatpush.bf16.msra.mxu0 %v300
    %321 = vmatmul.bf16.gmra.mxu0 %v311
    %v322 = vpop.f32.mrf.mxu0
    %v323 = vadd.f32 %v278, %v322
    %v324 = vpop.f32.mrf.mxu0
    %325 = vdwg.mxu0
    %v326 = vxor.u32 %v323, 2147483648
    %v327 = vmul.f32 %v326, 1.442695
    %v328 = vpow.pop %v327
    %v329 = vadd.f32 %v328, 1.0
    %v330 = vrcp.pop %v329
    %v331 = vmul.f32 %v329, %v330
    %v332 = vsub.f32 1.0, %v331
    %v333 = vmul.f32 %v330, %v332
    %v334 = vadd.f32 %v330, %v333
    %vm335 = vweird.f32 %v329
    %vm336 = vweird.f32 %v330
    %vm337 = vmor %vm335, %vm336
    %v338 = vsel %vm337, %v330, %v334
    %v339 = vand.u32 2147483647, %v329
    %vm340 = vcmp.eq.f32.partialorder %v339, 8.507059e+37
    %v341 = vand.u32 %v329, 2147483648
    %v342 = vor.u32 1.1754944e-38, %v341
    %v343 = vsel %vm340, %v342, %v338
    %v344 = vmul.f32 1.0, %v343
    %v345 = vtanh.pop %v323
    %v346 = vmul.f32 %v344, %v240
    %348 = vrot.lane.b32.xlu0 %v345, 64
    %v349 = vpop.permute.xlu0 %348
    %v351 = vmul.f32 %v344, %v349
    %353 = vrot.lane.b32.xlu0 %v351, 32
    %v354 = vpop.permute.xlu0 %353
    %v356 = vadd.f32 %v346, %v354
    %v357 = vtanh.pop %v356
    %359 = vrot.lane.b32.xlu0 %v357, 64
    %v360 = vpop.permute.xlu0 %359
    %v362 = vmul.f32 %v344, %v360
    %v363 = vpack.c.bf16 %v362, %v362
    %v365 = vunpack.c.l.b16 %v363
    %v366 = vpack.c.b16 %v365, %v365
    %367 = vrot.lane.b32.xlu0 %v366, 32
    %v368 = vpop.permute.xlu0 %367
    %v373 = vunpack.c.l.b16 %v207
    %v374 = vunpack.c.l.b16 %v208
    %v375 = vunpack.c.l.b16 %v209
    %v376 = vunpack.c.l.b16 %v210
    %v377 = vpack.c.b16 %v374, %v373
    %v378 = vpack.c.b16 %v376, %v375
    %v382 = vsel %vm174, %v368, 0
    %384 = vmatpush.bf16.msra.mxu0 0
    %385 = vmatpush.bf16.msra.mxu0 0
    %386 = vmatpush.bf16.msra.mxu0 0
    %387 = vmatpush.bf16.msra.mxu0 0
    %388 = vmatpush.bf16.msra.mxu0 0
    %389 = vmatpush.bf16.msra.mxu0 0
    %390 = vmatpush.bf16.msra.mxu0 %v378
    %391 = vmatpush.bf16.msra.mxu0 %v377
    %392 = vmatmul.bf16.gmra.mxu0 %v382
    %v393 = vpop.f32.mrf.mxu0
    %v394 = vadd.f32 0.0, %v393
    %v395 = vpop.f32.mrf.mxu0
    %396 = vdwg.mxu0
    %398 = vrot.lane.b32.xlu0 %v245, 3
    %v399 = vpop.permute.xlu0 %398
    %vm401 = vcmask 23552
    %v402 = vsel %vm401, 0.0, %v399
    %vm403 = vcmask 89088
    %v404 = vsel %vm403, %v402, 0.0
    %406 = vrot.lane.b32.xlu0 %v246, 3
    %v407 = vpop.permute.xlu0 %406
    %v409 = vsel %vm401, 0.0, %v407
    %v410 = vsel %vm403, %v409, 0.0
    %v411 = vperm.slane %v404, 0
    %v412 = vlaneseq
    %v413 = vshrl.u32 %v412, 7
    %415 = vset.pattern.permute.xlu0 %v413
    %416 = vperm.xlu0 %415, %v411
    %v417 = vpop.permute.xlu0 %416
    %v418 = vperm.slane %v404, 1
    %v419 = vlaneseq
    %v420 = vshrl.u32 %v419, 7
    %422 = vset.pattern.permute.xlu0 %v420
    %423 = vperm.xlu0 %422, %v418
    %v424 = vpop.permute.xlu0 %423
    %v425 = vperm.slane %v193, 0
    %v426 = vmul.f32 %v417, %v425
    %v427 = vmul.f32 %v424, %v425
    %v428 = vadd.f32 %v426, 0.0
    %v429 = vadd.f32 %v427, 0.0
    %v430 = vperm.slane %v410, 0
    %v431 = vlaneseq
    %v432 = vshrl.u32 %v431, 7
    %434 = vset.pattern.permute.xlu0 %v432
    %435 = vperm.xlu0 %434, %v430
    %v436 = vpop.permute.xlu0 %435
    %v437 = vperm.slane %v410, 1
    %v438 = vlaneseq
    %v439 = vshrl.u32 %v438, 7
    %441 = vset.pattern.permute.xlu0 %v439
    %442 = vperm.xlu0 %441, %v437
    %v443 = vpop.permute.xlu0 %442
    %v444 = vperm.slane %v193, 7
    %v445 = vmul.f32 %v436, %v444
    %v446 = vmul.f32 %v443, %v444
    %v447 = vadd.f32 %v428, %v445
    %v448 = vadd.f32 %v429, %v446
    %v449 = vlaneseq
    %v450 = vshrl.u32 %v449, 7
    %v451 = vadd.s32 %v450, 1
    %452 = vset.pattern.permute.xlu0 %v451
    %453 = vperm.xlu0 %452, %v411
    %v454 = vpop.permute.xlu0 %453
    %v455 = vlaneseq
    %v456 = vshrl.u32 %v455, 7
    %v457 = vadd.s32 %v456, 1
    %458 = vset.pattern.permute.xlu0 %v457
    %459 = vperm.xlu0 %458, %v418
    %v460 = vpop.permute.xlu0 %459
    %v461 = vperm.slane %v193, 1
    %v462 = vmul.f32 %v454, %v461
    %v463 = vmul.f32 %v460, %v461
    %v464 = vadd.f32 %v447, %v462
    %v465 = vadd.f32 %v448, %v463
    %v466 = vlaneseq
    %v467 = vshrl.u32 %v466, 7
    %v468 = vadd.s32 %v467, 1
    %469 = vset.pattern.permute.xlu0 %v468
    %470 = vperm.xlu0 %469, %v430
    %v471 = vpop.permute.xlu0 %470
    %v472 = vlaneseq
    %v473 = vshrl.u32 %v472, 7
    %v474 = vadd.s32 %v473, 1
    %475 = vset.pattern.permute.xlu0 %v474
    %476 = vperm.xlu0 %475, %v437
    %v477 = vpop.permute.xlu0 %476
    %v478 = vperm.slane %v194, 0
    %v479 = vmul.f32 %v471, %v478
    %v480 = vmul.f32 %v477, %v478
    %v481 = vadd.f32 %v464, %v479
    %v482 = vadd.f32 %v465, %v480
    %v483 = vlaneseq
    %v484 = vshrl.u32 %v483, 7
    %v485 = vadd.s32 %v484, 2
    %486 = vset.pattern.permute.xlu0 %v485
    %487 = vperm.xlu0 %486, %v411
    %v488 = vpop.permute.xlu0 %487
    %v489 = vlaneseq
    %v490 = vshrl.u32 %v489, 7
    %v491 = vadd.s32 %v490, 2
    %492 = vset.pattern.permute.xlu0 %v491
    %493 = vperm.xlu0 %492, %v418
    %v494 = vpop.permute.xlu0 %493
    %v495 = vperm.slane %v193, 2
    %v496 = vmul.f32 %v488, %v495
    %v497 = vmul.f32 %v494, %v495
    %v498 = vadd.f32 %v481, %v496
    %v499 = vadd.f32 %v482, %v497
    %v500 = vlaneseq
    %v501 = vshrl.u32 %v500, 7
    %v502 = vadd.s32 %v501, 2
    %503 = vset.pattern.permute.xlu0 %v502
    %504 = vperm.xlu0 %503, %v430
    %v505 = vpop.permute.xlu0 %504
    %v506 = vlaneseq
    %v507 = vshrl.u32 %v506, 7
    %v508 = vadd.s32 %v507, 2
    %509 = vset.pattern.permute.xlu0 %v508
    %510 = vperm.xlu0 %509, %v437
    %v511 = vpop.permute.xlu0 %510
    %v512 = vperm.slane %v194, 1
    %v513 = vmul.f32 %v505, %v512
    %v514 = vmul.f32 %v511, %v512
    %v515 = vadd.f32 %v498, %v513
    %v516 = vadd.f32 %v499, %v514
    %v517 = vlaneseq
    %v518 = vshrl.u32 %v517, 7
    %v519 = vadd.s32 %v518, 3
    %520 = vset.pattern.permute.xlu0 %v519
    %521 = vperm.xlu0 %520, %v411
    %v522 = vpop.permute.xlu0 %521
    %v523 = vlaneseq
    %v524 = vshrl.u32 %v523, 7
    %v525 = vadd.s32 %v524, 3
    %526 = vset.pattern.permute.xlu0 %v525
    %527 = vperm.xlu0 %526, %v418
    %v528 = vpop.permute.xlu0 %527
    %v529 = vperm.slane %v193, 3
    %v530 = vmul.f32 %v522, %v529
    %v531 = vmul.f32 %v528, %v529
    %v532 = vadd.f32 %v515, %v530
    %v533 = vadd.f32 %v516, %v531
    %v534 = vlaneseq
    %v535 = vshrl.u32 %v534, 7
    %v536 = vadd.s32 %v535, 3
    %537 = vset.pattern.permute.xlu0 %v536
    %538 = vperm.xlu0 %537, %v430
    %v539 = vpop.permute.xlu0 %538
    %v540 = vlaneseq
    %v541 = vshrl.u32 %v540, 7
    %v542 = vadd.s32 %v541, 3
    %543 = vset.pattern.permute.xlu0 %v542
    %544 = vperm.xlu0 %543, %v437
    %v545 = vpop.permute.xlu0 %544
    %v546 = vperm.slane %v194, 2
    %v547 = vmul.f32 %v539, %v546
    %v548 = vmul.f32 %v545, %v546
    %v549 = vadd.f32 %v532, %v547
    %v550 = vadd.f32 %v533, %v548
    %v551 = vlaneseq
    %v552 = vshrl.u32 %v551, 7
    %v553 = vadd.s32 %v552, 4
    %554 = vset.pattern.permute.xlu0 %v553
    %555 = vperm.xlu0 %554, %v411
    %v556 = vpop.permute.xlu0 %555
    %v557 = vlaneseq
    %v558 = vshrl.u32 %v557, 7
    %v559 = vadd.s32 %v558, 4
    %560 = vset.pattern.permute.xlu0 %v559
    %561 = vperm.xlu0 %560, %v418
    %v562 = vpop.permute.xlu0 %561
    %v563 = vperm.slane %v193, 4
    %v564 = vmul.f32 %v556, %v563
    %v565 = vmul.f32 %v562, %v563
    %v566 = vadd.f32 %v549, %v564
    %v567 = vadd.f32 %v550, %v565
    %v568 = vlaneseq
    %v569 = vshrl.u32 %v568, 7
    %v570 = vadd.s32 %v569, 4
    %571 = vset.pattern.permute.xlu0 %v570
    %572 = vperm.xlu0 %571, %v430
    %v573 = vpop.permute.xlu0 %572
    %v574 = vlaneseq
    %v575 = vshrl.u32 %v574, 7
    %v576 = vadd.s32 %v575, 4
    %577 = vset.pattern.permute.xlu0 %v576
    %578 = vperm.xlu0 %577, %v437
    %v579 = vpop.permute.xlu0 %578
    %v580 = vperm.slane %v194, 3
    %v581 = vmul.f32 %v573, %v580
    %v582 = vmul.f32 %v579, %v580
    %v583 = vadd.f32 %v566, %v581
    %v584 = vadd.f32 %v567, %v582
    %v585 = vlaneseq
    %v586 = vshrl.u32 %v585, 7
    %v587 = vadd.s32 %v586, 5
    %588 = vset.pattern.permute.xlu0 %v587
    %589 = vperm.xlu0 %588, %v411
    %v590 = vpop.permute.xlu0 %589
    %v591 = vlaneseq
    %v592 = vshrl.u32 %v591, 7
    %v593 = vadd.s32 %v592, 5
    %594 = vset.pattern.permute.xlu0 %v593
    %595 = vperm.xlu0 %594, %v418
    %v596 = vpop.permute.xlu0 %595
    %v597 = vperm.slane %v193, 5
    %v598 = vmul.f32 %v590, %v597
    %v599 = vmul.f32 %v596, %v597
    %v600 = vadd.f32 %v583, %v598
    %v601 = vadd.f32 %v584, %v599
    %v602 = vlaneseq
    %v603 = vshrl.u32 %v602, 7
    %v604 = vadd.s32 %v603, 5
    %605 = vset.pattern.permute.xlu0 %v604
    %606 = vperm.xlu0 %605, %v430
    %v607 = vpop.permute.xlu0 %606
    %v608 = vlaneseq
    %v609 = vshrl.u32 %v608, 7
    %v610 = vadd.s32 %v609, 5
    %611 = vset.pattern.permute.xlu0 %v610
    %612 = vperm.xlu0 %611, %v437
    %v613 = vpop.permute.xlu0 %612
    %v614 = vperm.slane %v194, 4
    %v615 = vmul.f32 %v607, %v614
    %v616 = vmul.f32 %v613, %v614
    %v617 = vadd.f32 %v600, %v615
    %v618 = vadd.f32 %v601, %v616
    %v619 = vlaneseq
    %v620 = vshrl.u32 %v619, 7
    %v621 = vadd.s32 %v620, 6
    %622 = vset.pattern.permute.xlu0 %v621
    %623 = vperm.xlu0 %622, %v411
    %v624 = vpop.permute.xlu0 %623
    %v625 = vlaneseq
    %v626 = vshrl.u32 %v625, 7
    %v627 = vadd.s32 %v626, 6
    %628 = vset.pattern.permute.xlu0 %v627
    %629 = vperm.xlu0 %628, %v418
    %v630 = vpop.permute.xlu0 %629
    %v631 = vperm.slane %v193, 6
    %v632 = vmul.f32 %v624, %v631
    %v633 = vmul.f32 %v630, %v631
    %v634 = vadd.f32 %v617, %v632
    %v635 = vadd.f32 %v618, %v633
    %v636 = vlaneseq
    %v637 = vshrl.u32 %v636, 7
    %v638 = vadd.s32 %v637, 6
    %639 = vset.pattern.permute.xlu0 %v638
    %640 = vperm.xlu0 %639, %v430
    %v641 = vpop.permute.xlu0 %640
    %v642 = vlaneseq
    %v643 = vshrl.u32 %v642, 7
    %v644 = vadd.s32 %v643, 6
    %645 = vset.pattern.permute.xlu0 %v644
    %646 = vperm.xlu0 %645, %v437
    %v647 = vpop.permute.xlu0 %646
    %v648 = vperm.slane %v194, 5
    %v649 = vmul.f32 %v641, %v648
    %v650 = vmul.f32 %v647, %v648
    %v651 = vadd.f32 %v634, %v649
    %v652 = vadd.f32 %v635, %v650
    %v654 = vrot.slane %v394, 1
    %v655 = vperm.slane %v394, 0
    %v656 = vperm.slane %v654, 0
    %v659 = vadd.f32 %v655, %v188
    %v660 = vadd.f32 %v656, %v190
    %v661 = vadd.f32 %v659, %v651
    %v662 = vadd.f32 %v660, %v652
    %v663 = vtanh.pop %v661
    %v664 = vtanh.pop %v662
    %v666 = vperm.slane %v195, 0
    %v668 = vmul.f32 %v663, %v666
    %v669 = vmul.f32 %v664, %v666
    %v670 = vsel %vm108, %v668, 0.0
    %671 = vadd.xlane.f32.xlu0 %v670
    %v672 = vpop.xlane.xlu0 %671
    %v673 = vsel %vm108, %v669, 0.0
    %674 = vadd.xlane.f32.xlu0 %v673
    %v675 = vpop.xlane.xlu0 %674
    %vm676 = vcmp.gt.f32.partialorder %v192, 0.5
    %v679 = vlaneseq
    %v680 = vand.u32 %v679, 127
    %v681 = vperm.slane %v672, %v680
    %v682 = vperm.slane %v675, %v680
    %v683 = vsel %vm261, %v682, %v681
    %v685 = vsel %vm676, -1e+30, %v683
    %vm686 = vcmask 58368
    %v687 = vsel %vm686, %v685, -inf
    %688 = vmax.xlane.f32.xlu0 %v687
    %v689 = vpop.xlane.xlu0 %688
    %v690 = vsub.f32 %v685, %v689
    %v691 = vmul.f32 %v690, 1.442695
    %v692 = vpow.pop %v691
    %v693 = vsel %vm686, %v692, 0.0
    %694 = vadd.xlane.f32.xlu0 %v693
    %v695 = vpop.xlane.xlu0 %694
    %v696 = vrcp.pop %v695
    %v697 = vmul.f32 %v692, %v696
    %v698 = vadd.f32 %v246, %v697
    %v700 = vrot.slane %v697, 1
    %v702 = vpack.c.bf16 %v697, %v697
    %v703 = vpack.c.bf16 %v700, %v700
    %v705 = vsel %vm76, %v702, 0
    %v708 = vsel %vm79, %v151, 0
    %710 = vmatpush.bf16.msra.mxu0 0
    %711 = vmatpush.bf16.msra.mxu0 0
    %712 = vmatpush.bf16.msra.mxu0 0
    %713 = vmatpush.bf16.msra.mxu0 0
    %714 = vmatpush.bf16.msra.mxu0 0
    %715 = vmatpush.bf16.msra.mxu0 0
    %716 = vmatpush.bf16.msra.mxu0 0
    %717 = vmatpush.bf16.msra.mxu0 %v708
    %718 = vmatmul.bf16.gmra.mxu0 %v705
    %v719 = vpop.f32.mrf.mxu0
    %v720 = vadd.f32 0.0, %v719
    %v721 = vpop.f32.mrf.mxu0
    %722 = vdwg.mxu0
    %v724 = vsel %vm76, %v703, 0
    %v727 = vsel %vm79, %v152, 0
    %729 = vmatpush.bf16.msra.mxu0 0
    %730 = vmatpush.bf16.msra.mxu0 0
    %731 = vmatpush.bf16.msra.mxu0 0
    %732 = vmatpush.bf16.msra.mxu0 0
    %733 = vmatpush.bf16.msra.mxu0 0
    %734 = vmatpush.bf16.msra.mxu0 0
    %735 = vmatpush.bf16.msra.mxu0 0
    %736 = vmatpush.bf16.msra.mxu0 %v727
    %737 = vmatmul.bf16.gmra.mxu0 %v724
    %v738 = vpop.f32.mrf.mxu0
    %v739 = vadd.f32 0.0, %v738
    %v740 = vpop.f32.mrf.mxu0
    %741 = vdwg.mxu0
    %v742 = vpack.c.bf16 %v720, %v720
    %v743 = vpack.c.bf16 %v739, %v739
    %v744 = vpack.c.bf16 %v241, %v241
    %v747 = vunpack.c.l.b16 %v742
    %v748 = vunpack.c.l.b16 %v743
    %v749 = vpack.c.b16 %v747, %v747
    %v750 = vpack.c.b16 %v748, %v748
    %v751 = vunpack.c.l.b16 %v749
    %v752 = vunpack.c.l.b16 %v750
    %v753 = vrot.slane %v752, 7
    %v754 = vsel %vm261, %v753, %v751
    %v755 = vpack.c.b16 %v754, %v754
    %756 = vrot.lane.b32.xlu0 %v755, 32
    %v757 = vpop.permute.xlu0 %756
    %v759 = vunpack.c.l.b16 %v744
    %v760 = vpack.c.b16 %v759, %v759
    %761 = vrot.lane.b32.xlu0 %v760, 96
    %v762 = vpop.permute.xlu0 %761
    %v764 = vsel %vm174, %v368, %v757
    %vm765 = vcmask 523264
    %v767 = vsel %vm765, %v764, %v762
    %v769 = vperm.slane %v223, 0
    %v783 = vunpack.c.l.b16 %v211
    %v784 = vunpack.c.l.b16 %v212
    %v785 = vunpack.c.l.b16 %v213
    %v786 = vunpack.c.l.b16 %v214
    %v787 = vunpack.c.l.b16 %v215
    %v788 = vunpack.c.l.b16 %v216
    %v789 = vunpack.c.l.b16 %v217
    %v790 = vunpack.c.l.b16 %v218
    %v791 = vunpack.c.l.b16 %v219
    %v792 = vunpack.c.l.b16 %v220
    %v793 = vunpack.c.l.b16 %v221
    %v794 = vunpack.c.l.b16 %v222
    %v795 = vpack.c.b16 %v784, %v783
    %v796 = vpack.c.b16 %v786, %v785
    %v797 = vpack.c.b16 %v788, %v787
    %v798 = vpack.c.b16 %v790, %v789
    %v799 = vpack.c.b16 %v792, %v791
    %v800 = vpack.c.b16 %v794, %v793
    %vm807 = vcmask 785408
    %v808 = vsel %vm807, %v767, 0
    %810 = vmatpush.bf16.msra.mxu0 0
    %811 = vmatpush.bf16.msra.mxu0 0
    %812 = vmatpush.bf16.msra.mxu0 %v800
    %813 = vmatpush.bf16.msra.mxu0 %v799
    %814 = vmatpush.bf16.msra.mxu0 %v798
    %815 = vmatpush.bf16.msra.mxu0 %v797
    %816 = vmatpush.bf16.msra.mxu0 %v796
    %817 = vmatpush.bf16.msra.mxu0 %v795
    %818 = vmatmul.bf16.gmra.mxu0 %v808
    %v819 = vpop.f32.mrf.mxu0
    %v820 = vadd.f32 %v769, %v819
    %v821 = vpop.f32.mrf.mxu0
    %822 = vdwg.mxu0
    %v823 = vxor.u32 %v820, 2147483648
    %v824 = vmul.f32 %v823, 1.442695
    %v825 = vpow.pop %v824
    %v826 = vadd.f32 %v825, 1.0
    %v827 = vrcp.pop %v826
    %v828 = vmul.f32 %v826, %v827
    %v829 = vsub.f32 1.0, %v828
    %v830 = vmul.f32 %v827, %v829
    %v831 = vadd.f32 %v827, %v830
    %vm832 = vweird.f32 %v826
    %vm833 = vweird.f32 %v827
    %vm834 = vmor %vm832, %vm833
    %v835 = vsel %vm834, %v827, %v831
    %v836 = vand.u32 2147483647, %v826
    %vm837 = vcmp.eq.f32.partialorder %v836, 8.507059e+37
    %v838 = vand.u32 %v826, 2147483648
    %v839 = vor.u32 1.1754944e-38, %v838
    %v840 = vsel %vm837, %v839, %v835
    %v841 = vmul.f32 1.0, %v840
    %v842 = vtanh.pop %v820
    %v843 = vmul.f32 %v841, %v242
    %845 = vrot.lane.b32.xlu0 %v842, 64
    %v846 = vpop.permute.xlu0 %845
    %v848 = vmul.f32 %v841, %v846
    %850 = vrot.lane.b32.xlu0 %v848, 32
    %v851 = vpop.permute.xlu0 %850
    %v853 = vadd.f32 %v843, %v851
    %v854 = vtanh.pop %v853
    %856 = vrot.lane.b32.xlu0 %v854, 64
    %v857 = vpop.permute.xlu0 %856
    %v859 = vmul.f32 %v841, %v857
    %v860 = vpack.c.bf16 %v859, %v859
    %v862 = vunpack.c.l.b16 %v860
    %v863 = vpack.c.b16 %v862, %v862
    %864 = vrot.lane.b32.xlu0 %v863, 32
    %v865 = vpop.permute.xlu0 %864
    %v867 = vsel %vm174, %v865, %v757
    %v869 = vperm.slane %v232, 0
    %v879 = vunpack.c.l.b16 %v224
    %v880 = vunpack.c.l.b16 %v225
    %v881 = vunpack.c.l.b16 %v226
    %v882 = vunpack.c.l.b16 %v227
    %v883 = vunpack.c.l.b16 %v228
    %v884 = vunpack.c.l.b16 %v229
    %v885 = vunpack.c.l.b16 %v230
    %v886 = vunpack.c.l.b16 %v231
    %v887 = vpack.c.b16 %v880, %v879
    %v888 = vpack.c.b16 %v882, %v881
    %v889 = vpack.c.b16 %v884, %v883
    %v890 = vpack.c.b16 %v886, %v885
    %v895 = vsel %vm765, %v867, 0
    %897 = vmatpush.bf16.msra.mxu0 0
    %898 = vmatpush.bf16.msra.mxu0 0
    %899 = vmatpush.bf16.msra.mxu0 0
    %900 = vmatpush.bf16.msra.mxu0 0
    %901 = vmatpush.bf16.msra.mxu0 %v890
    %902 = vmatpush.bf16.msra.mxu0 %v889
    %903 = vmatpush.bf16.msra.mxu0 %v888
    %904 = vmatpush.bf16.msra.mxu0 %v887
    %905 = vmatmul.bf16.gmra.mxu0 %v895
    %v906 = vpop.f32.mrf.mxu0
    %v907 = vadd.f32 %v869, %v906
    %v908 = vpop.f32.mrf.mxu0
    %909 = vdwg.mxu0
    %910 = vrot.lane.b32.xlu0 %v697, 9
    %v911 = vpop.permute.xlu0 %910
    %vm913 = vcmask 72704
    %v914 = vsel %vm913, %v907, %v911
    %s915 = smul.u32 %s234, 2
    %s916 = scalar_lea.vmem %s15, %s915
    %vm917 = vcmask 132096
    %918 = vst.msk [vmem:[%s916] sm:$0x3] %vm917, %v914
  $region66: #{tacotron2_forward.4} parent=0 // loop_footer
    %s238 = sadd.s32 1, %s234
  $region67: #{tacotron2_forward.4} parent=0 // loop_footer_branch
    %233 = sbr.rel target = $region63
  $region68: #{tacotron2_forward.4} parent=0 // loop_exit
    _
  // Predicated region
  $region69: #{tacotron2_forward.4} parent=0 // pred_check
    _
  $region70: #{tacotron2_forward.4} parent=0 // pred_check_branch
    %920 = sbr.rel (0) target = $region72
  $region71: #{tacotron2_forward.4} parent=0 // pred_region
    _
  $region72: #{tacotron2_forward.4} parent=0 // pred_fallthru
    _
  // Predicated region
  $region73: #{tacotron2_forward.4} parent=0 // pred_check
    _
  $region74: #{tacotron2_forward.4} parent=0 // pred_check_branch
    %922 = sbr.rel (0) target = $region76
  $region75: #{tacotron2_forward.4} parent=0 // pred_region
    _
  $region76: #{tacotron2_forward.4} parent=0 // pred_fallthru
    _

// kernel: tacotron2_forward.3
$region0: #{tacotron2_forward.3}
  #allocation0 [shape = 'u32[]', space=smem, size = 0x4, offset = 0x4, fixed_abs, tag = 'smem constant byte address 0x4 - core index']
  #allocation1 [shape = 'u32[72,128]{1,0:T(1,128)}', space=vmem, size = 0x9000, scoped, tag = 'internal scratch']
  #allocation2 [shape = 'bf16[12,2,32]{2,1,0:T(2,128)(2,1)}', space=vmem, size = 0x1800, scoped, tag = 'scratch operand']
  #allocation3 [shape = 'f32[8,2,16]{2,1,0:T(2,128)}', space=vmem, size = 0x2000, scoped, tag = 'scratch operand']
  #allocation4 [shape = 'f32[8,2,16]{2,1,0:T(2,128)}', space=vmem, size = 0x2000, scoped, tag = 'scratch operand']
  %s0 = inlined_call_operand.vmem [shape: f32[8,2,32], index: 0, kind: input, shape index: {}]
  %s1 = inlined_call_operand.vmem [shape: bf16[3,160,32], index: 1, kind: input, shape index: {}]
  %s2 = inlined_call_operand.vmem [shape: f32[3,1,32], index: 2, kind: input, shape index: {}]
  %s3 = inlined_call_operand.vmem [shape: bf16[96,128], index: 3, kind: input, shape index: {}]
  %s4 = inlined_call_operand.vmem [shape: f32[1,128], index: 4, kind: input, shape index: {}]
  %s5 = inlined_call_operand.vmem [shape: bf16[8,2,32], index: 5, kind: output, shape index: {}]
  %s6 = sld [smem:[#allocation0]]
  $region37: #{tacotron2_forward.3} parent=0
    _
  %s8 = ssub.s32 1, %s6
  %s9 = scalar_select 0, %s8, %s6
  // Predicated region
  $region2: #{tacotron2_forward.3} parent=0 // pred_check
    _
  $region3: #{tacotron2_forward.3} parent=0 // pred_check_branch
    %11 = sbr.rel (0) target = $region5
  $region4: #{tacotron2_forward.3} parent=0 // pred_region
    _
  $region5: #{tacotron2_forward.3} parent=0 // pred_fallthru
    _
  // Predicated region
  $region6: #{tacotron2_forward.3} parent=0 // pred_check
    _
  $region7: #{tacotron2_forward.3} parent=0 // pred_check_branch
    %13 = sbr.rel (0) target = $region9
  $region8: #{tacotron2_forward.3} parent=0 // pred_region
    _
  $region9: #{tacotron2_forward.3} parent=0 // pred_fallthru
    _
  // Predicated region
  $region10: #{tacotron2_forward.3} parent=0 // pred_check
    _
  $region11: #{tacotron2_forward.3} parent=0 // pred_check_branch
    %15 = sbr.rel (0) target = $region13
  $region12: #{tacotron2_forward.3} parent=0 // pred_region
    _
  $region13: #{tacotron2_forward.3} parent=0 // pred_fallthru
    _
  // Predicated region
  $region14: #{tacotron2_forward.3} parent=0 // pred_check
    _
  $region15: #{tacotron2_forward.3} parent=0 // pred_check_branch
    %17 = sbr.rel (0) target = $region17
  $region16: #{tacotron2_forward.3} parent=0 // pred_region
    _
  $region17: #{tacotron2_forward.3} parent=0 // pred_fallthru
    _
  // Predicated region
  $region18: #{tacotron2_forward.3} parent=0 // pred_check
    _
  $region19: #{tacotron2_forward.3} parent=0 // pred_check_branch
    %19 = sbr.rel (0) target = $region21
  $region20: #{tacotron2_forward.3} parent=0 // pred_region
    _
  $region21: #{tacotron2_forward.3} parent=0 // pred_fallthru
    _
  %vm21 = vcmask 253952
  %22 = vst.msk [vmem:[#allocation2] sm:$0x1] %vm21, 0
  %23 = vst.msk [vmem:[#allocation2 + $0x1] sm:$0x1] %vm21, 0
  %24 = vst.msk [vmem:[#allocation2 + $0x2] sm:$0x1] %vm21, 0
  %25 = vst.msk [vmem:[#allocation2 + $0x3] sm:$0x1] %vm21, 0
  %26 = vst.msk [vmem:[#allocation2 + $0x4] sm:$0x1] %vm21, 0
  %27 = vst.msk [vmem:[#allocation2 + $0x5] sm:$0x1] %vm21, 0
  %28 = vst.msk [vmem:[#allocation2 + $0x6] sm:$0x1] %vm21, 0
  %29 = vst.msk [vmem:[#allocation2 + $0x7] sm:$0x1] %vm21, 0
  %30 = vst.msk [vmem:[#allocation2 + $0x8] sm:$0x1] %vm21, 0
  %31 = vst.msk [vmem:[#allocation2 + $0x9] sm:$0x1] %vm21, 0
  %32 = vst.msk [vmem:[#allocation2 + $0xa] sm:$0x1] %vm21, 0
  %33 = vst.msk [vmem:[#allocation2 + $0xb] sm:$0x1] %vm21, 0
  %v34 = vld [vmem:[%s0] sm:$0x3]
  %v35 = vld [vmem:[%s0 + $0x2] sm:$0x3]
  %v36 = vld [vmem:[%s0 + $0x4] sm:$0x3]
  %v37 = vld [vmem:[%s0 + $0x6] sm:$0x3]
  %v38 = vld [vmem:[%s0 + $0x8] sm:$0x3]
  %v39 = vld [vmem:[%s0 + $0xa] sm:$0x3]
  %v40 = vld [vmem:[%s0 + $0xc] sm:$0x3]
  %v41 = vld [vmem:[%s0 + $0xe] sm:$0x3]
  %v42 = vpack.c.bf16 %v34, %v34
  %v43 = vpack.c.bf16 %v35, %v35
  %v44 = vpack.c.bf16 %v36, %v36
  %v45 = vpack.c.bf16 %v37, %v37
  %v46 = vpack.c.bf16 %v38, %v38
  %v47 = vpack.c.bf16 %v39, %v39
  %v48 = vpack.c.bf16 %v40, %v40
  %v49 = vpack.c.bf16 %v41, %v41
  %s50 = scalar_lea.vmem [#allocation2], 2
  %51 = vst.msk [vmem:[%s50] sm:$0x1] %vm21, %v42
  %52 = vst.msk [vmem:[%s50 + $0x1] sm:$0x1] %vm21, %v43
  %53 = vst.msk [vmem:[%s50 + $0x2] sm:$0x1] %vm21, %v44
  %54 = vst.msk [vmem:[%s50 + $0x3] sm:$0x1] %vm21, %v45
  %55 = vst.msk [vmem:[%s50 + $0x4] sm:$0x1] %vm21, %v46
  %56 = vst.msk [vmem:[%s50 + $0x5] sm:$0x1] %vm21, %v47
  %57 = vst.msk [vmem:[%s50 + $0x6] sm:$0x1] %vm21, %v48
  %58 = vst.msk [vmem:[%s50 + $0x7] sm:$0x1] %vm21, %v49
  %v59 = vld [vmem:[#allocation2] sm:$0x1]
  %v60 = vld [vmem:[#allocation2 + $0x1] sm:$0x1]
  %v61 = vld [vmem:[#allocation2 + $0x2] sm:$0x1]
  %v62 = vld [vmem:[#allocation2 + $0x3] sm:$0x1]
  %v63 = vld [vmem:[#allocation2 + $0x4] sm:$0x1]
  %v64 = vld [vmem:[#allocation2 + $0x5] sm:$0x1]
  %v65 = vld [vmem:[#allocation2 + $0x6] sm:$0x1]
  %v66 = vld [vmem:[#allocation2 + $0x7] sm:$0x1]
  %s67 = scalar_lea.vmem [#allocation2], 1
  %v68 = vld [vmem:[%s67] sm:$0x1]
  %v69 = vld [vmem:[%s67 + $0x1] sm:$0x1]
  %v70 = vld [vmem:[%s67 + $0x2] sm:$0x1]
  %v71 = vld [vmem:[%s67 + $0x3] sm:$0x1]
  %v72 = vld [vmem:[%s67 + $0x4] sm:$0x1]
  %v73 = vld [vmem:[%s67 + $0x5] sm:$0x1]
  %v74 = vld [vmem:[%s67 + $0x6] sm:$0x1]
  %v75 = vld [vmem:[%s67 + $0x7] sm:$0x1]
  %v76 = vld [vmem:[%s50] sm:$0x1]
  %v77 = vld [vmem:[%s50 + $0x1] sm:$0x1]
  %v78 = vld [vmem:[%s50 + $0x2] sm:$0x1]
  %v79 = vld [vmem:[%s50 + $0x3] sm:$0x1]
  %v80 = vld [vmem:[%s50 + $0x4] sm:$0x1]
  %v81 = vld [vmem:[%s50 + $0x5] sm:$0x1]
  %v82 = vld [vmem:[%s50 + $0x6] sm:$0x1]
  %v83 = vld [vmem:[%s50 + $0x7] sm:$0x1]
  %s84 = scalar_lea.vmem [#allocation2], 3
  %v85 = vld [vmem:[%s84] sm:$0x1]
  %v86 = vld [vmem:[%s84 + $0x1] sm:$0x1]
  %v87 = vld [vmem:[%s84 + $0x2] sm:$0x1]
  %v88 = vld [vmem:[%s84 + $0x3] sm:$0x1]
  %v89 = vld [vmem:[%s84 + $0x4] sm:$0x1]
  %v90 = vld [vmem:[%s84 + $0x5] sm:$0x1]
  %v91 = vld [vmem:[%s84 + $0x6] sm:$0x1]
  %v92 = vld [vmem:[%s84 + $0x7] sm:$0x1]
  %s93 = scalar_lea.vmem [#allocation2], 4
  %v94 = vld [vmem:[%s93] sm:$0x1]
  %v95 = vld [vmem:[%s93 + $0x1] sm:$0x1]
  %v96 = vld [vmem:[%s93 + $0x2] sm:$0x1]
  %v97 = vld [vmem:[%s93 + $0x3] sm:$0x1]
  %v98 = vld [vmem:[%s93 + $0x4] sm:$0x1]
  %v99 = vld [vmem:[%s93 + $0x5] sm:$0x1]
  %v100 = vld [vmem:[%s93 + $0x6] sm:$0x1]
  %v101 = vld [vmem:[%s93 + $0x7] sm:$0x1]
  %103 = vst [vmem:[#allocation1] ss:$9 sm:$0xff] %v68
  %v104 = vld [vmem:[#allocation1] sm:$0xff]
  %107 = vst [vmem:[#allocation1] ss:$9 sm:$0xff] %v69
  %v108 = vld [vmem:[#allocation1] sm:$0xff]
  %111 = vst [vmem:[#allocation1] ss:$9 sm:$0xff] %v70
  %v112 = vld [vmem:[#allocation1] sm:$0xff]
  %115 = vst [vmem:[#allocation1] ss:$9 sm:$0xff] %v71
  %v116 = vld [vmem:[#allocation1] sm:$0xff]
  %119 = vst [vmem:[#allocation1] ss:$9 sm:$0xff] %v72
  %v120 = vld [vmem:[#allocation1] sm:$0xff]
  %123 = vst [vmem:[#allocation1] ss:$9 sm:$0xff] %v73
  %v124 = vld [vmem:[#allocation1] sm:$0xff]
  %127 = vst [vmem:[#allocation1] ss:$9 sm:$0xff] %v74
  %v128 = vld [vmem:[#allocation1] sm:$0xff]
  %131 = vst [vmem:[#allocation1] ss:$9 sm:$0xff] %v75
  %v132 = vld [vmem:[#allocation1] sm:$0xff]
  %134 = vrot.lane.b32.xlu0 %v104, 32
  %v135 = vpop.permute.xlu0 %134
  %136 = vrot.lane.b32.xlu0 %v108, 32
  %v137 = vpop.permute.xlu0 %136
  %138 = vrot.lane.b32.xlu0 %v112, 32
  %v139 = vpop.permute.xlu0 %138
  %140 = vrot.lane.b32.xlu0 %v116, 32
  %v141 = vpop.permute.xlu0 %140
  %142 = vrot.lane.b32.xlu0 %v120, 32
  %v143 = vpop.permute.xlu0 %142
  %144 = vrot.lane.b32.xlu0 %v124, 32
  %v145 = vpop.permute.xlu0 %144
  %146 = vrot.lane.b32.xlu0 %v128, 32
  %v147 = vpop.permute.xlu0 %146
  %148 = vrot.lane.b32.xlu0 %v132, 32
  %v149 = vpop.permute.xlu0 %148
  %151 = vst [vmem:[#allocation1] ss:$9 sm:$0xff] %v76
  %v152 = vld [vmem:[#allocation1] sm:$0xff]
  %155 = vst [vmem:[#allocation1] ss:$9 sm:$0xff] %v77
  %v156 = vld [vmem:[#allocation1] sm:$0xff]
  %159 = vst [vmem:[#allocation1] ss:$9 sm:$0xff] %v78
  %v160 = vld [vmem:[#allocation1] sm:$0xff]
  %163 = vst [vmem:[#allocation1] ss:$9 sm:$0xff] %v79
  %v164 = vld [vmem:[#allocation1] sm:$0xff]
  %167 = vst [vmem:[#allocation1] ss:$9 sm:$0xff] %v80
  %v168 = vld [vmem:[#allocation1] sm:$0xff]
  %171 = vst [vmem:[#allocation1] ss:$9 sm:$0xff] %v81
  %v172 = vld [vmem:[#allocation1] sm:$0xff]
  %175 = vst [vmem:[#allocation1] ss:$9 sm:$0xff] %v82
  %v176 = vld [vmem:[#allocation1] sm:$0xff]
  %179 = vst [vmem:[#allocation1] ss:$9 sm:$0xff] %v83
  %v180 = vld [vmem:[#allocation1] sm:$0xff]
  %182 = vrot.lane.b32.xlu0 %v152, 64
  %v183 = vpop.permute.xlu0 %182
  %184 = vrot.lane.b32.xlu0 %v156, 64
  %v185 = vpop.permute.xlu0 %184
  %186 = vrot.lane.b32.xlu0 %v160, 64
  %v187 = vpop.permute.xlu0 %186
  %188 = vrot.lane.b32.xlu0 %v164, 64
  %v189 = vpop.permute.xlu0 %188
  %190 = vrot.lane.b32.xlu0 %v168, 64
  %v191 = vpop.permute.xlu0 %190
  %192 = vrot.lane.b32.xlu0 %v172, 64
  %v193 = vpop.permute.xlu0 %192
  %194 = vrot.lane.b32.xlu0 %v176, 64
  %v195 = vpop.permute.xlu0 %194
  %196 = vrot.lane.b32.xlu0 %v180, 64
  %v197 = vpop.permute.xlu0 %196
  %199 = vst [vmem:[#allocation1] ss:$9 sm:$0xff] %v85
  %v200 = vld [vmem:[#allocation1] sm:$0xff]
  %203 = vst [vmem:[#allocation1] ss:$9 sm:$0xff] %v86
  %v204 = vld [vmem:[#allocation1] sm:$0xff]
  %207 = vst [vmem:[#allocation1] ss:$9 sm:$0xff] %v87
  %v208 = vld [vmem:[#allocation1] sm:$0xff]
  %211 = vst [vmem:[#allocation1] ss:$9 sm:$0xff] %v88
  %v212 = vld [vmem:[#allocation1] sm:$0xff]
  %215 = vst [vmem:[#allocation1] ss:$9 sm:$0xff] %v89
  %v216 = vld [vmem:[#allocation1] sm:$0xff]
  %219 = vst [vmem:[#allocation1] ss:$9 sm:$0xff] %v90
  %v220 = vld [vmem:[#allocation1] sm:$0xff]
  %223 = vst [vmem:[#allocation1] ss:$9 sm:$0xff] %v91
  %v224 = vld [vmem:[#allocation1] sm:$0xff]
  %227 = vst [vmem:[#allocation1] ss:$9 sm:$0xff] %v92
  %v228 = vld [vmem:[#allocation1] sm:$0xff]
  %230 = vrot.lane.b32.xlu0 %v200, 96
  %v231 = vpop.permute.xlu0 %230
  %232 = vrot.lane.b32.xlu0 %v204, 96
  %v233 = vpop.permute.xlu0 %232
  %234 = vrot.lane.b32.xlu0 %v208, 96
  %v235 = vpop.permute.xlu0 %234
  %236 = vrot.lane.b32.xlu0 %v212, 96
  %v237 = vpop.permute.xlu0 %236
  %238 = vrot.lane.b32.xlu0 %v216, 96
  %v239 = vpop.permute.xlu0 %238
  %240 = vrot.lane.b32.xlu0 %v220, 96
  %v241 = vpop.permute.xlu0 %240
  %242 = vrot.lane.b32.xlu0 %v224, 96
  %v243 = vpop.permute.xlu0 %242
  %244 = vrot.lane.b32.xlu0 %v228, 96
  %v245 = vpop.permute.xlu0 %244
  %vm246 = vcmask 261120
  %v249 = vsel %vm246, %v59, %v135
  %v252 = vsel %vm246, %v60, %v137
  %v255 = vsel %vm246, %v61, %v139
  %v258 = vsel %vm246, %v62, %v141
  %v261 = vsel %vm246, %v63, %v143
  %v264 = vsel %vm246, %v64, %v145
  %v267 = vsel %vm246, %v65, %v147
  %v270 = vsel %vm246, %v66, %v149
  %vm271 = vcmask 523264
  %v273 = vsel %vm271, %v249, %v183
  %v275 = vsel %vm271, %v252, %v185
  %v277 = vsel %vm271, %v255, %v187
  %v279 = vsel %vm271, %v258, %v189
  %v281 = vsel %vm271, %v261, %v191
  %v283 = vsel %vm271, %v264, %v193
  %v285 = vsel %vm271, %v267, %v195
  %v287 = vsel %vm271, %v270, %v197
  %vm288 = vcmask 785408
  %v290 = vsel %vm288, %v273, %v231
  %v292 = vsel %vm288, %v275, %v233
  %v294 = vsel %vm288, %v277, %v235
  %v296 = vsel %vm288, %v279, %v237
  %v298 = vsel %vm288, %v281, %v239
  %v300 = vsel %vm288, %v283, %v241
  %v302 = vsel %vm288, %v285, %v243
  %v304 = vsel %vm288, %v287, %v245
  %v313 = vrot.slane %v94, 7
  %v314 = vrot.slane %v95, 7
  %v315 = vrot.slane %v96, 7
  %v316 = vrot.slane %v97, 7
  %v317 = vrot.slane %v98, 7
  %v318 = vrot.slane %v99, 7
  %v319 = vrot.slane %v100, 7
  %v320 = vrot.slane %v101, 7
  %vm321 = vcmask 1040384
  %v323 = vsel %vm321, %v290, %v313
  %v325 = vsel %vm321, %v292, %v314
  %v327 = vsel %vm321, %v294, %v315
  %v329 = vsel %vm321, %v296, %v316
  %v331 = vsel %vm321, %v298, %v317
  %v333 = vsel %vm321, %v300, %v318
  %v335 = vsel %vm321, %v302, %v319
  %v337 = vsel %vm321, %v304, %v320
  %v338 = vld [vmem:[%s1] sm:$0xf]
  %v339 = vld [vmem:[%s1 + $0x4] sm:$0xf]
  %v340 = vld [vmem:[%s1 + $0x8] sm:$0xf]
  %v341 = vld [vmem:[%s1 + $0xc] sm:$0xf]
  %v342 = vld [vmem:[%s1 + $0x10] sm:$0xf]
  %v343 = vld [vmem:[%s1 + $0x14] sm:$0xf]
  %v344 = vld [vmem:[%s1 + $0x18] sm:$0xf]
  %v345 = vld [vmem:[%s1 + $0x1c] sm:$0xf]
  %v346 = vld [vmem:[%s1 + $0x20] sm:$0xf]
  %v347 = vld [vmem:[%s1 + $0x24] sm:$0xf]
  %v348 = vld [vmem:[%s1 + $0x28] sm:$0xf]
  %v349 = vld [vmem:[%s1 + $0x2c] sm:$0xf]
  %v350 = vld [vmem:[%s1 + $0x30] sm:$0xf]
  %v351 = vld [vmem:[%s1 + $0x34] sm:$0xf]
  %v352 = vld [vmem:[%s1 + $0x38] sm:$0xf]
  %v353 = vld [vmem:[%s1 + $0x3c] sm:$0xf]
  %v354 = vld [vmem:[%s1 + $0x40] sm:$0xf]
  %v355 = vld [vmem:[%s1 + $0x44] sm:$0xf]
  %v356 = vld [vmem:[%s1 + $0x48] sm:$0xf]
  %v357 = vld [vmem:[%s1 + $0x4c] sm:$0xf]
  %v358 = vld [vmem:[%s2] sm:$0x1]
  %v360 = vperm.slane %v358, 0
  %362 = vst [vmem:[#allocation1] ss:$9 sm:$0xff] %v323
  %s363 = scalar_lea.vmem [#allocation1], 1
  %364 = vst [vmem:[%s363] ss:$9 sm:$0xff] %v325
  %s365 = scalar_lea.vmem [#allocation1], 2
  %366 = vst [vmem:[%s365] ss:$9 sm:$0xff] %v327
  %s367 = scalar_lea.vmem [#allocation1], 3
  %368 = vst [vmem:[%s367] ss:$9 sm:$0xff] %v329
  %s369 = scalar_lea.vmem [#allocation1], 4
  %370 = vst [vmem:[%s369] ss:$9 sm:$0xff] %v331
  %s371 = scalar_lea.vmem [#allocation1], 5
  %372 = vst [vmem:[%s371] ss:$9 sm:$0xff] %v333
  %s373 = scalar_lea.vmem [#allocation1], 6
  %374 = vst [vmem:[%s373] ss:$9 sm:$0xff] %v335
  %s375 = scalar_lea.vmem [#allocation1], 7
  %376 = vst [vmem:[%s375] ss:$9 sm:$0xff] %v337
  %v377 = vld [vmem:[#allocation1] sm:$0xff]
  %v378 = vld [vmem:[#allocation1 + $0x9] sm:$0xff]
  %v400 = vunpack.c.l.b16 %v338
  %v401 = vunpack.c.l.b16 %v339
  %v402 = vunpack.c.l.b16 %v340
  %v403 = vunpack.c.l.b16 %v341
  %v404 = vunpack.c.l.b16 %v342
  %v405 = vunpack.c.l.b16 %v343
  %v406 = vunpack.c.l.b16 %v344
  %v407 = vunpack.c.l.b16 %v345
  %v408 = vunpack.c.l.b16 %v346
  %v409 = vunpack.c.l.b16 %v347
  %v410 = vunpack.c.l.b16 %v348
  %v411 = vunpack.c.l.b16 %v349
  %v412 = vunpack.c.l.b16 %v350
  %v413 = vunpack.c.l.b16 %v351
  %v414 = vunpack.c.l.b16 %v352
  %v415 = vunpack.c.l.b16 %v353
  %v416 = vunpack.c.l.b16 %v354
  %v417 = vunpack.c.l.b16 %v355
  %v418 = vunpack.c.l.b16 %v356
  %v419 = vunpack.c.l.b16 %v357
  %v420 = vpack.c.b16 %v401, %v400
  %v421 = vpack.c.b16 %v403, %v402
  %v422 = vpack.c.b16 %v405, %v404
  %v423 = vpack.c.b16 %v407, %v406
  %v424 = vpack.c.b16 %v409, %v408
  %v425 = vpack.c.b16 %v411, %v410
  %v426 = vpack.c.b16 %v413, %v412
  %v427 = vpack.c.b16 %v415, %v414
  %v428 = vpack.c.b16 %v417, %v416
  %v429 = vpack.c.b16 %v419, %v418
  %v440 = vsel %vm246, %v378, 0
  %442 = vmatpush.bf16.msra.mxu0 %v427
  %443 = vmatpush.bf16.msra.mxu0 %v426
  %444 = vmatpush.bf16.msra.mxu0 %v425
  %445 = vmatpush.bf16.msra.mxu0 %v424
  %446 = vmatpush.bf16.msra.mxu0 %v423
  %447 = vmatpush.bf16.msra.mxu0 %v422
  %448 = vmatpush.bf16.msra.mxu0 %v421
  %449 = vmatpush.bf16.msra.mxu0 %v420
  %450 = vmatmul.bf16.gmra.mxu0 %v377
  %v451 = vpop.f32.mrf.mxu0
  %v452 = vadd.f32 %v360, %v451
  %v453 = vpop.f32.mrf.mxu0
  %v454 = vadd.f32 %v360, %v453
  %455 = vdwg.mxu0
  %456 = vmatpush.bf16.msra.mxu0 0
  %457 = vmatpush.bf16.msra.mxu0 0
  %458 = vmatpush.bf16.msra.mxu0 0
  %459 = vmatpush.bf16.msra.mxu0 0
  %460 = vmatpush.bf16.msra.mxu0 0
  %461 = vmatpush.bf16.msra.mxu0 0
  %462 = vmatpush.bf16.msra.mxu0 %v429
  %463 = vmatpush.bf16.msra.mxu0 %v428
  %464 = vmatmul.bf16.gmra.mxu0 %v440
  %v465 = vpop.f32.mrf.mxu0
  %v466 = vadd.f32 %v452, %v465
  %v467 = vpop.f32.mrf.mxu0
  %v468 = vadd.f32 %v454, %v467
  %469 = vdwg.mxu0
  %v470 = vmax.f32 %v466, 0.0
  %v471 = vmax.f32 %v468, 0.0
  %v472 = vpack.c.bf16 %v470, %v470
  %v473 = vpack.c.bf16 %v471, %v471
  %v476 = vrot.slane %v472, 3
  %v477 = vrot.slane %v473, 3
  %v480 = vsel %vm321, %v472, %v476
  %vm481 = vcmask 1041409
  %v482 = vsel %vm481, %v472, %v476
  %v484 = vrot.slane %v482, 1
  %vm485 = vcmask 1042434
  %v486 = vsel %vm485, %v472, %v476
  %v488 = vrot.slane %v486, 2
  %vm489 = vcmask 1043459
  %v490 = vsel %vm489, %v472, %v476
  %v492 = vrot.slane %v490, 3
  %v495 = vsel %vm321, %v473, %v477
  %v496 = vsel %vm481, %v473, %v477
  %v498 = vrot.slane %v496, 1
  %v499 = vsel %vm485, %v473, %v477
  %v501 = vrot.slane %v499, 2
  %v502 = vsel %vm489, %v473, %v477
  %v504 = vrot.slane %v502, 3
  %513 = vst.msk [vmem:[%s50] sm:$0x1] %vm21, %v480
  %514 = vst.msk [vmem:[%s50 + $0x1] sm:$0x1] %vm21, %v484
  %515 = vst.msk [vmem:[%s50 + $0x2] sm:$0x1] %vm21, %v488
  %516 = vst.msk [vmem:[%s50 + $0x3] sm:$0x1] %vm21, %v492
  %517 = vst.msk [vmem:[%s50 + $0x4] sm:$0x1] %vm21, %v495
  %518 = vst.msk [vmem:[%s50 + $0x5] sm:$0x1] %vm21, %v498
  %519 = vst.msk [vmem:[%s50 + $0x6] sm:$0x1] %vm21, %v501
  %520 = vst.msk [vmem:[%s50 + $0x7] sm:$0x1] %vm21, %v504
  %v521 = vld [vmem:[#allocation2] sm:$0x1]
  %v522 = vld [vmem:[#allocation2 + $0x1] sm:$0x1]
  %v523 = vld [vmem:[#allocation2 + $0x2] sm:$0x1]
  %v524 = vld [vmem:[#allocation2 + $0x3] sm:$0x1]
  %v525 = vld [vmem:[#allocation2 + $0x4] sm:$0x1]
  %v526 = vld [vmem:[#allocation2 + $0x5] sm:$0x1]
  %v527 = vld [vmem:[#allocation2 + $0x6] sm:$0x1]
  %v528 = vld [vmem:[#allocation2 + $0x7] sm:$0x1]
  %v529 = vld [vmem:[%s67] sm:$0x1]
  %v530 = vld [vmem:[%s67 + $0x1] sm:$0x1]
  %v531 = vld [vmem:[%s67 + $0x2] sm:$0x1]
  %v532 = vld [vmem:[%s67 + $0x3] sm:$0x1]
  %v533 = vld [vmem:[%s67 + $0x4] sm:$0x1]
  %v534 = vld [vmem:[%s67 + $0x5] sm:$0x1]
  %v535 = vld [vmem:[%s67 + $0x6] sm:$0x1]
  %v536 = vld [vmem:[%s67 + $0x7] sm:$0x1]
  %v537 = vld [vmem:[%s50] sm:$0x1]
  %v538 = vld [vmem:[%s50 + $0x1] sm:$0x1]
  %v539 = vld [vmem:[%s50 + $0x2] sm:$0x1]
  %v540 = vld [vmem:[%s50 + $0x3] sm:$0x1]
  %v541 = vld [vmem:[%s50 + $0x4] sm:$0x1]
  %v542 = vld [vmem:[%s50 + $0x5] sm:$0x1]
  %v543 = vld [vmem:[%s50 + $0x6] sm:$0x1]
  %v544 = vld [vmem:[%s50 + $0x7] sm:$0x1]
  %v545 = vld [vmem:[%s84] sm:$0x1]
  %v546 = vld [vmem:[%s84 + $0x1] sm:$0x1]
  %v547 = vld [vmem:[%s84 + $0x2] sm:$0x1]
  %v548 = vld [vmem:[%s84 + $0x3] sm:$0x1]
  %v549 = vld [vmem:[%s84 + $0x4] sm:$0x1]
  %v550 = vld [vmem:[%s84 + $0x5] sm:$0x1]
  %v551 = vld [vmem:[%s84 + $0x6] sm:$0x1]
  %v552 = vld [vmem:[%s84 + $0x7] sm:$0x1]
  %v553 = vld [vmem:[%s93] sm:$0x1]
  %v554 = vld [vmem:[%s93 + $0x1] sm:$0x1]
  %v555 = vld [vmem:[%s93 + $0x2] sm:$0x1]
  %v556 = vld [vmem:[%s93 + $0x3] sm:$0x1]
  %v557 = vld [vmem:[%s93 + $0x4] sm:$0x1]
  %v558 = vld [vmem:[%s93 + $0x5] sm:$0x1]
  %v559 = vld [vmem:[%s93 + $0x6] sm:$0x1]
  %v560 = vld [vmem:[%s93 + $0x7] sm:$0x1]
  %562 = vst [vmem:[#allocation1] ss:$9 sm:$0xff] %v529
  %v563 = vld [vmem:[#allocation1] sm:$0xff]
  %566 = vst [vmem:[#allocation1] ss:$9 sm:$0xff] %v530
  %v567 = vld [vmem:[#allocation1] sm:$0xff]
  %570 = vst [vmem:[#allocation1] ss:$9 sm:$0xff] %v531
  %v571 = vld [vmem:[#allocation1] sm:$0xff]
  %574 = vst [vmem:[#allocation1] ss:$9 sm:$0xff] %v532
  %v575 = vld [vmem:[#allocation1] sm:$0xff]
  %578 = vst [vmem:[#allocation1] ss:$9 sm:$0xff] %v533
  %v579 = vld [vmem:[#allocation1] sm:$0xff]
  %582 = vst [vmem:[#allocation1] ss:$9 sm:$0xff] %v534
  %v583 = vld [vmem:[#allocation1] sm:$0xff]
  %586 = vst [vmem:[#allocation1] ss:$9 sm:$0xff] %v535
  %v587 = vld [vmem:[#allocation1] sm:$0xff]
  %590 = vst [vmem:[#allocation1] ss:$9 sm:$0xff] %v536
  %v591 = vld [vmem:[#allocation1] sm:$0xff]
  %593 = vrot.lane.b32.xlu0 %v563, 32
  %v594 = vpop.permute.xlu0 %593
  %595 = vrot.lane.b32.xlu0 %v567, 32
  %v596 = vpop.permute.xlu0 %595
  %597 = vrot.lane.b32.xlu0 %v571, 32
  %v598 = vpop.permute.xlu0 %597
  %599 = vrot.lane.b32.xlu0 %v575, 32
  %v600 = vpop.permute.xlu0 %599
  %601 = vrot.lane.b32.xlu0 %v579, 32
  %v602 = vpop.permute.xlu0 %601
  %603 = vrot.lane.b32.xlu0 %v583, 32
  %v604 = vpop.permute.xlu0 %603
  %605 = vrot.lane.b32.xlu0 %v587, 32
  %v606 = vpop.permute.xlu0 %605
  %607 = vrot.lane.b32.xlu0 %v591, 32
  %v608 = vpop.permute.xlu0 %607
  %610 = vst [vmem:[#allocation1] ss:$9 sm:$0xff] %v537
  %v611 = vld [vmem:[#allocation1] sm:$0xff]
  %614 = vst [vmem:[#allocation1] ss:$9 sm:$0xff] %v538
  %v615 = vld [vmem:[#allocation1] sm:$0xff]
  %618 = vst [vmem:[#allocation1] ss:$9 sm:$0xff] %v539
  %v619 = vld [vmem:[#allocation1] sm:$0xff]
  %622 = vst [vmem:[#allocation1] ss:$9 sm:$0xff] %v540
  %v623 = vld [vmem:[#allocation1] sm:$0xff]
  %626 = vst [vmem:[#allocation1] ss:$9 sm:$0xff] %v541
  %v627 = vld [vmem:[#allocation1] sm:$0xff]
  %630 = vst [vmem:[#allocation1] ss:$9 sm:$0xff] %v542
  %v631 = vld [vmem:[#allocation1] sm:$0xff]
  %634 = vst [vmem:[#allocation1] ss:$9 sm:$0xff] %v543
  %v635 = vld [vmem:[#allocation1] sm:$0xff]
  %638 = vst [vmem:[#allocation1] ss:$9 sm:$0xff] %v544
  %v639 = vld [vmem:[#allocation1] sm:$0xff]
  %641 = vrot.lane.b32.xlu0 %v611, 64
  %v642 = vpop.permute.xlu0 %641
  %643 = vrot.lane.b32.xlu0 %v615, 64
  %v644 = vpop.permute.xlu0 %643
  %645 = vrot.lane.b32.xlu0 %v619, 64
  %v646 = vpop.permute.xlu0 %645
  %647 = vrot.lane.b32.xlu0 %v623, 64
  %v648 = vpop.permute.xlu0 %647
  %649 = vrot.lane.b32.xlu0 %v627, 64
  %v650 = vpop.permute.xlu0 %649
  %651 = vrot.lane.b32.xlu0 %v631, 64
  %v652 = vpop.permute.xlu0 %651
  %653 = vrot.lane.b32.xlu0 %v635, 64
  %v654 = vpop.permute.xlu0 %653
  %655 = vrot.lane.b32.xlu0 %v639, 64
  %v656 = vpop.permute.xlu0 %655
  %658 = vst [vmem:[#allocation1] ss:$9 sm:$0xff] %v545
  %v659 = vld [vmem:[#allocation1] sm:$0xff]
  %662 = vst [vmem:[#allocation1] ss:$9 sm:$0xff] %v546
  %v663 = vld [vmem:[#allocation1] sm:$0xff]
  %666 = vst [vmem:[#allocation1] ss:$9 sm:$0xff] %v547
  %v667 = vld [vmem:[#allocation1] sm:$0xff]
  %670 = vst [vmem:[#allocation1] ss:$9 sm:$0xff] %v548
  %v671 = vld [vmem:[#allocation1] sm:$0xff]
  %674 = vst [vmem:[#allocation1] ss:$9 sm:$0xff] %v549
  %v675 = vld [vmem:[#allocation1] sm:$0xff]
  %678 = vst [vmem:[#allocation1] ss:$9 sm:$0xff] %v550
  %v679 = vld [vmem:[#allocation1] sm:$0xff]
  %682 = vst [vmem:[#allocation1] ss:$9 sm:$0xff] %v551
  %v683 = vld [vmem:[#allocation1] sm:$0xff]
  %686 = vst [vmem:[#allocation1] ss:$9 sm:$0xff] %v552
  %v687 = vld [vmem:[#allocation1] sm:$0xff]
  %689 = vrot.lane.b32.xlu0 %v659, 96
  %v690 = vpop.permute.xlu0 %689
  %691 = vrot.lane.b32.xlu0 %v663, 96
  %v692 = vpop.permute.xlu0 %691
  %693 = vrot.lane.b32.xlu0 %v667, 96
  %v694 = vpop.permute.xlu0 %693
  %695 = vrot.lane.b32.xlu0 %v671, 96
  %v696 = vpop.permute.xlu0 %695
  %697 = vrot.lane.b32.xlu0 %v675, 96
  %v698 = vpop.permute.xlu0 %697
  %699 = vrot.lane.b32.xlu0 %v679, 96
  %v700 = vpop.permute.xlu0 %699
  %701 = vrot.lane.b32.xlu0 %v683, 96
  %v702 = vpop.permute.xlu0 %701
  %703 = vrot.lane.b32.xlu0 %v687, 96
  %v704 = vpop.permute.xlu0 %703
  %v707 = vsel %vm246, %v521, %v594
  %v710 = vsel %vm246, %v522, %v596
  %v713 = vsel %vm246, %v523, %v598
  %v716 = vsel %vm246, %v524, %v600
  %v719 = vsel %vm246, %v525, %v602
  %v722 = vsel %vm246, %v526, %v604
  %v725 = vsel %vm246, %v527, %v606
  %v728 = vsel %vm246, %v528, %v608
  %v730 = vsel %vm271, %v707, %v642
  %v732 = vsel %vm271, %v710, %v644
  %v734 = vsel %vm271, %v713, %v646
  %v736 = vsel %vm271, %v716, %v648
  %v738 = vsel %vm271, %v719, %v650
  %v740 = vsel %vm271, %v722, %v652
  %v742 = vsel %vm271, %v725, %v654
  %v744 = vsel %vm271, %v728, %v656
  %v746 = vsel %vm288, %v730, %v690
  %v748 = vsel %vm288, %v732, %v692
  %v750 = vsel %vm288, %v734, %v694
  %v752 = vsel %vm288, %v736, %v696
  %v754 = vsel %vm288, %v738, %v698
  %v756 = vsel %vm288, %v740, %v700
  %v758 = vsel %vm288, %v742, %v702
  %v760 = vsel %vm288, %v744, %v704
  %v769 = vrot.slane %v553, 7
  %v770 = vrot.slane %v554, 7
  %v771 = vrot.slane %v555, 7
  %v772 = vrot.slane %v556, 7
  %v773 = vrot.slane %v557, 7
  %v774 = vrot.slane %v558, 7
  %v775 = vrot.slane %v559, 7
  %v776 = vrot.slane %v560, 7
  %v778 = vsel %vm321, %v746, %v769
  %v780 = vsel %vm321, %v748, %v770
  %v782 = vsel %vm321, %v750, %v771
  %v784 = vsel %vm321, %v752, %v772
  %v786 = vsel %vm321, %v754, %v773
  %v788 = vsel %vm321, %v756, %v774
  %v790 = vsel %vm321, %v758, %v775
  %v792 = vsel %vm321, %v760, %v776
  %s793 = scalar_lea.vmem %s1, 80
  %v794 = vld [vmem:[%s793] sm:$0xf]
  %v795 = vld [vmem:[%s793 + $0x4] sm:$0xf]
  %v796 = vld [vmem:[%s793 + $0x8] sm:$0xf]
  %v797 = vld [vmem:[%s793 + $0xc] sm:$0xf]
  %v798 = vld [vmem:[%s793 + $0x10] sm:$0xf]
  %v799 = vld [vmem:[%s793 + $0x14] sm:$0xf]
  %v800 = vld [vmem:[%s793 + $0x18] sm:$0xf]
  %v801 = vld [vmem:[%s793 + $0x1c] sm:$0xf]
  %v802 = vld [vmem:[%s793 + $0x20] sm:$0xf]
  %v803 = vld [vmem:[%s793 + $0x24] sm:$0xf]
  %v804 = vld [vmem:[%s793 + $0x28] sm:$0xf]
  %v805 = vld [vmem:[%s793 + $0x2c] sm:$0xf]
  %v806 = vld [vmem:[%s793 + $0x30] sm:$0xf]
  %v807 = vld [vmem:[%s793 + $0x34] sm:$0xf]
  %v808 = vld [vmem:[%s793 + $0x38] sm:$0xf]
  %v809 = vld [vmem:[%s793 + $0x3c] sm:$0xf]
  %v810 = vld [vmem:[%s793 + $0x40] sm:$0xf]
  %v811 = vld [vmem:[%s793 + $0x44] sm:$0xf]
  %v812 = vld [vmem:[%s793 + $0x48] sm:$0xf]
  %v813 = vld [vmem:[%s793 + $0x4c] sm:$0xf]
  %s814 = scalar_lea.vmem %s2, 1
  %v815 = vld [vmem:[%s814] sm:$0x1]
  %v817 = vperm.slane %v815, 0
  %819 = vst [vmem:[#allocation1] ss:$9 sm:$0xff] %v778
  %s820 = scalar_lea.vmem [#allocation1], 1
  %821 = vst [vmem:[%s820] ss:$9 sm:$0xff] %v780
  %s822 = scalar_lea.vmem [#allocation1], 2
  %823 = vst [vmem:[%s822] ss:$9 sm:$0xff] %v782
  %s824 = scalar_lea.vmem [#allocation1], 3
  %825 = vst [vmem:[%s824] ss:$9 sm:$0xff] %v784
  %s826 = scalar_lea.vmem [#allocation1], 4
  %827 = vst [vmem:[%s826] ss:$9 sm:$0xff] %v786
  %s828 = scalar_lea.vmem [#allocation1], 5
  %829 = vst [vmem:[%s828] ss:$9 sm:$0xff] %v788
  %s830 = scalar_lea.vmem [#allocation1], 6
  %831 = vst [vmem:[%s830] ss:$9 sm:$0xff] %v790
  %s832 = scalar_lea.vmem [#allocation1], 7
  %833 = vst [vmem:[%s832] ss:$9 sm:$0xff] %v792
  %v834 = vld [vmem:[#allocation1] sm:$0xff]
  %v835 = vld [vmem:[#allocation1 + $0x9] sm:$0xff]
  %v857 = vunpack.c.l.b16 %v794
  %v858 = vunpack.c.l.b16 %v795
  %v859 = vunpack.c.l.b16 %v796
  %v860 = vunpack.c.l.b16 %v797
  %v861 = vunpack.c.l.b16 %v798
  %v862 = vunpack.c.l.b16 %v799
  %v863 = vunpack.c.l.b16 %v800
  %v864 = vunpack.c.l.b16 %v801
  %v865 = vunpack.c.l.b16 %v802
  %v866 = vunpack.c.l.b16 %v803
  %v867 = vunpack.c.l.b16 %v804
  %v868 = vunpack.c.l.b16 %v805
  %v869 = vunpack.c.l.b16 %v806
  %v870 = vunpack.c.l.b16 %v807
  %v871 = vunpack.c.l.b16 %v808
  %v872 = vunpack.c.l.b16 %v809
  %v873 = vunpack.c.l.b16 %v810
  %v874 = vunpack.c.l.b16 %v811
  %v875 = vunpack.c.l.b16 %v812
  %v876 = vunpack.c.l.b16 %v813
  %v877 = vpack.c.b16 %v858, %v857
  %v878 = vpack.c.b16 %v860, %v859
  %v879 = vpack.c.b16 %v862, %v861
  %v880 = vpack.c.b16 %v864, %v863
  %v881 = vpack.c.b16 %v866, %v865
  %v882 = vpack.c.b16 %v868, %v867
  %v883 = vpack.c.b16 %v870, %v869
  %v884 = vpack.c.b16 %v872, %v871
  %v885 = vpack.c.b16 %v874, %v873
  %v886 = vpack.c.b16 %v876, %v875
  %v897 = vsel %vm246, %v835, 0
  %899 = vmatpush.bf16.msra.mxu0 %v884
  %900 = vmatpush.bf16.msra.mxu0 %v883
  %901 = vmatpush.bf16.msra.mxu0 %v882
  %902 = vmatpush.bf16.msra.mxu0 %v881
  %903 = vmatpush.bf16.msra.mxu0 %v880
  %904 = vmatpush.bf16.msra.mxu0 %v879
  %905 = vmatpush.bf16.msra.mxu0 %v878
  %906 = vmatpush.bf16.msra.mxu0 %v877
  %907 = vmatmul.bf16.gmra.mxu0 %v834
  %v908 = vpop.f32.mrf.mxu0
  %v909 = vadd.f32 %v817, %v908
  %v910 = vpop.f32.mrf.mxu0
  %v911 = vadd.f32 %v817, %v910
  %912 = vdwg.mxu0
  %913 = vmatpush.bf16.msra.mxu0 0
  %914 = vmatpush.bf16.msra.mxu0 0
  %915 = vmatpush.bf16.msra.mxu0 0
  %916 = vmatpush.bf16.msra.mxu0 0
  %917 = vmatpush.bf16.msra.mxu0 0
  %918 = vmatpush.bf16.msra.mxu0 0
  %919 = vmatpush.bf16.msra.mxu0 %v886
  %920 = vmatpush.bf16.msra.mxu0 %v885
  %921 = vmatmul.bf16.gmra.mxu0 %v897
  %v922 = vpop.f32.mrf.mxu0
  %v923 = vadd.f32 %v909, %v922
  %v924 = vpop.f32.mrf.mxu0
  %v925 = vadd.f32 %v911, %v924
  %926 = vdwg.mxu0
  %v927 = vmax.f32 %v923, 0.0
  %v928 = vmax.f32 %v925, 0.0
  %v929 = vpack.c.bf16 %v927, %v927
  %v930 = vpack.c.bf16 %v928, %v928
  %v933 = vrot.slane %v929, 3
  %v934 = vrot.slane %v930, 3
  %v937 = vsel %vm321, %v929, %v933
  %v938 = vsel %vm481, %v929, %v933
  %v940 = vrot.slane %v938, 1
  %v941 = vsel %vm485, %v929, %v933
  %v943 = vrot.slane %v941, 2
  %v944 = vsel %vm489, %v929, %v933
  %v946 = vrot.slane %v944, 3
  %v949 = vsel %vm321, %v930, %v934
  %v950 = vsel %vm481, %v930, %v934
  %v952 = vrot.slane %v950, 1
  %v953 = vsel %vm485, %v930, %v934
  %v955 = vrot.slane %v953, 2
  %v956 = vsel %vm489, %v930, %v934
  %v958 = vrot.slane %v956, 3
  %967 = vst.msk [vmem:[%s50] sm:$0x1] %vm21, %v937
  %968 = vst.msk [vmem:[%s50 + $0x1] sm:$0x1] %vm21, %v940
  %969 = vst.msk [vmem:[%s50 + $0x2] sm:$0x1] %vm21, %v943
  %970 = vst.msk [vmem:[%s50 + $0x3] sm:$0x1] %vm21, %v946
  %971 = vst.msk [vmem:[%s50 + $0x4] sm:$0x1] %vm21, %v949
  %972 = vst.msk [vmem:[%s50 + $0x5] sm:$0x1] %vm21, %v952
  %973 = vst.msk [vmem:[%s50 + $0x6] sm:$0x1] %vm21, %v955
  %974 = vst.msk [vmem:[%s50 + $0x7] sm:$0x1] %vm21, %v958
  %v975 = vld [vmem:[#allocation2] sm:$0x1]
  %v976 = vld [vmem:[#allocation2 + $0x1] sm:$0x1]
  %v977 = vld [vmem:[#allocation2 + $0x2] sm:$0x1]
  %v978 = vld [vmem:[#allocation2 + $0x3] sm:$0x1]
  %v979 = vld [vmem:[#allocation2 + $0x4] sm:$0x1]
  %v980 = vld [vmem:[#allocation2 + $0x5] sm:$0x1]
  %v981 = vld [vmem:[#allocation2 + $0x6] sm:$0x1]
  %v982 = vld [vmem:[#allocation2 + $0x7] sm:$0x1]
  %v983 = vld [vmem:[%s67] sm:$0x1]
  %v984 = vld [vmem:[%s67 + $0x1] sm:$0x1]
  %v985 = vld [vmem:[%s67 + $0x2] sm:$0x1]
  %v986 = vld [vmem:[%s67 + $0x3] sm:$0x1]
  %v987 = vld [vmem:[%s67 + $0x4] sm:$0x1]
  %v988 = vld [vmem:[%s67 + $0x5] sm:$0x1]
  %v989 = vld [vmem:[%s67 + $0x6] sm:$0x1]
  %v990 = vld [vmem:[%s67 + $0x7] sm:$0x1]
  %v991 = vld [vmem:[%s50] sm:$0x1]
  %v992 = vld [vmem:[%s50 + $0x1] sm:$0x1]
  %v993 = vld [vmem:[%s50 + $0x2] sm:$0x1]
  %v994 = vld [vmem:[%s50 + $0x3] sm:$0x1]
  %v995 = vld [vmem:[%s50 + $0x4] sm:$0x1]
  %v996 = vld [vmem:[%s50 + $0x5] sm:$0x1]
  %v997 = vld [vmem:[%s50 + $0x6] sm:$0x1]
  %v998 = vld [vmem:[%s50 + $0x7] sm:$0x1]
  %v999 = vld [vmem:[%s84] sm:$0x1]
  %v1000 = vld [vmem:[%s84 + $0x1] sm:$0x1]
  %v1001 = vld [vmem:[%s84 + $0x2] sm:$0x1]
  %v1002 = vld [vmem:[%s84 + $0x3] sm:$0x1]
  %v1003 = vld [vmem:[%s84 + $0x4] sm:$0x1]
  %v1004 = vld [vmem:[%s84 + $0x5] sm:$0x1]
  %v1005 = vld [vmem:[%s84 + $0x6] sm:$0x1]
  %v1006 = vld [vmem:[%s84 + $0x7] sm:$0x1]
  %v1007 = vld [vmem:[%s93] sm:$0x1]
  %v1008 = vld [vmem:[%s93 + $0x1] sm:$0x1]
  %v1009 = vld [vmem:[%s93 + $0x2] sm:$0x1]
  %v1010 = vld [vmem:[%s93 + $0x3] sm:$0x1]
  %v1011 = vld [vmem:[%s93 + $0x4] sm:$0x1]
  %v1012 = vld [vmem:[%s93 + $0x5] sm:$0x1]
  %v1013 = vld [vmem:[%s93 + $0x6] sm:$0x1]
  %v1014 = vld [vmem:[%s93 + $0x7] sm:$0x1]
  %1016 = vst [vmem:[#allocation1] ss:$9 sm:$0xff] %v983
  %v1017 = vld [vmem:[#allocation1] sm:$0xff]
  %1020 = vst [vmem:[#allocation1] ss:$9 sm:$0xff] %v984
  %v1021 = vld [vmem:[#allocation1] sm:$0xff]
  %1024 = vst [vmem:[#allocation1] ss:$9 sm:$0xff] %v985
  %v1025 = vld [vmem:[#allocation1] sm:$0xff]
  %1028 = vst [vmem:[#allocation1] ss:$9 sm:$0xff] %v986
  %v1029 = vld [vmem:[#allocation1] sm:$0xff]
  %1032 = vst [vmem:[#allocation1] ss:$9 sm:$0xff] %v987
  %v1033 = vld [vmem:[#allocation1] sm:$0xff]
  %1036 = vst [vmem:[#allocation1] ss:$9 sm:$0xff] %v988
  %v1037 = vld [vmem:[#allocation1] sm:$0xff]
  %1040 = vst [vmem:[#allocation1] ss:$9 sm:$0xff] %v989
  %v1041 = vld [vmem:[#allocation1] sm:$0xff]
  %1044 = vst [vmem:[#allocation1] ss:$9 sm:$0xff] %v990
  %v1045 = vld [vmem:[#allocation1] sm:$0xff]
  %1047 = vrot.lane.b32.xlu0 %v1017, 32
  %v1048 = vpop.permute.xlu0 %1047
  %1049 = vrot.lane.b32.xlu0 %v1021, 32
  %v1050 = vpop.permute.xlu0 %1049
  %1051 = vrot.lane.b32.xlu0 %v1025, 32
  %v1052 = vpop.permute.xlu0 %1051
  %1053 = vrot.lane.b32.xlu0 %v1029, 32
  %v1054 = vpop.permute.xlu0 %1053
  %1055 = vrot.lane.b32.xlu0 %v1033, 32
  %v1056 = vpop.permute.xlu0 %1055
  %1057 = vrot.lane.b32.xlu0 %v1037, 32
  %v1058 = vpop.permute.xlu0 %1057
  %1059 = vrot.lane.b32.xlu0 %v1041, 32
  %v1060 = vpop.permute.xlu0 %1059
  %1061 = vrot.lane.b32.xlu0 %v1045, 32
  %v1062 = vpop.permute.xlu0 %1061
  %1064 = vst [vmem:[#allocation1] ss:$9 sm:$0xff] %v991
  %v1065 = vld [vmem:[#allocation1] sm:$0xff]
  %1068 = vst [vmem:[#allocation1] ss:$9 sm:$0xff] %v992
  %v1069 = vld [vmem:[#allocation1] sm:$0xff]
  %1072 = vst [vmem:[#allocation1] ss:$9 sm:$0xff] %v993
  %v1073 = vld [vmem:[#allocation1] sm:$0xff]
  %1076 = vst [vmem:[#allocation1] ss:$9 sm:$0xff] %v994
  %v1077 = vld [vmem:[#allocation1] sm:$0xff]
  %1080 = vst [vmem:[#allocation1] ss:$9 sm:$0xff] %v995
  %v1081 = vld [vmem:[#allocation1] sm:$0xff]
  %1084 = vst [vmem:[#allocation1] ss:$9 sm:$0xff] %v996
  %v1085 = vld [vmem:[#allocation1] sm:$0xff]
  %1088 = vst [vmem:[#allocation1] ss:$9 sm:$0xff] %v997
  %v1089 = vld [vmem:[#allocation1] sm:$0xff]
  %1092 = vst [vmem:[#allocation1] ss:$9 sm:$0xff] %v998
  %v1093 = vld [vmem:[#allocation1] sm:$0xff]
  %1095 = vrot.lane.b32.xlu0 %v1065, 64
  %v1096 = vpop.permute.xlu0 %1095
  %1097 = vrot.lane.b32.xlu0 %v1069, 64
  %v1098 = vpop.permute.xlu0 %1097
  %1099 = vrot.lane.b32.xlu0 %v1073, 64
  %v1100 = vpop.permute.xlu0 %1099
  %1101 = vrot.lane.b32.xlu0 %v1077, 64
  %v1102 = vpop.permute.xlu0 %1101
  %1103 = vrot.lane.b32.xlu0 %v1081, 64
  %v1104 = vpop.permute.xlu0 %1103
  %1105 = vrot.lane.b32.xlu0 %v1085, 64
  %v1106 = vpop.permute.xlu0 %1105
  %1107 = vrot.lane.b32.xlu0 %v1089, 64
  %v1108 = vpop.permute.xlu0 %1107
  %1109 = vrot.lane.b32.xlu0 %v1093, 64
  %v1110 = vpop.permute.xlu0 %1109
  %1112 = vst [vmem:[#allocation1] ss:$9 sm:$0xff] %v999
  %v1113 = vld [vmem:[#allocation1] sm:$0xff]
  %1116 = vst [vmem:[#allocation1] ss:$9 sm:$0xff] %v1000
  %v1117 = vld [vmem:[#allocation1] sm:$0xff]
  %1120 = vst [vmem:[#allocation1] ss:$9 sm:$0xff] %v1001
  %v1121 = vld [vmem:[#allocation1] sm:$0xff]
  %1124 = vst [vmem:[#allocation1] ss:$9 sm:$0xff] %v1002
  %v1125 = vld [vmem:[#allocation1] sm:$0xff]
  %1128 = vst [vmem:[#allocation1] ss:$9 sm:$0xff] %v1003
  %v1129 = vld [vmem:[#allocation1] sm:$0xff]
  %1132 = vst [vmem:[#allocation1] ss:$9 sm:$0xff] %v1004
  %v1133 = vld [vmem:[#allocation1] sm:$0xff]
  %1136 = vst [vmem:[#allocation1] ss:$9 sm:$0xff] %v1005
  %v1137 = vld [vmem:[#allocation1] sm:$0xff]
  %1140 = vst [vmem:[#allocation1] ss:$9 sm:$0xff] %v1006
  %v1141 = vld [vmem:[#allocation1] sm:$0xff]
  %1143 = vrot.lane.b32.xlu0 %v1113, 96
  %v1144 = vpop.permute.xlu0 %1143
  %1145 = vrot.lane.b32.xlu0 %v1117, 96
  %v1146 = vpop.permute.xlu0 %1145
  %1147 = vrot.lane.b32.xlu0 %v1121, 96
  %v1148 = vpop.permute.xlu0 %1147
  %1149 = vrot.lane.b32.xlu0 %v1125, 96
  %v1150 = vpop.permute.xlu0 %1149
  %1151 = vrot.lane.b32.xlu0 %v1129, 96
  %v1152 = vpop.permute.xlu0 %1151
  %1153 = vrot.lane.b32.xlu0 %v1133, 96
  %v1154 = vpop.permute.xlu0 %1153
  %1155 = vrot.lane.b32.xlu0 %v1137, 96
  %v1156 = vpop.permute.xlu0 %1155
  %1157 = vrot.lane.b32.xlu0 %v1141, 96
  %v1158 = vpop.permute.xlu0 %1157
  %v1161 = vsel %vm246, %v975, %v1048
  %v1164 = vsel %vm246, %v976, %v1050
  %v1167 = vsel %vm246, %v977, %v1052
  %v1170 = vsel %vm246, %v978, %v1054
  %v1173 = vsel %vm246, %v979, %v1056
  %v1176 = vsel %vm246, %v980, %v1058
  %v1179 = vsel %vm246, %v981, %v1060
  %v1182 = vsel %vm246, %v982, %v1062
  %v1184 = vsel %vm271, %v1161, %v1096
  %v1186 = vsel %vm271, %v1164, %v1098
  %v1188 = vsel %vm271, %v1167, %v1100
  %v1190 = vsel %vm271, %v1170, %v1102
  %v1192 = vsel %vm271, %v1173, %v1104
  %v1194 = vsel %vm271, %v1176, %v1106
  %v1196 = vsel %vm271, %v1179, %v1108
  %v1198 = vsel %vm271, %v1182, %v1110
  %v1200 = vsel %vm288, %v1184, %v1144
  %v1202 = vsel %vm288, %v1186, %v1146
  %v1204 = vsel %vm288, %v1188, %v1148
  %v1206 = vsel %vm288, %v1190, %v1150
  %v1208 = vsel %vm288, %v1192, %v1152
  %v1210 = vsel %vm288, %v1194, %v1154
  %v1212 = vsel %vm288, %v1196, %v1156
  %v1214 = vsel %vm288, %v1198, %v1158
  %v1223 = vrot.slane %v1007, 7
  %v1224 = vrot.slane %v1008, 7
  %v1225 = vrot.slane %v1009, 7
  %v1226 = vrot.slane %v1010, 7
  %v1227 = vrot.slane %v1011, 7
  %v1228 = vrot.slane %v1012, 7
  %v1229 = vrot.slane %v1013, 7
  %v1230 = vrot.slane %v1014, 7
  %v1232 = vsel %vm321, %v1200, %v1223
  %v1234 = vsel %vm321, %v1202, %v1224
  %v1236 = vsel %vm321, %v1204, %v1225
  %v1238 = vsel %vm321, %v1206, %v1226
  %v1240 = vsel %vm321, %v1208, %v1227
  %v1242 = vsel %vm321, %v1210, %v1228
  %v1244 = vsel %vm321, %v1212, %v1229
  %v1246 = vsel %vm321, %v1214, %v1230
  %s1247 = scalar_lea.vmem %s1, 160
  %v1248 = vld [vmem:[%s1247] sm:$0xf]
  %v1249 = vld [vmem:[%s1247 + $0x4] sm:$0xf]
  %v1250 = vld [vmem:[%s1247 + $0x8] sm:$0xf]
  %v1251 = vld [vmem:[%s1247 + $0xc] sm:$0xf]
  %v1252 = vld [vmem:[%s1247 + $0x10] sm:$0xf]
  %v1253 = vld [vmem:[%s1247 + $0x14] sm:$0xf]
  %v1254 = vld [vmem:[%s1247 + $0x18] sm:$0xf]
  %v1255 = vld [vmem:[%s1247 + $0x1c] sm:$0xf]
  %v1256 = vld [vmem:[%s1247 + $0x20] sm:$0xf]
  %v1257 = vld [vmem:[%s1247 + $0x24] sm:$0xf]
  %v1258 = vld [vmem:[%s1247 + $0x28] sm:$0xf]
  %v1259 = vld [vmem:[%s1247 + $0x2c] sm:$0xf]
  %v1260 = vld [vmem:[%s1247 + $0x30] sm:$0xf]
  %v1261 = vld [vmem:[%s1247 + $0x34] sm:$0xf]
  %v1262 = vld [vmem:[%s1247 + $0x38] sm:$0xf]
  %v1263 = vld [vmem:[%s1247 + $0x3c] sm:$0xf]
  %v1264 = vld [vmem:[%s1247 + $0x40] sm:$0xf]
  %v1265 = vld [vmem:[%s1247 + $0x44] sm:$0xf]
  %v1266 = vld [vmem:[%s1247 + $0x48] sm:$0xf]
  %v1267 = vld [vmem:[%s1247 + $0x4c] sm:$0xf]
  %s1268 = scalar_lea.vmem %s2, 2
  %v1269 = vld [vmem:[%s1268] sm:$0x1]
  %v1271 = vperm.slane %v1269, 0
  %1273 = vst [vmem:[#allocation1] ss:$9 sm:$0xff] %v1232
  %s1274 = scalar_lea.vmem [#allocation1], 1
  %1275 = vst [vmem:[%s1274] ss:$9 sm:$0xff] %v1234
  %s1276 = scalar_lea.vmem [#allocation1], 2
  %1277 = vst [vmem:[%s1276] ss:$9 sm:$0xff] %v1236
  %s1278 = scalar_lea.vmem [#allocation1], 3
  %1279 = vst [vmem:[%s1278] ss:$9 sm:$0xff] %v1238
  %s1280 = scalar_lea.vmem [#allocation1], 4
  %1281 = vst [vmem:[%s1280] ss:$9 sm:$0xff] %v1240
  %s1282 = scalar_lea.vmem [#allocation1], 5
  %1283 = vst [vmem:[%s1282] ss:$9 sm:$0xff] %v1242
  %s1284 = scalar_lea.vmem [#allocation1], 6
  %1285 = vst [vmem:[%s1284] ss:$9 sm:$0xff] %v1244
  %s1286 = scalar_lea.vmem [#allocation1], 7
  %1287 = vst [vmem:[%s1286] ss:$9 sm:$0xff] %v1246
  %v1288 = vld [vmem:[#allocation1] sm:$0xff]
  %v1289 = vld [vmem:[#allocation1 + $0x9] sm:$0xff]
  %v1311 = vunpack.c.l.b16 %v1248
  %v1312 = vunpack.c.l.b16 %v1249
  %v1313 = vunpack.c.l.b16 %v1250
  %v1314 = vunpack.c.l.b16 %v1251
  %v1315 = vunpack.c.l.b16 %v1252
  %v1316 = vunpack.c.l.b16 %v1253
  %v1317 = vunpack.c.l.b16 %v1254
  %v1318 = vunpack.c.l.b16 %v1255
  %v1319 = vunpack.c.l.b16 %v1256
  %v1320 = vunpack.c.l.b16 %v1257
  %v1321 = vunpack.c.l.b16 %v1258
  %v1322 = vunpack.c.l.b16 %v1259
  %v1323 = vunpack.c.l.b16 %v1260
  %v1324 = vunpack.c.l.b16 %v1261
  %v1325 = vunpack.c.l.b16 %v1262
  %v1326 = vunpack.c.l.b16 %v1263
  %v1327 = vunpack.c.l.b16 %v1264
  %v1328 = vunpack.c.l.b16 %v1265
  %v1329 = vunpack.c.l.b16 %v1266
  %v1330 = vunpack.c.l.b16 %v1267
  %v1331 = vpack.c.b16 %v1312, %v1311
  %v1332 = vpack.c.b16 %v1314, %v1313
  %v1333 = vpack.c.b16 %v1316, %v1315
  %v1334 = vpack.c.b16 %v1318, %v1317
  %v1335 = vpack.c.b16 %v1320, %v1319
  %v1336 = vpack.c.b16 %v1322, %v1321
  %v1337 = vpack.c.b16 %v1324, %v1323
  %v1338 = vpack.c.b16 %v1326, %v1325
  %v1339 = vpack.c.b16 %v1328, %v1327
  %v1340 = vpack.c.b16 %v1330, %v1329
  %v1351 = vsel %vm246, %v1289, 0
  %1353 = vmatpush.bf16.msra.mxu0 %v1338
  %1354 = vmatpush.bf16.msra.mxu0 %v1337
  %1355 = vmatpush.bf16.msra.mxu0 %v1336
  %1356 = vmatpush.bf16.msra.mxu0 %v1335
  %1357 = vmatpush.bf16.msra.mxu0 %v1334
  %1358 = vmatpush.bf16.msra.mxu0 %v1333
  %1359 = vmatpush.bf16.msra.mxu0 %v1332
  %1360 = vmatpush.bf16.msra.mxu0 %v1331
  %1361 = vmatmul.bf16.gmra.mxu0 %v1288
  %v1362 = vpop.f32.mrf.mxu0
  %v1363 = vadd.f32 %v1271, %v1362
  %v1364 = vpop.f32.mrf.mxu0
  %v1365 = vadd.f32 %v1271, %v1364
  %1366 = vdwg.mxu0
  %1367 = vmatpush.bf16.msra.mxu0 0
  %1368 = vmatpush.bf16.msra.mxu0 0
  %1369 = vmatpush.bf16.msra.mxu0 0
  %1370 = vmatpush.bf16.msra.mxu0 0
  %1371 = vmatpush.bf16.msra.mxu0 0
  %1372 = vmatpush.bf16.msra.mxu0 0
  %1373 = vmatpush.bf16.msra.mxu0 %v1340
  %1374 = vmatpush.bf16.msra.mxu0 %v1339
  %1375 = vmatmul.bf16.gmra.mxu0 %v1351
  %v1376 = vpop.f32.mrf.mxu0
  %v1377 = vadd.f32 %v1363, %v1376
  %v1378 = vpop.f32.mrf.mxu0
  %v1379 = vadd.f32 %v1365, %v1378
  %1380 = vdwg.mxu0
  %v1381 = vmax.f32 %v1377, 0.0
  %v1382 = vmax.f32 %v1379, 0.0
  %v1383 = vpack.c.bf16 %v1381, %v1381
  %v1384 = vpack.c.bf16 %v1382, %v1382
  %v1387 = vrot.slane %v1383, 3
  %v1388 = vrot.slane %v1384, 3
  %v1391 = vsel %vm321, %v1383, %v1387
  %v1392 = vsel %vm481, %v1383, %v1387
  %v1394 = vrot.slane %v1392, 1
  %v1395 = vsel %vm485, %v1383, %v1387
  %v1397 = vrot.slane %v1395, 2
  %v1398 = vsel %vm489, %v1383, %v1387
  %v1400 = vrot.slane %v1398, 3
  %v1403 = vsel %vm321, %v1384, %v1388
  %v1404 = vsel %vm481, %v1384, %v1388
  %v1406 = vrot.slane %v1404, 1
  %v1407 = vsel %vm485, %v1384, %v1388
  %v1409 = vrot.slane %v1407, 2
  %v1410 = vsel %vm489, %v1384, %v1388
  %v1412 = vrot.slane %v1410, 3
  %1421 = vst.msk [vmem:[%s50] sm:$0x1] %vm21, %v1391
  %1422 = vst.msk [vmem:[%s50 + $0x1] sm:$0x1] %vm21, %v1394
  %1423 = vst.msk [vmem:[%s50 + $0x2] sm:$0x1] %vm21, %v1397
  %1424 = vst.msk [vmem:[%s50 + $0x3] sm:$0x1] %vm21, %v1400
  %1425 = vst.msk [vmem:[%s50 + $0x4] sm:$0x1] %vm21, %v1403
  %1426 = vst.msk [vmem:[%s50 + $0x5] sm:$0x1] %vm21, %v1406
  %1427 = vst.msk [vmem:[%s50 + $0x6] sm:$0x1] %vm21, %v1409
  %1428 = vst.msk [vmem:[%s50 + $0x7] sm:$0x1] %vm21, %v1412
  %v1429 = vld [vmem:[%s3] sm:$0xf]
  %v1430 = vld [vmem:[%s3 + $0x4] sm:$0xf]
  %v1431 = vld [vmem:[%s3 + $0x8] sm:$0xf]
  %v1432 = vld [vmem:[%s3 + $0xc] sm:$0xf]
  %v1433 = vld [vmem:[%s3 + $0x10] sm:$0xf]
  %v1434 = vld [vmem:[%s3 + $0x14] sm:$0xf]
  %v1435 = vld [vmem:[%s3 + $0x18] sm:$0xf]
  %v1436 = vld [vmem:[%s3 + $0x1c] sm:$0xf]
  %v1437 = vld [vmem:[%s3 + $0x20] sm:$0xf]
  %v1438 = vld [vmem:[%s3 + $0x24] sm:$0xf]
  %v1439 = vld [vmem:[%s3 + $0x28] sm:$0xf]
  %v1440 = vld [vmem:[%s3 + $0x2c] sm:$0xf]
  %v1441 = vld [vmem:[%s4] sm:$0x1]
  loop: start=0, step=1, limit=8
  $region22: #{tacotron2_forward.3} parent=0 // loop_pre_header
    _
  $region23: #{tacotron2_forward.3} parent=0 // loop_header
    %s1443 = sphi 0, %s1447
    %p1444 = scmp.ge.s32.totalorder %s1443, 8
    %v1448 = vphi 0.0, %v1569
    %v1449 = vphi 0.0, %v1563
  $region24: #{tacotron2_forward.3} parent=0 // loop_header_branch
    %1446 = sbr.rel (%p1444) target = $region28
  $region25: #{tacotron2_forward.3} parent=0 // loop_body
    %s1450 = sadd.s32 %s1443, 2
    %s1451 = scalar_lea.vmem [#allocation2], %s1450
    %v1452 = vld [vmem:[%s1451] sm:$0x1]
    %s1453 = ssub.s32 9, %s1443
    %s1454 = scalar_lea.vmem [#allocation2], %s1453
    %v1455 = vld [vmem:[%s1454] sm:$0x1]
    %v1456 = vpack.c.bf16 %v1448, %v1448
    %v1458 = vunpack.c.l.b16 %v1456
    %v1459 = vpack.c.b16 %v1458, %v1458
    %1460 = vrot.lane.b32.xlu0 %v1459, 64
    %v1461 = vpop.permute.xlu0 %1460
    %1463 = vst [vmem:[#allocation1] ss:$9 sm:$0xff] %v1455
    %v1464 = vld [vmem:[#allocation1] sm:$0xff]
    %1466 = vrot.lane.b32.xlu0 %v1464, 48
    %v1467 = vpop.permute.xlu0 %1466
    %1468 = vrot.lane.b32.xlu0 %v1459, 96
    %v1469 = vpop.permute.xlu0 %1468
    %v1472 = vsel %vm246, %v1452, %v1461
    %vm1473 = vcmask 392192
    %v1475 = vsel %vm1473, %v1472, %v1467
    %vm1476 = vcmask 654336
    %v1478 = vsel %vm1476, %v1475, %v1469
    %v1480 = vperm.slane %v1441, 0
    %v1494 = vunpack.c.l.b16 %v1429
    %v1495 = vunpack.c.l.b16 %v1430
    %v1496 = vunpack.c.l.b16 %v1431
    %v1497 = vunpack.c.l.b16 %v1432
    %v1498 = vunpack.c.l.b16 %v1433
    %v1499 = vunpack.c.l.b16 %v1434
    %v1500 = vunpack.c.l.b16 %v1435
    %v1501 = vunpack.c.l.b16 %v1436
    %v1502 = vunpack.c.l.b16 %v1437
    %v1503 = vunpack.c.l.b16 %v1438
    %v1504 = vunpack.c.l.b16 %v1439
    %v1505 = vunpack.c.l.b16 %v1440
    %v1506 = vpack.c.b16 %v1495, %v1494
    %v1507 = vpack.c.b16 %v1497, %v1496
    %v1508 = vpack.c.b16 %v1499, %v1498
    %v1509 = vpack.c.b16 %v1501, %v1500
    %v1510 = vpack.c.b16 %v1503, %v1502
    %v1511 = vpack.c.b16 %v1505, %v1504
    %v1518 = vsel %vm288, %v1478, 0
    %1520 = vmatpush.bf16.msra.mxu0 0
    %1521 = vmatpush.bf16.msra.mxu0 0
    %1522 = vmatpush.bf16.msra.mxu0 %v1511
    %1523 = vmatpush.bf16.msra.mxu0 %v1510
    %1524 = vmatpush.bf16.msra.mxu0 %v1509
    %1525 = vmatpush.bf16.msra.mxu0 %v1508
    %1526 = vmatpush.bf16.msra.mxu0 %v1507
    %1527 = vmatpush.bf16.msra.mxu0 %v1506
    %1528 = vmatmul.bf16.gmra.mxu0 %v1518
    %v1529 = vpop.f32.mrf.mxu0
    %v1530 = vadd.f32 %v1480, %v1529
    %v1531 = vpop.f32.mrf.mxu0
    %1532 = vdwg.mxu0
    %v1533 = vxor.u32 %v1530, 2147483648
    %v1534 = vmul.f32 %v1533, 1.442695
    %v1535 = vpow.pop %v1534
    %v1536 = vadd.f32 %v1535, 1.0
    %v1537 = vrcp.pop %v1536
    %v1538 = vmul.f32 %v1536, %v1537
    %v1539 = vsub.f32 1.0, %v1538
    %v1540 = vmul.f32 %v1537, %v1539
    %v1541 = vadd.f32 %v1537, %v1540
    %vm1542 = vweird.f32 %v1536
    %vm1543 = vweird.f32 %v1537
    %vm1544 = vmor %vm1542, %vm1543
    %v1545 = vsel %vm1544, %v1537, %v1541
    %v1546 = vand.u32 2147483647, %v1536
    %vm1547 = vcmp.eq.f32.partialorder %v1546, 8.507059e+37
    %v1548 = vand.u32 %v1536, 2147483648
    %v1549 = vor.u32 1.1754944e-38, %v1548
    %v1550 = vsel %vm1547, %v1549, %v1545
    %v1551 = vmul.f32 1.0, %v1550
    %v1552 = vtanh.pop %v1530
    %v1553 = vmul.f32 %v1551, %v1449
    %1555 = vrot.lane.b32.xlu0 %v1552, 64
    %v1556 = vpop.permute.xlu0 %1555
    %v1558 = vmul.f32 %v1551, %v1556
    %1560 = vrot.lane.b32.xlu0 %v1558, 32
    %v1561 = vpop.permute.xlu0 %1560
    %v1563 = vadd.f32 %v1553, %v1561
    %v1564 = vtanh.pop %v1563
    %1566 = vrot.lane.b32.xlu0 %v1564, 64
    %v1567 = vpop.permute.xlu0 %1566
    %v1569 = vmul.f32 %v1551, %v1567
    %1571 = vrot.lane.b32.xlu0 %v1569, 32
    %v1572 = vpop.permute.xlu0 %1571
    %s1574 = smul.u32 %s1443, 2
    %s1575 = scalar_lea.vmem [#allocation3], %s1574
    %vm1576 = vcmask 123904
    %1577 = vst.msk [vmem:[%s1575] sm:$0x3] %vm1576, %v1572
    %s1578 = ssub.s32 7, %s1443
    %1579 = vrot.lane.b32.xlu0 %v1569, 16
    %v1580 = vpop.permute.xlu0 %1579
    %s1582 = smul.u32 %s1578, 2
    %s1583 = scalar_lea.vmem [#allocation4], %s1582
    %1584 = vst.msk [vmem:[%s1583] sm:$0x3] %vm1576, %v1580
  $region26: #{tacotron2_forward.3} parent=0 // loop_footer
    %s1447 = sadd.s32 1, %s1443
  $region27: #{tacotron2_forward.3} parent=0 // loop_footer_branch
    %1442 = sbr.rel target = $region23
  $region28: #{tacotron2_forward.3} parent=0 // loop_exit
    _
  %v1585 = vld [vmem:[#allocation3] sm:$0x3]
  %v1586 = vld [vmem:[#allocation3 + $0x2] sm:$0x3]
  %v1587 = vld [vmem:[#allocation3 + $0x4] sm:$0x3]
  %v1588 = vld [vmem:[#allocation3 + $0x6] sm:$0x3]
  %v1589 = vld [vmem:[#allocation3 + $0x8] sm:$0x3]
  %v1590 = vld [vmem:[#allocation3 + $0xa] sm:$0x3]
  %v1591 = vld [vmem:[#allocation3 + $0xc] sm:$0x3]
  %v1592 = vld [vmem:[#allocation3 + $0xe] sm:$0x3]
  %v1593 = vld [vmem:[#allocation4] sm:$0x3]
  %v1594 = vld [vmem:[#allocation4 + $0x2] sm:$0x3]
  %v1595 = vld [vmem:[#allocation4 + $0x4] sm:$0x3]
  %v1596 = vld [vmem:[#allocation4 + $0x6] sm:$0x3]
  %v1597 = vld [vmem:[#allocation4 + $0x8] sm:$0x3]
  %v1598 = vld [vmem:[#allocation4 + $0xa] sm:$0x3]
  %v1599 = vld [vmem:[#allocation4 + $0xc] sm:$0x3]
  %v1600 = vld [vmem:[#allocation4 + $0xe] sm:$0x3]
  %1609 = vrot.lane.b32.xlu0 %v1593, 16
  %v1610 = vpop.permute.xlu0 %1609
  %1611 = vrot.lane.b32.xlu0 %v1594, 16
  %v1612 = vpop.permute.xlu0 %1611
  %1613 = vrot.lane.b32.xlu0 %v1595, 16
  %v1614 = vpop.permute.xlu0 %1613
  %1615 = vrot.lane.b32.xlu0 %v1596, 16
  %v1616 = vpop.permute.xlu0 %1615
  %1617 = vrot.lane.b32.xlu0 %v1597, 16
  %v1618 = vpop.permute.xlu0 %1617
  %1619 = vrot.lane.b32.xlu0 %v1598, 16
  %v1620 = vpop.permute.xlu0 %1619
  %1621 = vrot.lane.b32.xlu0 %v1599, 16
  %v1622 = vpop.permute.xlu0 %1621
  %1623 = vrot.lane.b32.xlu0 %v1600, 16
  %v1624 = vpop.permute.xlu0 %1623
  %vm1633 = vcmask 130048
  %v1634 = vsel %vm1633, %v1585, %v1610
  %v1635 = vsel %vm1633, %v1586, %v1612
  %v1636 = vsel %vm1633, %v1587, %v1614
  %v1637 = vsel %vm1633, %v1588, %v1616
  %v1638 = vsel %vm1633, %v1589, %v1618
  %v1639 = vsel %vm1633, %v1590, %v1620
  %v1640 = vsel %vm1633, %v1591, %v1622
  %v1641 = vsel %vm1633, %v1592, %v1624
  %v1642 = vpack.c.bf16 %v1634, %v1634
  %v1643 = vpack.c.bf16 %v1635, %v1635
  %v1644 = vpack.c.bf16 %v1636, %v1636
  %v1645 = vpack.c.bf16 %v1637, %v1637
  %v1646 = vpack.c.bf16 %v1638, %v1638
  %v1647 = vpack.c.bf16 %v1639, %v1639
  %v1648 = vpack.c.bf16 %v1640, %v1640
  %v1649 = vpack.c.bf16 %v1641, %v1641
  %1650 = vst.msk [vmem:[%s5] sm:$0x1] %vm21, %v1642
  %1651 = vst.msk [vmem:[%s5 + $0x1] sm:$0x1] %vm21, %v1643
  %1652 = vst.msk [vmem:[%s5 + $0x2] sm:$0x1] %vm21, %v1644
  %1653 = vst.msk [vmem:[%s5 + $0x3] sm:$0x1] %vm21, %v1645
  %1654 = vst.msk [vmem:[%s5 + $0x4] sm:$0x1] %vm21, %v1646
  %1655 = vst.msk [vmem:[%s5 + $0x5] sm:$0x1] %vm21, %v1647
  %1656 = vst.msk [vmem:[%s5 + $0x6] sm:$0x1] %vm21, %v1648
  %1657 = vst.msk [vmem:[%s5 + $0x7] sm:$0x1] %vm21, %v1649
  // Predicated region
  $region29: #{tacotron2_forward.3} parent=0 // pred_check
    _
  $region30: #{tacotron2_forward.3} parent=0 // pred_check_branch
    %1659 = sbr.rel (0) target = $region32
  $region31: #{tacotron2_forward.3} parent=0 // pred_region
    _
  $region32: #{tacotron2_forward.3} parent=0 // pred_fallthru
    _
  // Predicated region
  $region33: #{tacotron2_forward.3} parent=0 // pred_check
    _
  $region34: #{tacotron2_forward.3} parent=0 // pred_check_branch
    %1661 = sbr.rel (0) target = $region36
  $region35: #{tacotron2_forward.3} parent=0 // pred_region
    _
  $region36: #{tacotron2_forward.3} parent=0 // pred_fallthru
    _

// kernel: tacotron2_forward.5
$region0: #{tacotron2_forward.5}
  #allocation0 [shape = 'u32[]', space=smem, size = 0x4, offset = 0x4, fixed_abs, tag = 'smem constant byte address 0x4 - core index']
  #allocation1 [shape = 'u32[72,128]{1,0:T(1,128)}', space=vmem, size = 0x9000, scoped, tag = 'internal scratch']
  #allocation2 [shape = 'bf16[2,10,16]{2,1,0:T(8,128)(2,1)}', space=vmem, size = 0x2000, scoped, tag = 'scratch operand']
  %s0 = inlined_call_operand.vmem [shape: f32[2,6,8], index: 0, kind: input, shape index: {}]
  %s1 = inlined_call_operand.vmem [shape: f32[2,6], index: 1, kind: input, shape index: {}]
  %s2 = inlined_call_operand.vmem [shape: f32[2,6], index: 2, kind: input, shape index: {}]
  %s3 = inlined_call_operand.vmem [shape: bf16[5,80,16], index: 3, kind: input, shape index: {}]
  %s4 = inlined_call_operand.vmem [shape: f32[5,1,16], index: 4, kind: input, shape index: {}]
  %s5 = inlined_call_operand.vmem [shape: f32[2,6,8], index: 5, kind: output, shape index: {0}]
  %s6 = inlined_call_operand.vmem [shape: f32[2,6,8], index: 6, kind: output, shape index: {1}]
  %s7 = inlined_call_operand.hbm [shape: f32[2,6], index: 7, kind: output, shape index: {2}]
  %8 = xla_tuple %s5, %s6, %s7
  %s9 = sld [smem:[#allocation0]]
  $region46: #{tacotron2_forward.5} parent=0
    _
  %s11 = ssub.s32 1, %s9
  %s12 = scalar_select 0, %s11, %s9
  $region1: #{tacotron2_forward.5} parent=0
    #allocation3 [shape = 'u8[1024]{0}', space=vmem, size = 0x400, scoped, tag = 'output window, operand 2, single buffered']
    #allocation4 [shape = 's32[1]{0}', space=sflag, size = 0x4, scoped, tag = 'scoped memory for tacotron2_forward.5']
    %13 = vsyncpa [#allocation4], 0
    // Predicated region
    $region2: #{tacotron2_forward.5} parent=1 // pred_check
      _
    $region3: #{tacotron2_forward.5} parent=1 // pred_check_branch
      %15 = sbr.rel (0) target = $region5
    $region4: #{tacotron2_forward.5} parent=1 // pred_region
      _
    $region5: #{tacotron2_forward.5} parent=1 // pred_fallthru
      _
    // Predicated region
    $region6: #{tacotron2_forward.5} parent=1 // pred_check
      _
    $region7: #{tacotron2_forward.5} parent=1 // pred_check_branch
      %17 = sbr.rel (0) target = $region9
    $region8: #{tacotron2_forward.5} parent=1 // pred_region
      _
    $region9: #{tacotron2_forward.5} parent=1 // pred_fallthru
      _
    // Predicated region
    $region10: #{tacotron2_forward.5} parent=1 // pred_check
      _
    $region11: #{tacotron2_forward.5} parent=1 // pred_check_branch
      %19 = sbr.rel (0) target = $region13
    $region12: #{tacotron2_forward.5} parent=1 // pred_region
      _
    $region13: #{tacotron2_forward.5} parent=1 // pred_fallthru
      _
    // Predicated region
    $region14: #{tacotron2_forward.5} parent=1 // pred_check
      _
    $region15: #{tacotron2_forward.5} parent=1 // pred_check_branch
      %21 = sbr.rel (0) target = $region17
    $region16: #{tacotron2_forward.5} parent=1 // pred_region
      _
    $region17: #{tacotron2_forward.5} parent=1 // pred_fallthru
      _
    // Predicated region
    $region18: #{tacotron2_forward.5} parent=1 // pred_check
      _
    $region19: #{tacotron2_forward.5} parent=1 // pred_check_branch
      %23 = sbr.rel (0) target = $region21
    $region20: #{tacotron2_forward.5} parent=1 // pred_region
      _
    $region21: #{tacotron2_forward.5} parent=1 // pred_fallthru
      _
    %vm25 = vcmask 125952
    %26 = vst.msk [vmem:[#allocation2] sm:$0xf] %vm25, 0
    %vm27 = vcmask 122880
    %28 = vst.msk [vmem:[#allocation2 + $0x4] sm:$0x1] %vm27, 0
    %29 = vst.msk [vmem:[#allocation2 + $0x8] sm:$0xf] %vm25, 0
    %30 = vst.msk [vmem:[#allocation2 + $0xc] sm:$0x1] %vm27, 0
    %v31 = vld [vmem:[%s0] sm:$0x3f]
    %v32 = vld [vmem:[%s0 + $0x8] sm:$0x3f]
    %v33 = vpack.c.bf16 %v31, %v31
    %v34 = vpack.c.bf16 %v32, %v32
    %v37 = vrot.slane %v33, 7
    %v38 = vrot.slane %v34, 7
    %vm41 = vcmask 60417
    %42 = vst.msk [vmem:[#allocation2] sm:$0xe] %vm41, %v37
    %43 = vst.msk [vmem:[#allocation2 + $0x8] sm:$0xe] %vm41, %v38
    %v44 = vld [vmem:[#allocation2] sm:$0x7]
    %v45 = vld [vmem:[#allocation2 + $0x8] sm:$0x7]
    %v46 = vld [vmem:[#allocation2] sm:$0xf]
    %v47 = vld [vmem:[#allocation2 + $0x8] sm:$0xf]
    %v48 = vld [vmem:[#allocation2] sm:$0xe]
    %v49 = vld [vmem:[#allocation2 + $0x8] sm:$0xe]
    %v50 = vld [vmem:[#allocation2 + $0x4] sm:$0x1]
    %v51 = vld [vmem:[#allocation2 + $0xc] sm:$0x1]
    %v52 = vld [vmem:[#allocation2] sm:$0xc]
    %v53 = vld [vmem:[#allocation2 + $0x8] sm:$0xc]
    %v56 = vunpack.c.l.b16 %v46
    %v57 = vunpack.c.l.b16 %v47
    %v58 = vpack.c.b16 %v56, %v56
    %v59 = vpack.c.b16 %v57, %v57
    %v61 = vshrl.u32 %v58, 16
    %v63 = vshll.u32 %v58, 16
    %v65 = vrot.slane %v63, 1
    %v66 = vor.u32 %v61, %v65
    %v68 = vshrl.u32 %v59, 16
    %v70 = vshll.u32 %v59, 16
    %v72 = vrot.slane %v70, 1
    %v73 = vor.u32 %v68, %v72
    %74 = vrot.lane.b32.xlu0 %v66, 16
    %v75 = vpop.permute.xlu0 %74
    %76 = vrot.lane.b32.xlu0 %v73, 16
    %v77 = vpop.permute.xlu0 %76
    %v80 = vunpack.c.l.b16 %v48
    %v81 = vunpack.c.l.b16 %v49
    %v82 = vpack.c.b16 %v80, %v80
    %v83 = vpack.c.b16 %v81, %v81
    %v84 = vrot.slane %v82, 1
    %v85 = vrot.slane %v83, 1
    %86 = vrot.lane.b32.xlu0 %v84, 32
    %v87 = vpop.permute.xlu0 %86
    %88 = vrot.lane.b32.xlu0 %v85, 32
    %v89 = vpop.permute.xlu0 %88
    %v92 = vunpack.c.l.b16 %v50
    %v93 = vunpack.c.l.b16 %v51
    %v94 = vpack.c.b16 %v92, %v80
    %v95 = vpack.c.b16 %v93, %v81
    %v97 = vshrl.u32 %v94, 16
    %v99 = vrot.slane %v97, 1
    %v100 = vshll.u32 %v94, 16
    %v102 = vrot.slane %v100, 2
    %v103 = vor.u32 %v99, %v102
    %v105 = vshrl.u32 %v95, 16
    %v107 = vrot.slane %v105, 1
    %v108 = vshll.u32 %v95, 16
    %v110 = vrot.slane %v108, 2
    %v111 = vor.u32 %v107, %v110
    %112 = vrot.lane.b32.xlu0 %v103, 48
    %v113 = vpop.permute.xlu0 %112
    %114 = vrot.lane.b32.xlu0 %v111, 48
    %v115 = vpop.permute.xlu0 %114
    %v118 = vunpack.c.l.b16 %v52
    %v119 = vunpack.c.l.b16 %v53
    %v120 = vpack.c.b16 %v92, %v118
    %v121 = vpack.c.b16 %v93, %v119
    %v122 = vrot.slane %v120, 2
    %v123 = vrot.slane %v121, 2
    %124 = vrot.lane.b32.xlu0 %v122, 64
    %v125 = vpop.permute.xlu0 %124
    %126 = vrot.lane.b32.xlu0 %v123, 64
    %v127 = vpop.permute.xlu0 %126
    %vm128 = vcmask 130048
    %v131 = vsel %vm128, %v44, %v75
    %v134 = vsel %vm128, %v45, %v77
    %vm135 = vcmask 261120
    %v137 = vsel %vm135, %v131, %v87
    %v139 = vsel %vm135, %v134, %v89
    %vm140 = vcmask 392192
    %v142 = vsel %vm140, %v137, %v113
    %v144 = vsel %vm140, %v139, %v115
    %vm145 = vcmask 523264
    %v147 = vsel %vm145, %v142, %v125
    %v149 = vsel %vm145, %v144, %v127
    %v152 = vrot.slane %v147, 1
    %v153 = vrot.slane %v147, 2
    %v154 = vrot.slane %v149, 1
    %v155 = vrot.slane %v149, 2
    %v156 = vld [vmem:[%s3] sm:$0xf]
    %v157 = vld [vmem:[%s3 + $0x4] sm:$0xf]
    %v158 = vld [vmem:[%s3 + $0x8] sm:$0xf]
    %v159 = vld [vmem:[%s3 + $0xc] sm:$0xf]
    %v160 = vld [vmem:[%s3 + $0x10] sm:$0xf]
    %v161 = vld [vmem:[%s3 + $0x14] sm:$0xf]
    %v162 = vld [vmem:[%s3 + $0x18] sm:$0xf]
    %v163 = vld [vmem:[%s3 + $0x1c] sm:$0xf]
    %v164 = vld [vmem:[%s3 + $0x20] sm:$0xf]
    %v165 = vld [vmem:[%s3 + $0x24] sm:$0xf]
    %v166 = vld [vmem:[%s4] sm:$0x1]
    %v168 = vperm.slane %v166, 0
    %170 = vst [vmem:[#allocation1] ss:$9 sm:$0xff] %v147
    %s172 = scalar_lea.vmem [#allocation1], 1
    %173 = vst [vmem:[%s172] ss:$9 sm:$0xff] %v152
    %s175 = scalar_lea.vmem [#allocation1], 2
    %176 = vst [vmem:[%s175] ss:$9 sm:$0xff] %v153
    %s177 = scalar_lea.vmem [#allocation1], 3
    %178 = vst [vmem:[%s177] ss:$9 sm:$0xff] %v149
    %s180 = scalar_lea.vmem [#allocation1], 4
    %181 = vst [vmem:[%s180] ss:$9 sm:$0xff] %v154
    %s183 = scalar_lea.vmem [#allocation1], 5
    %184 = vst [vmem:[%s183] ss:$9 sm:$0xff] %v155
    %v185 = vld [vmem:[#allocation1] sm:$0xff]
    %v196 = vunpack.c.l.b16 %v156
    %v197 = vunpack.c.l.b16 %v157
    %v198 = vunpack.c.l.b16 %v158
    %v199 = vunpack.c.l.b16 %v159
    %v200 = vunpack.c.l.b16 %v160
    %v201 = vunpack.c.l.b16 %v161
    %v202 = vunpack.c.l.b16 %v162
    %v203 = vunpack.c.l.b16 %v163
    %v204 = vunpack.c.l.b16 %v164
    %v205 = vunpack.c.l.b16 %v165
    %v206 = vpack.c.b16 %v197, %v196
    %v207 = vpack.c.b16 %v199, %v198
    %v208 = vpack.c.b16 %v201, %v200
    %v209 = vpack.c.b16 %v203, %v202
    %v210 = vpack.c.b16 %v205, %v204
    %vm216 = vcmask 654336
    %v217 = vsel %vm216, %v185, 0
    %219 = vmatpush.bf16.msra.mxu0 0
    %220 = vmatpush.bf16.msra.mxu0 0
    %221 = vmatpush.bf16.msra.mxu0 0
    %222 = vmatpush.bf16.msra.mxu0 %v210
    %223 = vmatpush.bf16.msra.mxu0 %v209
    %224 = vmatpush.bf16.msra.mxu0 %v208
    %225 = vmatpush.bf16.msra.mxu0 %v207
    %226 = vmatpush.bf16.msra.mxu0 %v206
    %227 = vmatmul.bf16.gmra.mxu0 %v217
    %v228 = vpop.f32.mrf.mxu0
    %v229 = vadd.f32 %v168, %v228
    %v230 = vpop.f32.mrf.mxu0
    %v231 = vadd.f32 %v168, %v230
    %232 = vdwg.mxu0
    %v233 = vtanh.pop %v229
    %v234 = vtanh.pop %v231
    %v237 = vrot.slane %v233, 2
    %v238 = vrot.slane %v233, 4
    %v239 = vrot.slane %v233, 6
    %v240 = vrot.slane %v234, 2
    %241 = vst [vmem:[#allocation1] ss:$4 sm:$0xff] %v233
    %s242 = scalar_lea.vmem [#allocation1], 1
    %243 = vst [vmem:[%s242] ss:$4 sm:$0xff] %v237
    %s244 = scalar_lea.vmem [#allocation1], 2
    %245 = vst [vmem:[%s244] ss:$4 sm:$0xff] %v238
    %v246 = vld.sshfl [vmem:[#allocation1] sm:$0xff pattern:$0x73625140]
    %s247 = scalar_lea.vmem [#allocation1], 32
    %248 = vst [vmem:[%s247] ss:$4 sm:$0xff] %v239
    %s249 = scalar_lea.vmem [#allocation1], 33
    %250 = vst [vmem:[%s249] ss:$4 sm:$0xff] %v234
    %s251 = scalar_lea.vmem [#allocation1], 34
    %252 = vst [vmem:[%s251] ss:$4 sm:$0xff] %v240
    %v253 = vld.sshfl [vmem:[#allocation1 + $0x20] sm:$0xff pattern:$0x73625140]
    %v256 = vpack.c.bf16 %v246, %v246
    %v257 = vpack.c.bf16 %v253, %v253
    %v260 = vrot.slane %v256, 7
    %v261 = vrot.slane %v257, 7
    %vm264 = vcmask 125953
    %265 = vst.msk [vmem:[#allocation2] sm:$0xe] %vm264, %v260
    %266 = vst.msk [vmem:[#allocation2 + $0x8] sm:$0xe] %vm264, %v261
    %v267 = vld [vmem:[#allocation2] sm:$0x7]
    %v268 = vld [vmem:[#allocation2 + $0x8] sm:$0x7]
    %v269 = vld [vmem:[#allocation2] sm:$0xf]
    %v270 = vld [vmem:[#allocation2 + $0x8] sm:$0xf]
    %v271 = vld [vmem:[#allocation2] sm:$0xe]
    %v272 = vld [vmem:[#allocation2 + $0x8] sm:$0xe]
    %v273 = vld [vmem:[#allocation2 + $0x4] sm:$0x1]
    %v274 = vld [vmem:[#allocation2 + $0xc] sm:$0x1]
    %v275 = vld [vmem:[#allocation2] sm:$0xc]
    %v276 = vld [vmem:[#allocation2 + $0x8] sm:$0xc]
    %v279 = vunpack.c.l.b16 %v269
    %v280 = vunpack.c.l.b16 %v270
    %v281 = vpack.c.b16 %v279, %v279
    %v282 = vpack.c.b16 %v280, %v280
    %v284 = vshrl.u32 %v281, 16
    %v286 = vshll.u32 %v281, 16
    %v288 = vrot.slane %v286, 1
    %v289 = vor.u32 %v284, %v288
    %v291 = vshrl.u32 %v282, 16
    %v293 = vshll.u32 %v282, 16
    %v295 = vrot.slane %v293, 1
    %v296 = vor.u32 %v291, %v295
    %297 = vrot.lane.b32.xlu0 %v289, 16
    %v298 = vpop.permute.xlu0 %297
    %299 = vrot.lane.b32.xlu0 %v296, 16
    %v300 = vpop.permute.xlu0 %299
    %v303 = vunpack.c.l.b16 %v271
    %v304 = vunpack.c.l.b16 %v272
    %v305 = vpack.c.b16 %v303, %v303
    %v306 = vpack.c.b16 %v304, %v304
    %v307 = vrot.slane %v305, 1
    %v308 = vrot.slane %v306, 1
    %309 = vrot.lane.b32.xlu0 %v307, 32
    %v310 = vpop.permute.xlu0 %309
    %311 = vrot.lane.b32.xlu0 %v308, 32
    %v312 = vpop.permute.xlu0 %311
    %v315 = vunpack.c.l.b16 %v273
    %v316 = vunpack.c.l.b16 %v274
    %v317 = vpack.c.b16 %v315, %v303
    %v318 = vpack.c.b16 %v316, %v304
    %v320 = vshrl.u32 %v317, 16
    %v322 = vrot.slane %v320, 1
    %v323 = vshll.u32 %v317, 16
    %v325 = vrot.slane %v323, 2
    %v326 = vor.u32 %v322, %v325
    %v328 = vshrl.u32 %v318, 16
    %v330 = vrot.slane %v328, 1
    %v331 = vshll.u32 %v318, 16
    %v333 = vrot.slane %v331, 2
    %v334 = vor.u32 %v330, %v333
    %335 = vrot.lane.b32.xlu0 %v326, 48
    %v336 = vpop.permute.xlu0 %335
    %337 = vrot.lane.b32.xlu0 %v334, 48
    %v338 = vpop.permute.xlu0 %337
    %v341 = vunpack.c.l.b16 %v275
    %v342 = vunpack.c.l.b16 %v276
    %v343 = vpack.c.b16 %v315, %v341
    %v344 = vpack.c.b16 %v316, %v342
    %v345 = vrot.slane %v343, 2
    %v346 = vrot.slane %v344, 2
    %347 = vrot.lane.b32.xlu0 %v345, 64
    %v348 = vpop.permute.xlu0 %347
    %349 = vrot.lane.b32.xlu0 %v346, 64
    %v350 = vpop.permute.xlu0 %349
    %v353 = vsel %vm128, %v267, %v298
    %v356 = vsel %vm128, %v268, %v300
    %v358 = vsel %vm135, %v353, %v310
    %v360 = vsel %vm135, %v356, %v312
    %v362 = vsel %vm140, %v358, %v336
    %v364 = vsel %vm140, %v360, %v338
    %v366 = vsel %vm145, %v362, %v348
    %v368 = vsel %vm145, %v364, %v350
    %v371 = vrot.slane %v366, 1
    %v372 = vrot.slane %v366, 2
    %v373 = vrot.slane %v368, 1
    %v374 = vrot.slane %v368, 2
    %s375 = scalar_lea.vmem %s3, 40
    %v376 = vld [vmem:[%s375] sm:$0xf]
    %v377 = vld [vmem:[%s375 + $0x4] sm:$0xf]
    %v378 = vld [vmem:[%s375 + $0x8] sm:$0xf]
    %v379 = vld [vmem:[%s375 + $0xc] sm:$0xf]
    %v380 = vld [vmem:[%s375 + $0x10] sm:$0xf]
    %v381 = vld [vmem:[%s375 + $0x14] sm:$0xf]
    %v382 = vld [vmem:[%s375 + $0x18] sm:$0xf]
    %v383 = vld [vmem:[%s375 + $0x1c] sm:$0xf]
    %v384 = vld [vmem:[%s375 + $0x20] sm:$0xf]
    %v385 = vld [vmem:[%s375 + $0x24] sm:$0xf]
    %s386 = scalar_lea.vmem %s4, 1
    %v387 = vld [vmem:[%s386] sm:$0x1]
    %v389 = vperm.slane %v387, 0
    %391 = vst [vmem:[#allocation1] ss:$9 sm:$0xff] %v366
    %s393 = scalar_lea.vmem [#allocation1], 1
    %394 = vst [vmem:[%s393] ss:$9 sm:$0xff] %v371
    %s396 = scalar_lea.vmem [#allocation1], 2
    %397 = vst [vmem:[%s396] ss:$9 sm:$0xff] %v372
    %s398 = scalar_lea.vmem [#allocation1], 3
    %399 = vst [vmem:[%s398] ss:$9 sm:$0xff] %v368
    %s401 = scalar_lea.vmem [#allocation1], 4
    %402 = vst [vmem:[%s401] ss:$9 sm:$0xff] %v373
    %s404 = scalar_lea.vmem [#allocation1], 5
    %405 = vst [vmem:[%s404] ss:$9 sm:$0xff] %v374
    %v406 = vld [vmem:[#allocation1] sm:$0xff]
    %v417 = vunpack.c.l.b16 %v376
    %v418 = vunpack.c.l.b16 %v377
    %v419 = vunpack.c.l.b16 %v378
    %v420 = vunpack.c.l.b16 %v379
    %v421 = vunpack.c.l.b16 %v380
    %v422 = vunpack.c.l.b16 %v381
    %v423 = vunpack.c.l.b16 %v382
    %v424 = vunpack.c.l.b16 %v383
    %v425 = vunpack.c.l.b16 %v384
    %v426 = vunpack.c.l.b16 %v385
    %v427 = vpack.c.b16 %v418, %v417
    %v428 = vpack.c.b16 %v420, %v419
    %v429 = vpack.c.b16 %v422, %v421
    %v430 = vpack.c.b16 %v424, %v423
    %v431 = vpack.c.b16 %v426, %v425
    %v437 = vsel %vm216, %v406, 0
    %439 = vmatpush.bf16.msra.mxu0 0
    %440 = vmatpush.bf16.msra.mxu0 0
    %441 = vmatpush.bf16.msra.mxu0 0
    %442 = vmatpush.bf16.msra.mxu0 %v431
    %443 = vmatpush.bf16.msra.mxu0 %v430
    %444 = vmatpush.bf16.msra.mxu0 %v429
    %445 = vmatpush.bf16.msra.mxu0 %v428
    %446 = vmatpush.bf16.msra.mxu0 %v427
    %447 = vmatmul.bf16.gmra.mxu0 %v437
    %v448 = vpop.f32.mrf.mxu0
    %v449 = vadd.f32 %v389, %v448
    %v450 = vpop.f32.mrf.mxu0
    %v451 = vadd.f32 %v389, %v450
    %452 = vdwg.mxu0
    %v453 = vtanh.pop %v449
    %v454 = vtanh.pop %v451
    %v457 = vrot.slane %v453, 2
    %v458 = vrot.slane %v453, 4
    %v459 = vrot.slane %v453, 6
    %v460 = vrot.slane %v454, 2
    %461 = vst [vmem:[#allocation1] ss:$4 sm:$0xff] %v453
    %s462 = scalar_lea.vmem [#allocation1], 1
    %463 = vst [vmem:[%s462] ss:$4 sm:$0xff] %v457
    %s464 = scalar_lea.vmem [#allocation1], 2
    %465 = vst [vmem:[%s464] ss:$4 sm:$0xff] %v458
    %v466 = vld.sshfl [vmem:[#allocation1] sm:$0xff pattern:$0x73625140]
    %s467 = scalar_lea.vmem [#allocation1], 32
    %468 = vst [vmem:[%s467] ss:$4 sm:$0xff] %v459
    %s469 = scalar_lea.vmem [#allocation1], 33
    %470 = vst [vmem:[%s469] ss:$4 sm:$0xff] %v454
    %s471 = scalar_lea.vmem [#allocation1], 34
    %472 = vst [vmem:[%s471] ss:$4 sm:$0xff] %v460
    %v473 = vld.sshfl [vmem:[#allocation1 + $0x20] sm:$0xff pattern:$0x73625140]
    %v476 = vpack.c.bf16 %v466, %v466
    %v477 = vpack.c.bf16 %v473, %v473
    %v480 = vrot.slane %v476, 7
    %v481 = vrot.slane %v477, 7
    %484 = vst.msk [vmem:[#allocation2] sm:$0xe] %vm264, %v480
    %485 = vst.msk [vmem:[#allocation2 + $0x8] sm:$0xe] %vm264, %v481
    %v486 = vld [vmem:[#allocation2] sm:$0x7]
    %v487 = vld [vmem:[#allocation2 + $0x8] sm:$0x7]
    %v488 = vld [vmem:[#allocation2] sm:$0xf]
    %v489 = vld [vmem:[#allocation2 + $0x8] sm:$0xf]
    %v490 = vld [vmem:[#allocation2] sm:$0xe]
    %v491 = vld [vmem:[#allocation2 + $0x8] sm:$0xe]
    %v492 = vld [vmem:[#allocation2 + $0x4] sm:$0x1]
    %v493 = vld [vmem:[#allocation2 + $0xc] sm:$0x1]
    %v494 = vld [vmem:[#allocation2] sm:$0xc]
    %v495 = vld [vmem:[#allocation2 + $0x8] sm:$0xc]
    %v498 = vunpack.c.l.b16 %v488
    %v499 = vunpack.c.l.b16 %v489
    %v500 = vpack.c.b16 %v498, %v498
    %v501 = vpack.c.b16 %v499, %v499
    %v503 = vshrl.u32 %v500, 16
    %v505 = vshll.u32 %v500, 16
    %v507 = vrot.slane %v505, 1
    %v508 = vor.u32 %v503, %v507
    %v510 = vshrl.u32 %v501, 16
    %v512 = vshll.u32 %v501, 16
    %v514 = vrot.slane %v512, 1
    %v515 = vor.u32 %v510, %v514
    %516 = vrot.lane.b32.xlu0 %v508, 16
    %v517 = vpop.permute.xlu0 %516
    %518 = vrot.lane.b32.xlu0 %v515, 16
    %v519 = vpop.permute.xlu0 %518
    %v522 = vunpack.c.l.b16 %v490
    %v523 = vunpack.c.l.b16 %v491
    %v524 = vpack.c.b16 %v522, %v522
    %v525 = vpack.c.b16 %v523, %v523
    %v526 = vrot.slane %v524, 1
    %v527 = vrot.slane %v525, 1
    %528 = vrot.lane.b32.xlu0 %v526, 32
    %v529 = vpop.permute.xlu0 %528
    %530 = vrot.lane.b32.xlu0 %v527, 32
    %v531 = vpop.permute.xlu0 %530
    %v534 = vunpack.c.l.b16 %v492
    %v535 = vunpack.c.l.b16 %v493
    %v536 = vpack.c.b16 %v534, %v522
    %v537 = vpack.c.b16 %v535, %v523
    %v539 = vshrl.u32 %v536, 16
    %v541 = vrot.slane %v539, 1
    %v542 = vshll.u32 %v536, 16
    %v544 = vrot.slane %v542, 2
    %v545 = vor.u32 %v541, %v544
    %v547 = vshrl.u32 %v537, 16
    %v549 = vrot.slane %v547, 1
    %v550 = vshll.u32 %v537, 16
    %v552 = vrot.slane %v550, 2
    %v553 = vor.u32 %v549, %v552
    %554 = vrot.lane.b32.xlu0 %v545, 48
    %v555 = vpop.permute.xlu0 %554
    %556 = vrot.lane.b32.xlu0 %v553, 48
    %v557 = vpop.permute.xlu0 %556
    %v560 = vunpack.c.l.b16 %v494
    %v561 = vunpack.c.l.b16 %v495
    %v562 = vpack.c.b16 %v534, %v560
    %v563 = vpack.c.b16 %v535, %v561
    %v564 = vrot.slane %v562, 2
    %v565 = vrot.slane %v563, 2
    %566 = vrot.lane.b32.xlu0 %v564, 64
    %v567 = vpop.permute.xlu0 %566
    %568 = vrot.lane.b32.xlu0 %v565, 64
    %v569 = vpop.permute.xlu0 %568
    %v572 = vsel %vm128, %v486, %v517
    %v575 = vsel %vm128, %v487, %v519
    %v577 = vsel %vm135, %v572, %v529
    %v579 = vsel %vm135, %v575, %v531
    %v581 = vsel %vm140, %v577, %v555
    %v583 = vsel %vm140, %v579, %v557
    %v585 = vsel %vm145, %v581, %v567
    %v587 = vsel %vm145, %v583, %v569
    %v590 = vrot.slane %v585, 1
    %v591 = vrot.slane %v585, 2
    %v592 = vrot.slane %v587, 1
    %v593 = vrot.slane %v587, 2
    %s594 = scalar_lea.vmem %s3, 80
    %v595 = vld [vmem:[%s594] sm:$0xf]
    %v596 = vld [vmem:[%s594 + $0x4] sm:$0xf]
    %v597 = vld [vmem:[%s594 + $0x8] sm:$0xf]
    %v598 = vld [vmem:[%s594 + $0xc] sm:$0xf]
    %v599 = vld [vmem:[%s594 + $0x10] sm:$0xf]
    %v600 = vld [vmem:[%s594 + $0x14] sm:$0xf]
    %v601 = vld [vmem:[%s594 + $0x18] sm:$0xf]
    %v602 = vld [vmem:[%s594 + $0x1c] sm:$0xf]
    %v603 = vld [vmem:[%s594 + $0x20] sm:$0xf]
    %v604 = vld [vmem:[%s594 + $0x24] sm:$0xf]
    %s605 = scalar_lea.vmem %s4, 2
    %v606 = vld [vmem:[%s605] sm:$0x1]
    %v608 = vperm.slane %v606, 0
    %610 = vst [vmem:[#allocation1] ss:$9 sm:$0xff] %v585
    %s612 = scalar_lea.vmem [#allocation1], 1
    %613 = vst [vmem:[%s612] ss:$9 sm:$0xff] %v590
    %s615 = scalar_lea.vmem [#allocation1], 2
    %616 = vst [vmem:[%s615] ss:$9 sm:$0xff] %v591
    %s617 = scalar_lea.vmem [#allocation1], 3
    %618 = vst [vmem:[%s617] ss:$9 sm:$0xff] %v587
    %s620 = scalar_lea.vmem [#allocation1], 4
    %621 = vst [vmem:[%s620] ss:$9 sm:$0xff] %v592
    %s623 = scalar_lea.vmem [#allocation1], 5
    %624 = vst [vmem:[%s623] ss:$9 sm:$0xff] %v593
    %v625 = vld [vmem:[#allocation1] sm:$0xff]
    %v636 = vunpack.c.l.b16 %v595
    %v637 = vunpack.c.l.b16 %v596
    %v638 = vunpack.c.l.b16 %v597
    %v639 = vunpack.c.l.b16 %v598
    %v640 = vunpack.c.l.b16 %v599
    %v641 = vunpack.c.l.b16 %v600
    %v642 = vunpack.c.l.b16 %v601
    %v643 = vunpack.c.l.b16 %v602
    %v644 = vunpack.c.l.b16 %v603
    %v645 = vunpack.c.l.b16 %v604
    %v646 = vpack.c.b16 %v637, %v636
    %v647 = vpack.c.b16 %v639, %v638
    %v648 = vpack.c.b16 %v641, %v640
    %v649 = vpack.c.b16 %v643, %v642
    %v650 = vpack.c.b16 %v645, %v644
    %v656 = vsel %vm216, %v625, 0
    %658 = vmatpush.bf16.msra.mxu0 0
    %659 = vmatpush.bf16.msra.mxu0 0
    %660 = vmatpush.bf16.msra.mxu0 0
    %661 = vmatpush.bf16.msra.mxu0 %v650
    %662 = vmatpush.bf16.msra.mxu0 %v649
    %663 = vmatpush.bf16.msra.mxu0 %v648
    %664 = vmatpush.bf16.msra.mxu0 %v647
    %665 = vmatpush.bf16.msra.mxu0 %v646
    %666 = vmatmul.bf16.gmra.mxu0 %v656
    %v667 = vpop.f32.mrf.mxu0
    %v668 = vadd.f32 %v608, %v667
    %v669 = vpop.f32.mrf.mxu0
    %v670 = vadd.f32 %v608, %v669
    %671 = vdwg.mxu0
    %v672 = vtanh.pop %v668
    %v673 = vtanh.pop %v670
    %v676 = vrot.slane %v672, 2
    %v677 = vrot.slane %v672, 4
    %v678 = vrot.slane %v672, 6
    %v679 = vrot.slane %v673, 2
    %680 = vst [vmem:[#allocation1] ss:$4 sm:$0xff] %v672
    %s681 = scalar_lea.vmem [#allocation1], 1
    %682 = vst [vmem:[%s681] ss:$4 sm:$0xff] %v676
    %s683 = scalar_lea.vmem [#allocation1], 2
    %684 = vst [vmem:[%s683] ss:$4 sm:$0xff] %v677
    %v685 = vld.sshfl [vmem:[#allocation1] sm:$0xff pattern:$0x73625140]
    %s686 = scalar_lea.vmem [#allocation1], 32
    %687 = vst [vmem:[%s686] ss:$4 sm:$0xff] %v678
    %s688 = scalar_lea.vmem [#allocation1], 33
    %689 = vst [vmem:[%s688] ss:$4 sm:$0xff] %v673
    %s690 = scalar_lea.vmem [#allocation1], 34
    %691 = vst [vmem:[%s690] ss:$4 sm:$0xff] %v679
    %v692 = vld.sshfl [vmem:[#allocation1 + $0x20] sm:$0xff pattern:$0x73625140]
    %v695 = vpack.c.bf16 %v685, %v685
    %v696 = vpack.c.bf16 %v692, %v692
    %v699 = vrot.slane %v695, 7
    %v700 = vrot.slane %v696, 7
    %703 = vst.msk [vmem:[#allocation2] sm:$0xe] %vm264, %v699
    %704 = vst.msk [vmem:[#allocation2 + $0x8] sm:$0xe] %vm264, %v700
    %v705 = vld [vmem:[#allocation2] sm:$0x7]
    %v706 = vld [vmem:[#allocation2 + $0x8] sm:$0x7]
    %v707 = vld [vmem:[#allocation2] sm:$0xf]
    %v708 = vld [vmem:[#allocation2 + $0x8] sm:$0xf]
    %v709 = vld [vmem:[#allocation2] sm:$0xe]
    %v710 = vld [vmem:[#allocation2 + $0x8] sm:$0xe]
    %v711 = vld [vmem:[#allocation2 + $0x4] sm:$0x1]
    %v712 = vld [vmem:[#allocation2 + $0xc] sm:$0x1]
    %v713 = vld [vmem:[#allocation2] sm:$0xc]
    %v714 = vld [vmem:[#allocation2 + $0x8] sm:$0xc]
    %v717 = vunpack.c.l.b16 %v707
    %v718 = vunpack.c.l.b16 %v708
    %v719 = vpack.c.b16 %v717, %v717
    %v720 = vpack.c.b16 %v718, %v718
    %v722 = vshrl.u32 %v719, 16
    %v724 = vshll.u32 %v719, 16
    %v726 = vrot.slane %v724, 1
    %v727 = vor.u32 %v722, %v726
    %v729 = vshrl.u32 %v720, 16
    %v731 = vshll.u32 %v720, 16
    %v733 = vrot.slane %v731, 1
    %v734 = vor.u32 %v729, %v733
    %735 = vrot.lane.b32.xlu0 %v727, 16
    %v736 = vpop.permute.xlu0 %735
    %737 = vrot.lane.b32.xlu0 %v734, 16
    %v738 = vpop.permute.xlu0 %737
    %v741 = vunpack.c.l.b16 %v709
    %v742 = vunpack.c.l.b16 %v710
    %v743 = vpack.c.b16 %v741, %v741
    %v744 = vpack.c.b16 %v742, %v742
    %v745 = vrot.slane %v743, 1
    %v746 = vrot.slane %v744, 1
    %747 = vrot.lane.b32.xlu0 %v745, 32
    %v748 = vpop.permute.xlu0 %747
    %749 = vrot.lane.b32.xlu0 %v746, 32
    %v750 = vpop.permute.xlu0 %749
    %v753 = vunpack.c.l.b16 %v711
    %v754 = vunpack.c.l.b16 %v712
    %v755 = vpack.c.b16 %v753, %v741
    %v756 = vpack.c.b16 %v754, %v742
    %v758 = vshrl.u32 %v755, 16
    %v760 = vrot.slane %v758, 1
    %v761 = vshll.u32 %v755, 16
    %v763 = vrot.slane %v761, 2
    %v764 = vor.u32 %v760, %v763
    %v766 = vshrl.u32 %v756, 16
    %v768 = vrot.slane %v766, 1
    %v769 = vshll.u32 %v756, 16
    %v771 = vrot.slane %v769, 2
    %v772 = vor.u32 %v768, %v771
    %773 = vrot.lane.b32.xlu0 %v764, 48
    %v774 = vpop.permute.xlu0 %773
    %775 = vrot.lane.b32.xlu0 %v772, 48
    %v776 = vpop.permute.xlu0 %775
    %v779 = vunpack.c.l.b16 %v713
    %v780 = vunpack.c.l.b16 %v714
    %v781 = vpack.c.b16 %v753, %v779
    %v782 = vpack.c.b16 %v754, %v780
    %v783 = vrot.slane %v781, 2
    %v784 = vrot.slane %v782, 2
    %785 = vrot.lane.b32.xlu0 %v783, 64
    %v786 = vpop.permute.xlu0 %785
    %787 = vrot.lane.b32.xlu0 %v784, 64
    %v788 = vpop.permute.xlu0 %787
    %v791 = vsel %vm128, %v705, %v736
    %v794 = vsel %vm128, %v706, %v738
    %v796 = vsel %vm135, %v791, %v748
    %v798 = vsel %vm135, %v794, %v750
    %v800 = vsel %vm140, %v796, %v774
    %v802 = vsel %vm140, %v798, %v776
    %v804 = vsel %vm145, %v800, %v786
    %v806 = vsel %vm145, %v802, %v788
    %v809 = vrot.slane %v804, 1
    %v810 = vrot.slane %v804, 2
    %v811 = vrot.slane %v806, 1
    %v812 = vrot.slane %v806, 2
    %s813 = scalar_lea.vmem %s3, 120
    %v814 = vld [vmem:[%s813] sm:$0xf]
    %v815 = vld [vmem:[%s813 + $0x4] sm:$0xf]
    %v816 = vld [vmem:[%s813 + $0x8] sm:$0xf]
    %v817 = vld [vmem:[%s813 + $0xc] sm:$0xf]
    %v818 = vld [vmem:[%s813 + $0x10] sm:$0xf]
    %v819 = vld [vmem:[%s813 + $0x14] sm:$0xf]
    %v820 = vld [vmem:[%s813 + $0x18] sm:$0xf]
    %v821 = vld [vmem:[%s813 + $0x1c] sm:$0xf]
    %v822 = vld [vmem:[%s813 + $0x20] sm:$0xf]
    %v823 = vld [vmem:[%s813 + $0x24] sm:$0xf]
    %s824 = scalar_lea.vmem %s4, 3
    %v825 = vld [vmem:[%s824] sm:$0x1]
    %v827 = vperm.slane %v825, 0
    %829 = vst [vmem:[#allocation1] ss:$9 sm:$0xff] %v804
    %s831 = scalar_lea.vmem [#allocation1], 1
    %832 = vst [vmem:[%s831] ss:$9 sm:$0xff] %v809
    %s834 = scalar_lea.vmem [#allocation1], 2
    %835 = vst [vmem:[%s834] ss:$9 sm:$0xff] %v810
    %s836 = scalar_lea.vmem [#allocation1], 3
    %837 = vst [vmem:[%s836] ss:$9 sm:$0xff] %v806
    %s839 = scalar_lea.vmem [#allocation1], 4
    %840 = vst [vmem:[%s839] ss:$9 sm:$0xff] %v811
    %s842 = scalar_lea.vmem [#allocation1], 5
    %843 = vst [vmem:[%s842] ss:$9 sm:$0xff] %v812
    %v844 = vld [vmem:[#allocation1] sm:$0xff]
    %v855 = vunpack.c.l.b16 %v814
    %v856 = vunpack.c.l.b16 %v815
    %v857 = vunpack.c.l.b16 %v816
    %v858 = vunpack.c.l.b16 %v817
    %v859 = vunpack.c.l.b16 %v818
    %v860 = vunpack.c.l.b16 %v819
    %v861 = vunpack.c.l.b16 %v820
    %v862 = vunpack.c.l.b16 %v821
    %v863 = vunpack.c.l.b16 %v822
    %v864 = vunpack.c.l.b16 %v823
    %v865 = vpack.c.b16 %v856, %v855
    %v866 = vpack.c.b16 %v858, %v857
    %v867 = vpack.c.b16 %v860, %v859
    %v868 = vpack.c.b16 %v862, %v861
    %v869 = vpack.c.b16 %v864, %v863
    %v875 = vsel %vm216, %v844, 0
    %877 = vmatpush.bf16.msra.mxu0 0
    %878 = vmatpush.bf16.msra.mxu0 0
    %879 = vmatpush.bf16.msra.mxu0 0
    %880 = vmatpush.bf16.msra.mxu0 %v869
    %881 = vmatpush.bf16.msra.mxu0 %v868
    %882 = vmatpush.bf16.msra.mxu0 %v867
    %883 = vmatpush.bf16.msra.mxu0 %v866
    %884 = vmatpush.bf16.msra.mxu0 %v865
    %885 = vmatmul.bf16.gmra.mxu0 %v875
    %v886 = vpop.f32.mrf.mxu0
    %v887 = vadd.f32 %v827, %v886
    %v888 = vpop.f32.mrf.mxu0
    %v889 = vadd.f32 %v827, %v888
    %890 = vdwg.mxu0
    %v891 = vtanh.pop %v887
    %v892 = vtanh.pop %v889
    %v895 = vrot.slane %v891, 2
    %v896 = vrot.slane %v891, 4
    %v897 = vrot.slane %v891, 6
    %v898 = vrot.slane %v892, 2
    %899 = vst [vmem:[#allocation1] ss:$4 sm:$0xff] %v891
    %s900 = scalar_lea.vmem [#allocation1], 1
    %901 = vst [vmem:[%s900] ss:$4 sm:$0xff] %v895
    %s902 = scalar_lea.vmem [#allocation1], 2
    %903 = vst [vmem:[%s902] ss:$4 sm:$0xff] %v896
    %v904 = vld.sshfl [vmem:[#allocation1] sm:$0xff pattern:$0x73625140]
    %s905 = scalar_lea.vmem [#allocation1], 32
    %906 = vst [vmem:[%s905] ss:$4 sm:$0xff] %v897
    %s907 = scalar_lea.vmem [#allocation1], 33
    %908 = vst [vmem:[%s907] ss:$4 sm:$0xff] %v892
    %s909 = scalar_lea.vmem [#allocation1], 34
    %910 = vst [vmem:[%s909] ss:$4 sm:$0xff] %v898
    %v911 = vld.sshfl [vmem:[#allocation1 + $0x20] sm:$0xff pattern:$0x73625140]
    %v914 = vpack.c.bf16 %v904, %v904
    %v915 = vpack.c.bf16 %v911, %v911
    %v918 = vrot.slane %v914, 7
    %v919 = vrot.slane %v915, 7
    %922 = vst.msk [vmem:[#allocation2] sm:$0xe] %vm264, %v918
    %923 = vst.msk [vmem:[#allocation2 + $0x8] sm:$0xe] %vm264, %v919
    %v924 = vld [vmem:[#allocation2] sm:$0x7]
    %v925 = vld [vmem:[#allocation2 + $0x8] sm:$0x7]
    %v926 = vld [vmem:[#allocation2] sm:$0xf]
    %v927 = vld [vmem:[#allocation2 + $0x8] sm:$0xf]
    %v928 = vld [vmem:[#allocation2] sm:$0xe]
    %v929 = vld [vmem:[#allocation2 + $0x8] sm:$0xe]
    %v930 = vld [vmem:[#allocation2 + $0x4] sm:$0x1]
    %v931 = vld [vmem:[#allocation2 + $0xc] sm:$0x1]
    %v932 = vld [vmem:[#allocation2] sm:$0xc]
    %v933 = vld [vmem:[#allocation2 + $0x8] sm:$0xc]
    %v936 = vunpack.c.l.b16 %v926
    %v937 = vunpack.c.l.b16 %v927
    %v938 = vpack.c.b16 %v936, %v936
    %v939 = vpack.c.b16 %v937, %v937
    %v941 = vshrl.u32 %v938, 16
    %v943 = vshll.u32 %v938, 16
    %v945 = vrot.slane %v943, 1
    %v946 = vor.u32 %v941, %v945
    %v948 = vshrl.u32 %v939, 16
    %v950 = vshll.u32 %v939, 16
    %v952 = vrot.slane %v950, 1
    %v953 = vor.u32 %v948, %v952
    %954 = vrot.lane.b32.xlu0 %v946, 16
    %v955 = vpop.permute.xlu0 %954
    %956 = vrot.lane.b32.xlu0 %v953, 16
    %v957 = vpop.permute.xlu0 %956
    %v960 = vunpack.c.l.b16 %v928
    %v961 = vunpack.c.l.b16 %v929
    %v962 = vpack.c.b16 %v960, %v960
    %v963 = vpack.c.b16 %v961, %v961
    %v964 = vrot.slane %v962, 1
    %v965 = vrot.slane %v963, 1
    %966 = vrot.lane.b32.xlu0 %v964, 32
    %v967 = vpop.permute.xlu0 %966
    %968 = vrot.lane.b32.xlu0 %v965, 32
    %v969 = vpop.permute.xlu0 %968
    %v972 = vunpack.c.l.b16 %v930
    %v973 = vunpack.c.l.b16 %v931
    %v974 = vpack.c.b16 %v972, %v960
    %v975 = vpack.c.b16 %v973, %v961
    %v977 = vshrl.u32 %v974, 16
    %v979 = vrot.slane %v977, 1
    %v980 = vshll.u32 %v974, 16
    %v982 = vrot.slane %v980, 2
    %v983 = vor.u32 %v979, %v982
    %v985 = vshrl.u32 %v975, 16
    %v987 = vrot.slane %v985, 1
    %v988 = vshll.u32 %v975, 16
    %v990 = vrot.slane %v988, 2
    %v991 = vor.u32 %v987, %v990
    %992 = vrot.lane.b32.xlu0 %v983, 48
    %v993 = vpop.permute.xlu0 %992
    %994 = vrot.lane.b32.xlu0 %v991, 48
    %v995 = vpop.permute.xlu0 %994
    %v998 = vunpack.c.l.b16 %v932
    %v999 = vunpack.c.l.b16 %v933
    %v1000 = vpack.c.b16 %v972, %v998
    %v1001 = vpack.c.b16 %v973, %v999
    %v1002 = vrot.slane %v1000, 2
    %v1003 = vrot.slane %v1001, 2
    %1004 = vrot.lane.b32.xlu0 %v1002, 64
    %v1005 = vpop.permute.xlu0 %1004
    %1006 = vrot.lane.b32.xlu0 %v1003, 64
    %v1007 = vpop.permute.xlu0 %1006
    %v1010 = vsel %vm128, %v924, %v955
    %v1013 = vsel %vm128, %v925, %v957
    %v1015 = vsel %vm135, %v1010, %v967
    %v1017 = vsel %vm135, %v1013, %v969
    %v1019 = vsel %vm140, %v1015, %v993
    %v1021 = vsel %vm140, %v1017, %v995
    %v1023 = vsel %vm145, %v1019, %v1005
    %v1025 = vsel %vm145, %v1021, %v1007
    %v1028 = vrot.slane %v1023, 1
    %v1029 = vrot.slane %v1023, 2
    %v1030 = vrot.slane %v1025, 1
    %v1031 = vrot.slane %v1025, 2
    %s1032 = scalar_lea.vmem %s3, 160
    %v1033 = vld [vmem:[%s1032] sm:$0xf]
    %v1034 = vld [vmem:[%s1032 + $0x4] sm:$0xf]
    %v1035 = vld [vmem:[%s1032 + $0x8] sm:$0xf]
    %v1036 = vld [vmem:[%s1032 + $0xc] sm:$0xf]
    %v1037 = vld [vmem:[%s1032 + $0x10] sm:$0xf]
    %v1038 = vld [vmem:[%s1032 + $0x14] sm:$0xf]
    %v1039 = vld [vmem:[%s1032 + $0x18] sm:$0xf]
    %v1040 = vld [vmem:[%s1032 + $0x1c] sm:$0xf]
    %v1041 = vld [vmem:[%s1032 + $0x20] sm:$0xf]
    %v1042 = vld [vmem:[%s1032 + $0x24] sm:$0xf]
    %s1043 = scalar_lea.vmem %s4, 4
    %v1044 = vld [vmem:[%s1043] sm:$0x1]
    %v1046 = vperm.slane %v1044, 0
    %1048 = vst [vmem:[#allocation1] ss:$9 sm:$0xff] %v1023
    %s1050 = scalar_lea.vmem [#allocation1], 1
    %1051 = vst [vmem:[%s1050] ss:$9 sm:$0xff] %v1028
    %s1053 = scalar_lea.vmem [#allocation1], 2
    %1054 = vst [vmem:[%s1053] ss:$9 sm:$0xff] %v1029
    %s1055 = scalar_lea.vmem [#allocation1], 3
    %1056 = vst [vmem:[%s1055] ss:$9 sm:$0xff] %v1025
    %s1058 = scalar_lea.vmem [#allocation1], 4
    %1059 = vst [vmem:[%s1058] ss:$9 sm:$0xff] %v1030
    %s1061 = scalar_lea.vmem [#allocation1], 5
    %1062 = vst [vmem:[%s1061] ss:$9 sm:$0xff] %v1031
    %v1063 = vld [vmem:[#allocation1] sm:$0xff]
    %v1074 = vunpack.c.l.b16 %v1033
    %v1075 = vunpack.c.l.b16 %v1034
    %v1076 = vunpack.c.l.b16 %v1035
    %v1077 = vunpack.c.l.b16 %v1036
    %v1078 = vunpack.c.l.b16 %v1037
    %v1079 = vunpack.c.l.b16 %v1038
    %v1080 = vunpack.c.l.b16 %v1039
    %v1081 = vunpack.c.l.b16 %v1040
    %v1082 = vunpack.c.l.b16 %v1041
    %v1083 = vunpack.c.l.b16 %v1042
    %v1084 = vpack.c.b16 %v1075, %v1074
    %v1085 = vpack.c.b16 %v1077, %v1076
    %v1086 = vpack.c.b16 %v1079, %v1078
    %v1087 = vpack.c.b16 %v1081, %v1080
    %v1088 = vpack.c.b16 %v1083, %v1082
    %v1094 = vsel %vm216, %v1063, 0
    %1096 = vmatpush.bf16.msra.mxu0 0
    %1097 = vmatpush.bf16.msra.mxu0 0
    %1098 = vmatpush.bf16.msra.mxu0 0
    %1099 = vmatpush.bf16.msra.mxu0 %v1088
    %1100 = vmatpush.bf16.msra.mxu0 %v1087
    %1101 = vmatpush.bf16.msra.mxu0 %v1086
    %1102 = vmatpush.bf16.msra.mxu0 %v1085
    %1103 = vmatpush.bf16.msra.mxu0 %v1084
    %1104 = vmatmul.bf16.gmra.mxu0 %v1094
    %v1105 = vpop.f32.mrf.mxu0
    %v1106 = vadd.f32 %v1046, %v1105
    %v1107 = vpop.f32.mrf.mxu0
    %v1108 = vadd.f32 %v1046, %v1107
    %1109 = vdwg.mxu0
    %v1112 = vrot.slane %v1106, 2
    %v1113 = vrot.slane %v1106, 4
    %v1114 = vrot.slane %v1106, 6
    %v1115 = vrot.slane %v1108, 2
    %1116 = vst [vmem:[#allocation1] ss:$4 sm:$0xff] %v1106
    %s1117 = scalar_lea.vmem [#allocation1], 1
    %1118 = vst [vmem:[%s1117] ss:$4 sm:$0xff] %v1112
    %s1119 = scalar_lea.vmem [#allocation1], 2
    %1120 = vst [vmem:[%s1119] ss:$4 sm:$0xff] %v1113
    %v1121 = vld.sshfl [vmem:[#allocation1] sm:$0xff pattern:$0x73625140]
    %s1122 = scalar_lea.vmem [#allocation1], 32
    %1123 = vst [vmem:[%s1122] ss:$4 sm:$0xff] %v1114
    %s1124 = scalar_lea.vmem [#allocation1], 33
    %1125 = vst [vmem:[%s1124] ss:$4 sm:$0xff] %v1108
    %s1126 = scalar_lea.vmem [#allocation1], 34
    %1127 = vst [vmem:[%s1126] ss:$4 sm:$0xff] %v1115
    %v1128 = vld.sshfl [vmem:[#allocation1 + $0x20] sm:$0xff pattern:$0x73625140]
    %v1131 = vadd.f32 %v31, %v1121
    %v1132 = vadd.f32 %v32, %v1128
    %v1133 = vld [vmem:[%s2] sm:$0x3]
    %v1134 = vperm.slane %v1133, 0
    %v1135 = vlaneseq
    %v1136 = vshrl.u32 %v1135, 7
    %1138 = vset.pattern.permute.xlu0 %v1136
    %1139 = vperm.xlu0 %1138, %v1134
    %v1140 = vpop.permute.xlu0 %1139
    %v1141 = vperm.slane %v1133, 1
    %v1142 = vlaneseq
    %v1143 = vshrl.u32 %v1142, 7
    %1145 = vset.pattern.permute.xlu0 %v1143
    %1146 = vperm.xlu0 %1145, %v1141
    %v1147 = vpop.permute.xlu0 %1146
    %vm1148 = vcmp.gt.f32.partialorder %v1140, 0.5
    %vm1149 = vcmp.gt.f32.partialorder %v1147, 0.5
    %v1150 = vsel %vm1148, 1, 0
    %v1151 = vsel %vm1149, 1, 0
    %vm1152 = vcmp.eq.s32.totalorder %v1150, 1
    %vm1153 = vcmp.eq.s32.totalorder %v1151, 1
    %v1154 = vsel %vm1152, 0.0, %v31
    %v1155 = vsel %vm1153, 0.0, %v32
    %vm1156 = vcmask 62464
    %1157 = vst.msk [vmem:[%s5] sm:$0x3f] %vm1156, %v1154
    %1158 = vst.msk [vmem:[%s5 + $0x8] sm:$0x3f] %vm1156, %v1155
    %v1159 = vsel %vm1152, 0.0, %v1131
    %v1160 = vsel %vm1153, 0.0, %v1132
    %1161 = vst.msk [vmem:[%s6] sm:$0x3f] %vm1156, %v1159
    %1162 = vst.msk [vmem:[%s6 + $0x8] sm:$0x3f] %vm1156, %v1160
    %v1163 = vld [vmem:[%s2] sm:$0x3]
    %vm1164 = vcmp.gt.f32.partialorder %v1163, 0.5
    %v1165 = vld [vmem:[%s1] sm:$0x3]
    %v1166 = vsel %vm1164, -1000.0, %v1165
    %vm1167 = vcmask 41984
    %1168 = vst.msk [vmem:[#allocation3] sm:$0x3] %vm1167, %v1166
    // Predicated region
    $region22: #{tacotron2_forward.5} parent=1 // pred_check
      _
    $region23: #{tacotron2_forward.5} parent=1 // pred_check_branch
      %1170 = sbr.rel (0) target = $region25
    $region24: #{tacotron2_forward.5} parent=1 // pred_region
      _
    $region25: #{tacotron2_forward.5} parent=1 // pred_fallthru
      _
    // Predicated region
    $region26: #{tacotron2_forward.5} parent=1 // pred_check
      _
    $region27: #{tacotron2_forward.5} parent=1 // pred_check_branch
      %1172 = sbr.rel (0) target = $region29
    $region28: #{tacotron2_forward.5} parent=1 // pred_region
      _
    $region29: #{tacotron2_forward.5} parent=1 // pred_fallthru
      _
    // Predicated region
    $region30: #{tacotron2_forward.5} parent=1 // pred_check
      _
    $region31: #{tacotron2_forward.5} parent=1 // pred_check_branch
      %1174 = sbr.rel (0) target = $region33
    $region32: #{tacotron2_forward.5} parent=1 // pred_region
      %1176 = vsyncadd [#allocation4], 0
      %s1178 = sshll.u32 [#allocation3], 4
      %s1179 = int_to_ptr.vmem [resolvable:$true] %s1178
      %s1180 = sshll.u32 %s7, 4
      %s1181 = int_to_ptr.hbm [resolvable:$true] %s1180
      %1183 = dma.vmem_to_hbm [thread:$0]  %s1179, 32, %s1181, [#allocation4]
    $region33: #{tacotron2_forward.5} parent=1 // pred_fallthru
      _
    // Predicated region
    $region34: #{tacotron2_forward.5} parent=1 // pred_check
      _
    $region35: #{tacotron2_forward.5} parent=1 // pred_check_branch
      %1185 = sbr.rel (0) target = $region37
    $region36: #{tacotron2_forward.5} parent=1 // pred_region
      _
    $region37: #{tacotron2_forward.5} parent=1 // pred_fallthru
      _
    // Predicated region
    $region38: #{tacotron2_forward.5} parent=1 // pred_check
      _
    $region39: #{tacotron2_forward.5} parent=1 // pred_check_branch
      %1187 = sbr.rel (0) target = $region41
    $region40: #{tacotron2_forward.5} parent=1 // pred_region
      _
    $region41: #{tacotron2_forward.5} parent=1 // pred_fallthru
      _
    // Predicated region
    $region42: #{tacotron2_forward.5} parent=1 // pred_check
      _
    $region43: #{tacotron2_forward.5} parent=1 // pred_check_branch
      %1189 = sbr.rel (0) target = $region45
    $region44: #{tacotron2_forward.5} parent=1 // pred_region
      %1191 = dma.done [#allocation4], 32
    $region45: #{tacotron2_forward.5} parent=1 // pred_fallthru
      _
    %1192 = vsyncpa [#allocation4], 1

</llo_original>
